<compile_context>
chip_gen: v6e
topology: v6e:2x2x1
jax: 0.10.0
libtpu: 0.0.40
codegen_flags: <defaults>
</compile_context>

<pallas_src>
import math
import functools

import jax
import jax.numpy as jnp
from jax.experimental import pallas as pl
from jax.experimental.pallas import tpu as pltpu

H1 = 51       # hidden size of lstm1
H2 = 1        # hidden size of lstm2
H_PAD = 128
G_PAD1 = 4 * H_PAD   # lstm1 gate lanes (i,f,g,o each padded to 128)
B_PAD = 8
OUT_PAD = 128        # output time lanes (T + future must be <= 128)

# lstm2 gate-g ("cell" gate, index 2) pre-activation is scaled by 2 at pack time so that
# tanh(x) can be recovered from the single sigmoid pass as 2*sigmoid(2x) - 1.
_GATE2_PRESCALE = (1.0, 1.0, 2.0, 1.0)


# ----------------------------- Pallas kernel ------------------------------ #
def lstm_kernel(x_ref, wih1_ref, whh1_ref, b1_ref, wih2_ref, whh2_ref, b2_ref,
                out_ref, *, future):
    T = x_ref.shape[1]
    b_pad = x_ref.shape[0]

    # Hoisted broadcasts (JAX does not CSE broadcast_in_dim; keep them out of
    # the unrolled recurrence). ~10 vregs live in total.
    wih1_b = jnp.broadcast_to(wih1_ref[...], (b_pad, G_PAD1))   # (8, 512)
    b1_b = jnp.broadcast_to(b1_ref[...], (b_pad, G_PAD1))       # (8, 512)
    whh2_b = jnp.broadcast_to(whh2_ref[...], (b_pad, H_PAD))    # (8, 128)
    b2_b = jnp.broadcast_to(b2_ref[...], (b_pad, H_PAD))        # (8, 128)

    out_lane = jax.lax.broadcasted_iota(jnp.int32, (b_pad, OUT_PAD), 1)

    def cell1(gx, h1, c1, first):
        # gx = x_col * wih1 + bias, precombined off the serial h/c chain.
        # Recurrent term uses the MXU with bf16 weights streamed from VMEM.
        if first:
            gates = gx                       # h1 == 0 -> skip the MXU dot entirely
        else:
            gates = gx + jnp.dot(h1.astype(jnp.bfloat16), whh1_ref[...],
                                 preferred_element_type=jnp.float32)
        i_g = jax.nn.sigmoid(gates[:, 0 * H_PAD:1 * H_PAD])
        f_g = jax.nn.sigmoid(gates[:, 1 * H_PAD:2 * H_PAD])
        g_g = jnp.tanh(gates[:, 2 * H_PAD:3 * H_PAD])
        o_g = jax.nn.sigmoid(gates[:, 3 * H_PAD:4 * H_PAD])
        c1n = f_g * c1 + i_g * g_g
        h1n = o_g * jnp.tanh(c1n)
        return h1n, c1n

    def cell2(c1, h2, c2, first):
        # All four H2=1 gates live in lanes 0..3 of one 128-lane vreg.
        # h2 (B,1) recurrent term is a VPU broadcast-multiply.
        g2 = jnp.dot(c1.astype(jnp.bfloat16), wih2_ref[...],
                     preferred_element_type=jnp.float32) + b2_b
        if not first:
            g2 = g2 + h2 * whh2_b            # h2 == 0 on the very first step
        # Single full-vreg sigmoid; lane 2 was pre-scaled by 2 at pack time,
        # so tanh(pre_g) = 2*sigmoid(2*pre_g) - 1 costs 2 VPU ops on a (B,1) slice.
        s = jax.nn.sigmoid(g2)
        i2 = s[:, 0:1]
        f2 = s[:, 1:2]
        gg2 = 2.0 * s[:, 2:3] - 1.0
        o2 = s[:, 3:4]
        c2n = f2 * c2 + i2 * gg2             # (B, 1)
        h2n = o2 * jnp.tanh(c2n)             # (B, 1)
        return h2n, c2n

    h1 = jnp.zeros((b_pad, H_PAD), jnp.float32)
    c1 = jnp.zeros((b_pad, H_PAD), jnp.float32)
    h2 = jnp.zeros((b_pad, 1), jnp.float32)
    c2 = jnp.zeros((b_pad, 1), jnp.float32)
    out_acc = jnp.zeros((b_pad, OUT_PAD), jnp.float32)

    # Fully unrolled recurrence: T and future are trace-time constants, so the
    # LLO scheduler can overlap lstm2(t) with lstm1(t+1); no per-iteration
    # loop overhead.
    for t in range(T):
        gx = x_ref[:, t:t + 1] * wih1_b + b1_b        # off-chain precompute
        h1, c1 = cell1(gx, h1, c1, first=(t == 0))
        h2, c2 = cell2(c1, h2, c2, first=(t == 0))    # lstm2 consumes c1, as in torch
        out_acc = jnp.where(out_lane == t, c2, out_acc)
    for f in range(future):
        gx = c2 * wih1_b + b1_b                       # feed c_t2 back as next input
        h1, c1 = cell1(gx, h1, c1, first=False)
        h2, c2 = cell2(c1, h2, c2, first=False)
        out_acc = jnp.where(out_lane == (T + f), c2, out_acc)

    # Single lane-dense, unmasked store instead of T+future masked 1-lane stores.
    out_ref[...] = out_acc


# ------------------------------ weight packing ------------------------------ #
def pack_wih1_row(wih1):
    """torch (4*H1, 1) -> (1, 4*H_PAD) f32 row (input feature dim is 1)."""
    out = jnp.zeros((1, G_PAD1), jnp.float32)
    for g in range(4):
        out = out.at[0, g * H_PAD:g * H_PAD + H1].set(wih1[g * H1:(g + 1) * H1, 0])
    return out


def pack_whh1(whh1):
    """torch (4*H1, H1) -> (H_PAD, 4*H_PAD) bf16, transposed so gates = h @ W."""
    out = jnp.zeros((H_PAD, G_PAD1), jnp.float32)
    for g in range(4):
        out = out.at[:H1, g * H_PAD:g * H_PAD + H1].set(whh1[g * H1:(g + 1) * H1, :].T)
    return out.astype(jnp.bfloat16)


def pack_b1(bih1, bhh1):
    b = bih1 + bhh1
    out = jnp.zeros((1, G_PAD1), jnp.float32)
    for g in range(4):
        out = out.at[0, g * H_PAD:g * H_PAD + H1].set(b[g * H1:(g + 1) * H1])
    return out


def pack_wih2(wih2):
    """torch (4, H1) -> (H_PAD, H_PAD) bf16 with gate g packed into lane g.

    The gate-g (cell gate, index 2) column is pre-scaled by 2 (exact in bf16)
    so the kernel can use tanh(x) = 2*sigmoid(2x) - 1 with a single sigmoid pass.
    """
    scale = jnp.asarray(_GATE2_PRESCALE, jnp.float32)[None, :]   # (1, 4)
    out = jnp.zeros((H_PAD, H_PAD), jnp.float32)
    out = out.at[:H1, :4].set(wih2.T * scale)
    return out.astype(jnp.bfloat16)


def pack_whh2_row(whh2):
    """torch (4, 1) -> (1, H_PAD) f32 row (H2 = 1), lane g = gate g (lane 2 x2)."""
    scale = jnp.asarray(_GATE2_PRESCALE, jnp.float32)
    out = jnp.zeros((1, H_PAD), jnp.float32)
    out = out.at[0, :4].set(whh2[:, 0] * scale)
    return out


def pack_b2(bih2, bhh2):
    scale = jnp.asarray(_GATE2_PRESCALE, jnp.float32)
    out = jnp.zeros((1, H_PAD), jnp.float32)
    out = out.at[0, :4].set((bih2 + bhh2) * scale)
    return out


# ------------------------------ JAX wrapper -------------------------------- #
@functools.partial(jax.jit, static_argnames=("future",))
def lstm_model_forward(x, packed, future=0):
    """x: (B, T) float32 -> (B, T + future) float32."""
    B, T = x.shape
    Tt = T + future
    assert B <= B_PAD and Tt <= OUT_PAD

    x_pad = jnp.zeros((B_PAD, T), jnp.float32).at[:B, :].set(x)

    args = (x_pad, packed["wih1_row"], packed["whh1"], packed["b1"],
            packed["wih2"], packed["whh2_row"], packed["b2"])

    out = pl.pallas_call(
        functools.partial(lstm_kernel, future=future),
        out_shape=jax.ShapeDtypeStruct((B_PAD, OUT_PAD), jnp.float32),
        # Everything (weights + states) stays VMEM-resident across the whole
        # recurrence; total footprint < 1 MiB, no grid / pipelining needed.
        in_specs=[pl.BlockSpec(memory_space=pltpu.MemorySpace.VMEM)] * len(args),
        out_specs=pl.BlockSpec(memory_space=pltpu.MemorySpace.VMEM),
    )(*args)

    return out[:B, :Tt]  # (B, T + future)


# -------------------------- pure-JAX reference ----------------------------- #
def ref_cell(x, h, c, wih, whh, bih, bhh, hidden):
    gates = x @ wih.T + bih + h @ whh.T + bhh
    i = jax.nn.sigmoid(gates[:, 0 * hidden:1 * hidden])
    f = jax.nn.sigmoid(gates[:, 1 * hidden:2 * hidden])
    g = jnp.tanh(gates[:, 2 * hidden:3 * hidden])
    o = jax.nn.sigmoid(gates[:, 3 * hidden:4 * hidden])
    c_new = f * c + i * g
    return o * jnp.tanh(c_new), c_new


def ref_forward(x, p, future=0):
    B, T = x.shape
    h1 = jnp.zeros((B, H1)); c1 = jnp.zeros((B, H1))
    h2 = jnp.zeros((B, H2)); c2 = jnp.zeros((B, H2))
    outs = []
    for t in range(T):
        h1, c1 = ref_cell(x[:, t:t + 1], h1, c1, p["wih1"], p["whh1"], p["bih1"], p["bhh1"], H1)
        h2, c2 = ref_cell(c1, h2, c2, p["wih2"], p["whh2"], p["bih2"], p["bhh2"], H2)
        outs.append(c2)
    for _ in range(future):
        h1, c1 = ref_cell(c2, h1, c1, p["wih1"], p["whh1"], p["bih1"], p["bhh1"], H1)
        h2, c2 = ref_cell(c1, h2, c2, p["wih2"], p["whh2"], p["bih2"], p["bhh2"], H2)
        outs.append(c2)
    return jnp.concatenate(outs, axis=1)  # (B, T + future)


def init_params(key):
    """Deterministic init matching nn.LSTMCell shapes, U(-1/sqrt(H), 1/sqrt(H))."""
    ks = jax.random.split(key, 8)
    k1 = 1.0 / math.sqrt(H1)
    k2 = 1.0 / math.sqrt(H2)
    u = lambda k, shape, lim: jax.random.uniform(k, shape, jnp.float32, -lim, lim)
    return {
        "wih1": u(ks[0], (4 * H1, 1), k1),  "whh1": u(ks[1], (4 * H1, H1), k1),
        "bih1": u(ks[2], (4 * H1,), k1),    "bhh1": u(ks[3], (4 * H1,), k1),
        "wih2": u(ks[4], (4 * H2, H1), k2), "whh2": u(ks[5], (4 * H2, H2), k2),
        "bih2": u(ks[6], (4 * H2,), k2),    "bhh2": u(ks[7], (4 * H2,), k2),
    }


if __name__ == "__main__":
    key = jax.random.PRNGKey(0)
    pkey, xkey = jax.random.split(key)

    params = init_params(pkey)
    packed = {
        "wih1_row": pack_wih1_row(params["wih1"]),
        "whh1": pack_whh1(params["whh1"]),
        "b1": pack_b1(params["bih1"], params["bhh1"]),
        "wih2": pack_wih2(params["wih2"]),
        "whh2_row": pack_whh2_row(params["whh2"]),
        "b2": pack_b2(params["bih2"], params["bhh2"]),
    }

    B, T, FUTURE = 2, 8, 4
    x = jax.random.normal(xkey, (B, T), jnp.float32)

    out = lstm_model_forward(x, packed, future=FUTURE)
    out = jax.block_until_ready(out)
    assert out.shape == (B, T + FUTURE), out.shape

    ref = ref_forward(x, params, future=FUTURE)
    # Tolerance covers the bf16 storage of the recurrent / lstm2-input weights
    # (f32 accumulation on the MXU); observed error is O(1e-3).
    assert jnp.allclose(out, ref, atol=2e-2, rtol=0), (
        f"max abs diff {jnp.max(jnp.abs(out - ref))}")

    print("KERNEL_OK")
</pallas_src>

<mosaic_0001>
module attributes {stable_mosaic.version = 11 : i64} {
  func.func @lstm_kernel(%arg0: memref<8x8xf32, #tpu.memory_space<vmem>>, %arg1: memref<1x512xf32, #tpu.memory_space<vmem>>, %arg2: memref<128x512xbf16, #tpu.memory_space<vmem>>, %arg3: memref<1x512xf32, #tpu.memory_space<vmem>>, %arg4: memref<128x128xbf16, #tpu.memory_space<vmem>>, %arg5: memref<1x128xf32, #tpu.memory_space<vmem>>, %arg6: memref<1x128xf32, #tpu.memory_space<vmem>>, %arg7: memref<8x128xf32, #tpu.memory_space<vmem>>) attributes {dimension_semantics = [], scalar_prefetch = 0 : i64, scratch_operands = 0 : i64, tpu.core_type = #tpu.core_type<tc>} {
    %c0 = arith.constant 0 : index
    %c0_0 = arith.constant 0 : index
    %0 = vector.load %arg1[%c0, %c0_0] : memref<1x512xf32, #tpu.memory_space<vmem>>, vector<1x512xf32>
    %1 = vector.shape_cast %0 : vector<1x512xf32> to vector<1x512xf32>
    %2 = vector.broadcast %1 : vector<1x512xf32> to vector<8x512xf32>
    %c0_1 = arith.constant 0 : index
    %c0_2 = arith.constant 0 : index
    %3 = vector.load %arg3[%c0_1, %c0_2] : memref<1x512xf32, #tpu.memory_space<vmem>>, vector<1x512xf32>
    %4 = vector.shape_cast %3 : vector<1x512xf32> to vector<1x512xf32>
    %5 = vector.broadcast %4 : vector<1x512xf32> to vector<8x512xf32>
    %c0_3 = arith.constant 0 : index
    %c0_4 = arith.constant 0 : index
    %6 = vector.load %arg5[%c0_3, %c0_4] : memref<1x128xf32, #tpu.memory_space<vmem>>, vector<1x128xf32>
    %7 = vector.shape_cast %6 : vector<1x128xf32> to vector<1x128xf32>
    %8 = vector.broadcast %7 : vector<1x128xf32> to vector<8x128xf32>
    %c0_5 = arith.constant 0 : index
    %c0_6 = arith.constant 0 : index
    %9 = vector.load %arg6[%c0_5, %c0_6] : memref<1x128xf32, #tpu.memory_space<vmem>>, vector<1x128xf32>
    %10 = vector.shape_cast %9 : vector<1x128xf32> to vector<1x128xf32>
    %11 = vector.broadcast %10 : vector<1x128xf32> to vector<8x128xf32>
    %12 = tpu.iota {dimensions = array<i32: 1>} : vector<8x128xi32>
    %cst = arith.constant 0.000000e+00 : f32
    %13 = vector.broadcast %cst : f32 to vector<8x128xf32>
    %cst_7 = arith.constant 0.000000e+00 : f32
    %14 = vector.broadcast %cst_7 : f32 to vector<8x1xf32>
    %cst_8 = arith.constant 0.000000e+00 : f32
    %15 = vector.broadcast %cst_8 : f32 to vector<8x128xf32>
    %c0_9 = arith.constant 0 : index
    %c0_10 = arith.constant 0 : index
    %16 = vector.load %arg0[%c0_9, %c0_10] : memref<8x8xf32, #tpu.memory_space<vmem>>, vector<8x1xf32>
    %17 = vector.broadcast %16 : vector<8x1xf32> to vector<8x512xf32>
    %18 = arith.mulf %17, %2 : vector<8x512xf32>
    %19 = arith.addf %18, %5 : vector<8x512xf32>
    %20 = vector.extract_strided_slice %19 {offsets = [0, 0], sizes = [8, 128], strides = [1, 1]} : vector<8x512xf32> to vector<8x128xf32>
    %21 = arith.negf %20 : vector<8x128xf32>
    %22 = math.exp %21 : vector<8x128xf32>
    %cst_11 = arith.constant 1.000000e+00 : f32
    %23 = vector.broadcast %cst_11 : f32 to vector<8x128xf32>
    %24 = arith.addf %23, %22 : vector<8x128xf32>
    %25 = arith.divf %23, %24 : vector<8x128xf32>
    %26 = vector.extract_strided_slice %19 {offsets = [0, 128], sizes = [8, 128], strides = [1, 1]} : vector<8x512xf32> to vector<8x128xf32>
    %27 = arith.negf %26 : vector<8x128xf32>
    %28 = math.exp %27 : vector<8x128xf32>
    %cst_12 = arith.constant 1.000000e+00 : f32
    %29 = vector.broadcast %cst_12 : f32 to vector<8x128xf32>
    %30 = arith.addf %29, %28 : vector<8x128xf32>
    %31 = arith.divf %29, %30 : vector<8x128xf32>
    %32 = vector.extract_strided_slice %19 {offsets = [0, 256], sizes = [8, 128], strides = [1, 1]} : vector<8x512xf32> to vector<8x128xf32>
    %33 = math.tanh %32 : vector<8x128xf32>
    %34 = vector.extract_strided_slice %19 {offsets = [0, 384], sizes = [8, 128], strides = [1, 1]} : vector<8x512xf32> to vector<8x128xf32>
    %35 = arith.negf %34 : vector<8x128xf32>
    %36 = math.exp %35 : vector<8x128xf32>
    %cst_13 = arith.constant 1.000000e+00 : f32
    %37 = vector.broadcast %cst_13 : f32 to vector<8x128xf32>
    %38 = arith.addf %37, %36 : vector<8x128xf32>
    %39 = arith.divf %37, %38 : vector<8x128xf32>
    %40 = arith.mulf %31, %13 : vector<8x128xf32>
    %41 = arith.mulf %25, %33 : vector<8x128xf32>
    %42 = arith.addf %40, %41 : vector<8x128xf32>
    %43 = math.tanh %42 : vector<8x128xf32>
    %44 = arith.mulf %39, %43 : vector<8x128xf32>
    %45 = arith.truncf %42 : vector<8x128xf32> to vector<8x128xbf16>
    %c0_14 = arith.constant 0 : index
    %c0_15 = arith.constant 0 : index
    %46 = vector.load %arg4[%c0_14, %c0_15] : memref<128x128xbf16, #tpu.memory_space<vmem>>, vector<128x128xbf16>
    %cst_16 = arith.constant dense<0.000000e+00> : vector<8x128xf32>
    %47 = tpu.matmul %45, %46, %cst_16 {dimension_numbers = #tpu.dot_dimension_numbers<[1], [0], [0], [1], [0, 0, 1, 1], [], []>} : vector<8x128xbf16>, vector<128x128xbf16>, vector<8x128xf32> -> vector<8x128xf32>
    %48 = arith.addf %47, %11 : vector<8x128xf32>
    %49 = arith.negf %48 : vector<8x128xf32>
    %50 = math.exp %49 : vector<8x128xf32>
    %cst_17 = arith.constant 1.000000e+00 : f32
    %51 = vector.broadcast %cst_17 : f32 to vector<8x128xf32>
    %52 = arith.addf %51, %50 : vector<8x128xf32>
    %53 = arith.divf %51, %52 : vector<8x128xf32>
    %54 = vector.extract_strided_slice %53 {offsets = [0, 0], sizes = [8, 1], strides = [1, 1]} : vector<8x128xf32> to vector<8x1xf32>
    %55 = vector.extract_strided_slice %53 {offsets = [0, 1], sizes = [8, 1], strides = [1, 1]} : vector<8x128xf32> to vector<8x1xf32>
    %56 = vector.extract_strided_slice %53 {offsets = [0, 2], sizes = [8, 1], strides = [1, 1]} : vector<8x128xf32> to vector<8x1xf32>
    %cst_18 = arith.constant 2.000000e+00 : f32
    %57 = vector.broadcast %cst_18 : f32 to vector<8x1xf32>
    %58 = arith.mulf %57, %56 : vector<8x1xf32>
    %cst_19 = arith.constant 1.000000e+00 : f32
    %59 = vector.broadcast %cst_19 : f32 to vector<8x1xf32>
    %60 = arith.subf %58, %59 : vector<8x1xf32>
    %61 = vector.extract_strided_slice %53 {offsets = [0, 3], sizes = [8, 1], strides = [1, 1]} : vector<8x128xf32> to vector<8x1xf32>
    %62 = arith.mulf %55, %14 : vector<8x1xf32>
    %63 = arith.mulf %54, %60 : vector<8x1xf32>
    %64 = arith.addf %62, %63 : vector<8x1xf32>
    %65 = math.tanh %64 : vector<8x1xf32>
    %66 = arith.mulf %61, %65 : vector<8x1xf32>
    %c0_i32 = arith.constant 0 : i32
    %67 = vector.broadcast %c0_i32 : i32 to vector<8x128xi32>
    %68 = arith.cmpi eq, %12, %67 : vector<8x128xi32>
    %69 = vector.shape_cast %64 : vector<8x1xf32> to vector<8x1xf32>
    %70 = vector.broadcast %69 : vector<8x1xf32> to vector<8x128xf32>
    %71 = arith.select %68, %70, %15 : vector<8x128xi1>, vector<8x128xf32>
    %c0_20 = arith.constant 0 : index
    %c1 = arith.constant 1 : index
    %72 = vector.load %arg0[%c0_20, %c1] : memref<8x8xf32, #tpu.memory_space<vmem>>, vector<8x1xf32>
    %73 = vector.broadcast %72 : vector<8x1xf32> to vector<8x512xf32>
    %74 = arith.mulf %73, %2 : vector<8x512xf32>
    %75 = arith.addf %74, %5 : vector<8x512xf32>
    %76 = arith.truncf %44 : vector<8x128xf32> to vector<8x128xbf16>
    %c0_21 = arith.constant 0 : index
    %c0_22 = arith.constant 0 : index
    %77 = vector.load %arg2[%c0_21, %c0_22] : memref<128x512xbf16, #tpu.memory_space<vmem>>, vector<128x512xbf16>
    %cst_23 = arith.constant dense<0.000000e+00> : vector<8x512xf32>
    %78 = tpu.matmul %76, %77, %cst_23 {dimension_numbers = #tpu.dot_dimension_numbers<[1], [0], [0], [1], [0, 0, 1, 1], [], []>} : vector<8x128xbf16>, vector<128x512xbf16>, vector<8x512xf32> -> vector<8x512xf32>
    %79 = arith.addf %75, %78 : vector<8x512xf32>
    %80 = vector.extract_strided_slice %79 {offsets = [0, 0], sizes = [8, 128], strides = [1, 1]} : vector<8x512xf32> to vector<8x128xf32>
    %81 = arith.negf %80 : vector<8x128xf32>
    %82 = math.exp %81 : vector<8x128xf32>
    %cst_24 = arith.constant 1.000000e+00 : f32
    %83 = vector.broadcast %cst_24 : f32 to vector<8x128xf32>
    %84 = arith.addf %83, %82 : vector<8x128xf32>
    %85 = arith.divf %83, %84 : vector<8x128xf32>
    %86 = vector.extract_strided_slice %79 {offsets = [0, 128], sizes = [8, 128], strides = [1, 1]} : vector<8x512xf32> to vector<8x128xf32>
    %87 = arith.negf %86 : vector<8x128xf32>
    %88 = math.exp %87 : vector<8x128xf32>
    %cst_25 = arith.constant 1.000000e+00 : f32
    %89 = vector.broadcast %cst_25 : f32 to vector<8x128xf32>
    %90 = arith.addf %89, %88 : vector<8x128xf32>
    %91 = arith.divf %89, %90 : vector<8x128xf32>
    %92 = vector.extract_strided_slice %79 {offsets = [0, 256], sizes = [8, 128], strides = [1, 1]} : vector<8x512xf32> to vector<8x128xf32>
    %93 = math.tanh %92 : vector<8x128xf32>
    %94 = vector.extract_strided_slice %79 {offsets = [0, 384], sizes = [8, 128], strides = [1, 1]} : vector<8x512xf32> to vector<8x128xf32>
    %95 = arith.negf %94 : vector<8x128xf32>
    %96 = math.exp %95 : vector<8x128xf32>
    %cst_26 = arith.constant 1.000000e+00 : f32
    %97 = vector.broadcast %cst_26 : f32 to vector<8x128xf32>
    %98 = arith.addf %97, %96 : vector<8x128xf32>
    %99 = arith.divf %97, %98 : vector<8x128xf32>
    %100 = arith.mulf %91, %42 : vector<8x128xf32>
    %101 = arith.mulf %85, %93 : vector<8x128xf32>
    %102 = arith.addf %100, %101 : vector<8x128xf32>
    %103 = math.tanh %102 : vector<8x128xf32>
    %104 = arith.mulf %99, %103 : vector<8x128xf32>
    %105 = arith.truncf %102 : vector<8x128xf32> to vector<8x128xbf16>
    %c0_27 = arith.constant 0 : index
    %c0_28 = arith.constant 0 : index
    %106 = vector.load %arg4[%c0_27, %c0_28] : memref<128x128xbf16, #tpu.memory_space<vmem>>, vector<128x128xbf16>
    %cst_29 = arith.constant dense<0.000000e+00> : vector<8x128xf32>
    %107 = tpu.matmul %105, %106, %cst_29 {dimension_numbers = #tpu.dot_dimension_numbers<[1], [0], [0], [1], [0, 0, 1, 1], [], []>} : vector<8x128xbf16>, vector<128x128xbf16>, vector<8x128xf32> -> vector<8x128xf32>
    %108 = arith.addf %107, %11 : vector<8x128xf32>
    %109 = vector.broadcast %66 : vector<8x1xf32> to vector<8x128xf32>
    %110 = arith.mulf %109, %8 : vector<8x128xf32>
    %111 = arith.addf %108, %110 : vector<8x128xf32>
    %112 = arith.negf %111 : vector<8x128xf32>
    %113 = math.exp %112 : vector<8x128xf32>
    %cst_30 = arith.constant 1.000000e+00 : f32
    %114 = vector.broadcast %cst_30 : f32 to vector<8x128xf32>
    %115 = arith.addf %114, %113 : vector<8x128xf32>
    %116 = arith.divf %114, %115 : vector<8x128xf32>
    %117 = vector.extract_strided_slice %116 {offsets = [0, 0], sizes = [8, 1], strides = [1, 1]} : vector<8x128xf32> to vector<8x1xf32>
    %118 = vector.extract_strided_slice %116 {offsets = [0, 1], sizes = [8, 1], strides = [1, 1]} : vector<8x128xf32> to vector<8x1xf32>
    %119 = vector.extract_strided_slice %116 {offsets = [0, 2], sizes = [8, 1], strides = [1, 1]} : vector<8x128xf32> to vector<8x1xf32>
    %cst_31 = arith.constant 2.000000e+00 : f32
    %120 = vector.broadcast %cst_31 : f32 to vector<8x1xf32>
    %121 = arith.mulf %120, %119 : vector<8x1xf32>
    %cst_32 = arith.constant 1.000000e+00 : f32
    %122 = vector.broadcast %cst_32 : f32 to vector<8x1xf32>
    %123 = arith.subf %121, %122 : vector<8x1xf32>
    %124 = vector.extract_strided_slice %116 {offsets = [0, 3], sizes = [8, 1], strides = [1, 1]} : vector<8x128xf32> to vector<8x1xf32>
    %125 = arith.mulf %118, %64 : vector<8x1xf32>
    %126 = arith.mulf %117, %123 : vector<8x1xf32>
    %127 = arith.addf %125, %126 : vector<8x1xf32>
    %128 = math.tanh %127 : vector<8x1xf32>
    %129 = arith.mulf %124, %128 : vector<8x1xf32>
    %c1_i32 = arith.constant 1 : i32
    %130 = vector.broadcast %c1_i32 : i32 to vector<8x128xi32>
    %131 = arith.cmpi eq, %12, %130 : vector<8x128xi32>
    %132 = vector.shape_cast %127 : vector<8x1xf32> to vector<8x1xf32>
    %133 = vector.broadcast %132 : vector<8x1xf32> to vector<8x128xf32>
    %134 = arith.select %131, %133, %71 : vector<8x128xi1>, vector<8x128xf32>
    %c0_33 = arith.constant 0 : index
    %c2 = arith.constant 2 : index
    %135 = vector.load %arg0[%c0_33, %c2] : memref<8x8xf32, #tpu.memory_space<vmem>>, vector<8x1xf32>
    %136 = vector.broadcast %135 : vector<8x1xf32> to vector<8x512xf32>
    %137 = arith.mulf %136, %2 : vector<8x512xf32>
    %138 = arith.addf %137, %5 : vector<8x512xf32>
    %139 = arith.truncf %104 : vector<8x128xf32> to vector<8x128xbf16>
    %c0_34 = arith.constant 0 : index
    %c0_35 = arith.constant 0 : index
    %140 = vector.load %arg2[%c0_34, %c0_35] : memref<128x512xbf16, #tpu.memory_space<vmem>>, vector<128x512xbf16>
    %cst_36 = arith.constant dense<0.000000e+00> : vector<8x512xf32>
    %141 = tpu.matmul %139, %140, %cst_36 {dimension_numbers = #tpu.dot_dimension_numbers<[1], [0], [0], [1], [0, 0, 1, 1], [], []>} : vector<8x128xbf16>, vector<128x512xbf16>, vector<8x512xf32> -> vector<8x512xf32>
    %142 = arith.addf %138, %141 : vector<8x512xf32>
    %143 = vector.extract_strided_slice %142 {offsets = [0, 0], sizes = [8, 128], strides = [1, 1]} : vector<8x512xf32> to vector<8x128xf32>
    %144 = arith.negf %143 : vector<8x128xf32>
    %145 = math.exp %144 : vector<8x128xf32>
    %cst_37 = arith.constant 1.000000e+00 : f32
    %146 = vector.broadcast %cst_37 : f32 to vector<8x128xf32>
    %147 = arith.addf %146, %145 : vector<8x128xf32>
    %148 = arith.divf %146, %147 : vector<8x128xf32>
    %149 = vector.extract_strided_slice %142 {offsets = [0, 128], sizes = [8, 128], strides = [1, 1]} : vector<8x512xf32> to vector<8x128xf32>
    %150 = arith.negf %149 : vector<8x128xf32>
    %151 = math.exp %150 : vector<8x128xf32>
    %cst_38 = arith.constant 1.000000e+00 : f32
    %152 = vector.broadcast %cst_38 : f32 to vector<8x128xf32>
    %153 = arith.addf %152, %151 : vector<8x128xf32>
    %154 = arith.divf %152, %153 : vector<8x128xf32>
    %155 = vector.extract_strided_slice %142 {offsets = [0, 256], sizes = [8, 128], strides = [1, 1]} : vector<8x512xf32> to vector<8x128xf32>
    %156 = math.tanh %155 : vector<8x128xf32>
    %157 = vector.extract_strided_slice %142 {offsets = [0, 384], sizes = [8, 128], strides = [1, 1]} : vector<8x512xf32> to vector<8x128xf32>
    %158 = arith.negf %157 : vector<8x128xf32>
    %159 = math.exp %158 : vector<8x128xf32>
    %cst_39 = arith.constant 1.000000e+00 : f32
    %160 = vector.broadcast %cst_39 : f32 to vector<8x128xf32>
    %161 = arith.addf %160, %159 : vector<8x128xf32>
    %162 = arith.divf %160, %161 : vector<8x128xf32>
    %163 = arith.mulf %154, %102 : vector<8x128xf32>
    %164 = arith.mulf %148, %156 : vector<8x128xf32>
    %165 = arith.addf %163, %164 : vector<8x128xf32>
    %166 = math.tanh %165 : vector<8x128xf32>
    %167 = arith.mulf %162, %166 : vector<8x128xf32>
    %168 = arith.truncf %165 : vector<8x128xf32> to vector<8x128xbf16>
    %c0_40 = arith.constant 0 : index
    %c0_41 = arith.constant 0 : index
    %169 = vector.load %arg4[%c0_40, %c0_41] : memref<128x128xbf16, #tpu.memory_space<vmem>>, vector<128x128xbf16>
    %cst_42 = arith.constant dense<0.000000e+00> : vector<8x128xf32>
    %170 = tpu.matmul %168, %169, %cst_42 {dimension_numbers = #tpu.dot_dimension_numbers<[1], [0], [0], [1], [0, 0, 1, 1], [], []>} : vector<8x128xbf16>, vector<128x128xbf16>, vector<8x128xf32> -> vector<8x128xf32>
    %171 = arith.addf %170, %11 : vector<8x128xf32>
    %172 = vector.broadcast %129 : vector<8x1xf32> to vector<8x128xf32>
    %173 = arith.mulf %172, %8 : vector<8x128xf32>
    %174 = arith.addf %171, %173 : vector<8x128xf32>
    %175 = arith.negf %174 : vector<8x128xf32>
    %176 = math.exp %175 : vector<8x128xf32>
    %cst_43 = arith.constant 1.000000e+00 : f32
    %177 = vector.broadcast %cst_43 : f32 to vector<8x128xf32>
    %178 = arith.addf %177, %176 : vector<8x128xf32>
    %179 = arith.divf %177, %178 : vector<8x128xf32>
    %180 = vector.extract_strided_slice %179 {offsets = [0, 0], sizes = [8, 1], strides = [1, 1]} : vector<8x128xf32> to vector<8x1xf32>
    %181 = vector.extract_strided_slice %179 {offsets = [0, 1], sizes = [8, 1], strides = [1, 1]} : vector<8x128xf32> to vector<8x1xf32>
    %182 = vector.extract_strided_slice %179 {offsets = [0, 2], sizes = [8, 1], strides = [1, 1]} : vector<8x128xf32> to vector<8x1xf32>
    %cst_44 = arith.constant 2.000000e+00 : f32
    %183 = vector.broadcast %cst_44 : f32 to vector<8x1xf32>
    %184 = arith.mulf %183, %182 : vector<8x1xf32>
    %cst_45 = arith.constant 1.000000e+00 : f32
    %185 = vector.broadcast %cst_45 : f32 to vector<8x1xf32>
    %186 = arith.subf %184, %185 : vector<8x1xf32>
    %187 = vector.extract_strided_slice %179 {offsets = [0, 3], sizes = [8, 1], strides = [1, 1]} : vector<8x128xf32> to vector<8x1xf32>
    %188 = arith.mulf %181, %127 : vector<8x1xf32>
    %189 = arith.mulf %180, %186 : vector<8x1xf32>
    %190 = arith.addf %188, %189 : vector<8x1xf32>
    %191 = math.tanh %190 : vector<8x1xf32>
    %192 = arith.mulf %187, %191 : vector<8x1xf32>
    %c2_i32 = arith.constant 2 : i32
    %193 = vector.broadcast %c2_i32 : i32 to vector<8x128xi32>
    %194 = arith.cmpi eq, %12, %193 : vector<8x128xi32>
    %195 = vector.shape_cast %190 : vector<8x1xf32> to vector<8x1xf32>
    %196 = vector.broadcast %195 : vector<8x1xf32> to vector<8x128xf32>
    %197 = arith.select %194, %196, %134 : vector<8x128xi1>, vector<8x128xf32>
    %c0_46 = arith.constant 0 : index
    %c3 = arith.constant 3 : index
    %198 = vector.load %arg0[%c0_46, %c3] : memref<8x8xf32, #tpu.memory_space<vmem>>, vector<8x1xf32>
    %199 = vector.broadcast %198 : vector<8x1xf32> to vector<8x512xf32>
    %200 = arith.mulf %199, %2 : vector<8x512xf32>
    %201 = arith.addf %200, %5 : vector<8x512xf32>
    %202 = arith.truncf %167 : vector<8x128xf32> to vector<8x128xbf16>
    %c0_47 = arith.constant 0 : index
    %c0_48 = arith.constant 0 : index
    %203 = vector.load %arg2[%c0_47, %c0_48] : memref<128x512xbf16, #tpu.memory_space<vmem>>, vector<128x512xbf16>
    %cst_49 = arith.constant dense<0.000000e+00> : vector<8x512xf32>
    %204 = tpu.matmul %202, %203, %cst_49 {dimension_numbers = #tpu.dot_dimension_numbers<[1], [0], [0], [1], [0, 0, 1, 1], [], []>} : vector<8x128xbf16>, vector<128x512xbf16>, vector<8x512xf32> -> vector<8x512xf32>
    %205 = arith.addf %201, %204 : vector<8x512xf32>
    %206 = vector.extract_strided_slice %205 {offsets = [0, 0], sizes = [8, 128], strides = [1, 1]} : vector<8x512xf32> to vector<8x128xf32>
    %207 = arith.negf %206 : vector<8x128xf32>
    %208 = math.exp %207 : vector<8x128xf32>
    %cst_50 = arith.constant 1.000000e+00 : f32
    %209 = vector.broadcast %cst_50 : f32 to vector<8x128xf32>
    %210 = arith.addf %209, %208 : vector<8x128xf32>
    %211 = arith.divf %209, %210 : vector<8x128xf32>
    %212 = vector.extract_strided_slice %205 {offsets = [0, 128], sizes = [8, 128], strides = [1, 1]} : vector<8x512xf32> to vector<8x128xf32>
    %213 = arith.negf %212 : vector<8x128xf32>
    %214 = math.exp %213 : vector<8x128xf32>
    %cst_51 = arith.constant 1.000000e+00 : f32
    %215 = vector.broadcast %cst_51 : f32 to vector<8x128xf32>
    %216 = arith.addf %215, %214 : vector<8x128xf32>
    %217 = arith.divf %215, %216 : vector<8x128xf32>
    %218 = vector.extract_strided_slice %205 {offsets = [0, 256], sizes = [8, 128], strides = [1, 1]} : vector<8x512xf32> to vector<8x128xf32>
    %219 = math.tanh %218 : vector<8x128xf32>
    %220 = vector.extract_strided_slice %205 {offsets = [0, 384], sizes = [8, 128], strides = [1, 1]} : vector<8x512xf32> to vector<8x128xf32>
    %221 = arith.negf %220 : vector<8x128xf32>
    %222 = math.exp %221 : vector<8x128xf32>
    %cst_52 = arith.constant 1.000000e+00 : f32
    %223 = vector.broadcast %cst_52 : f32 to vector<8x128xf32>
    %224 = arith.addf %223, %222 : vector<8x128xf32>
    %225 = arith.divf %223, %224 : vector<8x128xf32>
    %226 = arith.mulf %217, %165 : vector<8x128xf32>
    %227 = arith.mulf %211, %219 : vector<8x128xf32>
    %228 = arith.addf %226, %227 : vector<8x128xf32>
    %229 = math.tanh %228 : vector<8x128xf32>
    %230 = arith.mulf %225, %229 : vector<8x128xf32>
    %231 = arith.truncf %228 : vector<8x128xf32> to vector<8x128xbf16>
    %c0_53 = arith.constant 0 : index
    %c0_54 = arith.constant 0 : index
    %232 = vector.load %arg4[%c0_53, %c0_54] : memref<128x128xbf16, #tpu.memory_space<vmem>>, vector<128x128xbf16>
    %cst_55 = arith.constant dense<0.000000e+00> : vector<8x128xf32>
    %233 = tpu.matmul %231, %232, %cst_55 {dimension_numbers = #tpu.dot_dimension_numbers<[1], [0], [0], [1], [0, 0, 1, 1], [], []>} : vector<8x128xbf16>, vector<128x128xbf16>, vector<8x128xf32> -> vector<8x128xf32>
    %234 = arith.addf %233, %11 : vector<8x128xf32>
    %235 = vector.broadcast %192 : vector<8x1xf32> to vector<8x128xf32>
    %236 = arith.mulf %235, %8 : vector<8x128xf32>
    %237 = arith.addf %234, %236 : vector<8x128xf32>
    %238 = arith.negf %237 : vector<8x128xf32>
    %239 = math.exp %238 : vector<8x128xf32>
    %cst_56 = arith.constant 1.000000e+00 : f32
    %240 = vector.broadcast %cst_56 : f32 to vector<8x128xf32>
    %241 = arith.addf %240, %239 : vector<8x128xf32>
    %242 = arith.divf %240, %241 : vector<8x128xf32>
    %243 = vector.extract_strided_slice %242 {offsets = [0, 0], sizes = [8, 1], strides = [1, 1]} : vector<8x128xf32> to vector<8x1xf32>
    %244 = vector.extract_strided_slice %242 {offsets = [0, 1], sizes = [8, 1], strides = [1, 1]} : vector<8x128xf32> to vector<8x1xf32>
    %245 = vector.extract_strided_slice %242 {offsets = [0, 2], sizes = [8, 1], strides = [1, 1]} : vector<8x128xf32> to vector<8x1xf32>
    %cst_57 = arith.constant 2.000000e+00 : f32
    %246 = vector.broadcast %cst_57 : f32 to vector<8x1xf32>
    %247 = arith.mulf %246, %245 : vector<8x1xf32>
    %cst_58 = arith.constant 1.000000e+00 : f32
    %248 = vector.broadcast %cst_58 : f32 to vector<8x1xf32>
    %249 = arith.subf %247, %248 : vector<8x1xf32>
    %250 = vector.extract_strided_slice %242 {offsets = [0, 3], sizes = [8, 1], strides = [1, 1]} : vector<8x128xf32> to vector<8x1xf32>
    %251 = arith.mulf %244, %190 : vector<8x1xf32>
    %252 = arith.mulf %243, %249 : vector<8x1xf32>
    %253 = arith.addf %251, %252 : vector<8x1xf32>
    %254 = math.tanh %253 : vector<8x1xf32>
    %255 = arith.mulf %250, %254 : vector<8x1xf32>
    %c3_i32 = arith.constant 3 : i32
    %256 = vector.broadcast %c3_i32 : i32 to vector<8x128xi32>
    %257 = arith.cmpi eq, %12, %256 : vector<8x128xi32>
    %258 = vector.shape_cast %253 : vector<8x1xf32> to vector<8x1xf32>
    %259 = vector.broadcast %258 : vector<8x1xf32> to vector<8x128xf32>
    %260 = arith.select %257, %259, %197 : vector<8x128xi1>, vector<8x128xf32>
    %c0_59 = arith.constant 0 : index
    %c4 = arith.constant 4 : index
    %261 = vector.load %arg0[%c0_59, %c4] : memref<8x8xf32, #tpu.memory_space<vmem>>, vector<8x1xf32>
    %262 = vector.broadcast %261 : vector<8x1xf32> to vector<8x512xf32>
    %263 = arith.mulf %262, %2 : vector<8x512xf32>
    %264 = arith.addf %263, %5 : vector<8x512xf32>
    %265 = arith.truncf %230 : vector<8x128xf32> to vector<8x128xbf16>
    %c0_60 = arith.constant 0 : index
    %c0_61 = arith.constant 0 : index
    %266 = vector.load %arg2[%c0_60, %c0_61] : memref<128x512xbf16, #tpu.memory_space<vmem>>, vector<128x512xbf16>
    %cst_62 = arith.constant dense<0.000000e+00> : vector<8x512xf32>
    %267 = tpu.matmul %265, %266, %cst_62 {dimension_numbers = #tpu.dot_dimension_numbers<[1], [0], [0], [1], [0, 0, 1, 1], [], []>} : vector<8x128xbf16>, vector<128x512xbf16>, vector<8x512xf32> -> vector<8x512xf32>
    %268 = arith.addf %264, %267 : vector<8x512xf32>
    %269 = vector.extract_strided_slice %268 {offsets = [0, 0], sizes = [8, 128], strides = [1, 1]} : vector<8x512xf32> to vector<8x128xf32>
    %270 = arith.negf %269 : vector<8x128xf32>
    %271 = math.exp %270 : vector<8x128xf32>
    %cst_63 = arith.constant 1.000000e+00 : f32
    %272 = vector.broadcast %cst_63 : f32 to vector<8x128xf32>
    %273 = arith.addf %272, %271 : vector<8x128xf32>
    %274 = arith.divf %272, %273 : vector<8x128xf32>
    %275 = vector.extract_strided_slice %268 {offsets = [0, 128], sizes = [8, 128], strides = [1, 1]} : vector<8x512xf32> to vector<8x128xf32>
    %276 = arith.negf %275 : vector<8x128xf32>
    %277 = math.exp %276 : vector<8x128xf32>
    %cst_64 = arith.constant 1.000000e+00 : f32
    %278 = vector.broadcast %cst_64 : f32 to vector<8x128xf32>
    %279 = arith.addf %278, %277 : vector<8x128xf32>
    %280 = arith.divf %278, %279 : vector<8x128xf32>
    %281 = vector.extract_strided_slice %268 {offsets = [0, 256], sizes = [8, 128], strides = [1, 1]} : vector<8x512xf32> to vector<8x128xf32>
    %282 = math.tanh %281 : vector<8x128xf32>
    %283 = vector.extract_strided_slice %268 {offsets = [0, 384], sizes = [8, 128], strides = [1, 1]} : vector<8x512xf32> to vector<8x128xf32>
    %284 = arith.negf %283 : vector<8x128xf32>
    %285 = math.exp %284 : vector<8x128xf32>
    %cst_65 = arith.constant 1.000000e+00 : f32
    %286 = vector.broadcast %cst_65 : f32 to vector<8x128xf32>
    %287 = arith.addf %286, %285 : vector<8x128xf32>
    %288 = arith.divf %286, %287 : vector<8x128xf32>
    %289 = arith.mulf %280, %228 : vector<8x128xf32>
    %290 = arith.mulf %274, %282 : vector<8x128xf32>
    %291 = arith.addf %289, %290 : vector<8x128xf32>
    %292 = math.tanh %291 : vector<8x128xf32>
    %293 = arith.mulf %288, %292 : vector<8x128xf32>
    %294 = arith.truncf %291 : vector<8x128xf32> to vector<8x128xbf16>
    %c0_66 = arith.constant 0 : index
    %c0_67 = arith.constant 0 : index
    %295 = vector.load %arg4[%c0_66, %c0_67] : memref<128x128xbf16, #tpu.memory_space<vmem>>, vector<128x128xbf16>
    %cst_68 = arith.constant dense<0.000000e+00> : vector<8x128xf32>
    %296 = tpu.matmul %294, %295, %cst_68 {dimension_numbers = #tpu.dot_dimension_numbers<[1], [0], [0], [1], [0, 0, 1, 1], [], []>} : vector<8x128xbf16>, vector<128x128xbf16>, vector<8x128xf32> -> vector<8x128xf32>
    %297 = arith.addf %296, %11 : vector<8x128xf32>
    %298 = vector.broadcast %255 : vector<8x1xf32> to vector<8x128xf32>
    %299 = arith.mulf %298, %8 : vector<8x128xf32>
    %300 = arith.addf %297, %299 : vector<8x128xf32>
    %301 = arith.negf %300 : vector<8x128xf32>
    %302 = math.exp %301 : vector<8x128xf32>
    %cst_69 = arith.constant 1.000000e+00 : f32
    %303 = vector.broadcast %cst_69 : f32 to vector<8x128xf32>
    %304 = arith.addf %303, %302 : vector<8x128xf32>
    %305 = arith.divf %303, %304 : vector<8x128xf32>
    %306 = vector.extract_strided_slice %305 {offsets = [0, 0], sizes = [8, 1], strides = [1, 1]} : vector<8x128xf32> to vector<8x1xf32>
    %307 = vector.extract_strided_slice %305 {offsets = [0, 1], sizes = [8, 1], strides = [1, 1]} : vector<8x128xf32> to vector<8x1xf32>
    %308 = vector.extract_strided_slice %305 {offsets = [0, 2], sizes = [8, 1], strides = [1, 1]} : vector<8x128xf32> to vector<8x1xf32>
    %cst_70 = arith.constant 2.000000e+00 : f32
    %309 = vector.broadcast %cst_70 : f32 to vector<8x1xf32>
    %310 = arith.mulf %309, %308 : vector<8x1xf32>
    %cst_71 = arith.constant 1.000000e+00 : f32
    %311 = vector.broadcast %cst_71 : f32 to vector<8x1xf32>
    %312 = arith.subf %310, %311 : vector<8x1xf32>
    %313 = vector.extract_strided_slice %305 {offsets = [0, 3], sizes = [8, 1], strides = [1, 1]} : vector<8x128xf32> to vector<8x1xf32>
    %314 = arith.mulf %307, %253 : vector<8x1xf32>
    %315 = arith.mulf %306, %312 : vector<8x1xf32>
    %316 = arith.addf %314, %315 : vector<8x1xf32>
    %317 = math.tanh %316 : vector<8x1xf32>
    %318 = arith.mulf %313, %317 : vector<8x1xf32>
    %c4_i32 = arith.constant 4 : i32
    %319 = vector.broadcast %c4_i32 : i32 to vector<8x128xi32>
    %320 = arith.cmpi eq, %12, %319 : vector<8x128xi32>
    %321 = vector.shape_cast %316 : vector<8x1xf32> to vector<8x1xf32>
    %322 = vector.broadcast %321 : vector<8x1xf32> to vector<8x128xf32>
    %323 = arith.select %320, %322, %260 : vector<8x128xi1>, vector<8x128xf32>
    %c0_72 = arith.constant 0 : index
    %c5 = arith.constant 5 : index
    %324 = vector.load %arg0[%c0_72, %c5] : memref<8x8xf32, #tpu.memory_space<vmem>>, vector<8x1xf32>
    %325 = vector.broadcast %324 : vector<8x1xf32> to vector<8x512xf32>
    %326 = arith.mulf %325, %2 : vector<8x512xf32>
    %327 = arith.addf %326, %5 : vector<8x512xf32>
    %328 = arith.truncf %293 : vector<8x128xf32> to vector<8x128xbf16>
    %c0_73 = arith.constant 0 : index
    %c0_74 = arith.constant 0 : index
    %329 = vector.load %arg2[%c0_73, %c0_74] : memref<128x512xbf16, #tpu.memory_space<vmem>>, vector<128x512xbf16>
    %cst_75 = arith.constant dense<0.000000e+00> : vector<8x512xf32>
    %330 = tpu.matmul %328, %329, %cst_75 {dimension_numbers = #tpu.dot_dimension_numbers<[1], [0], [0], [1], [0, 0, 1, 1], [], []>} : vector<8x128xbf16>, vector<128x512xbf16>, vector<8x512xf32> -> vector<8x512xf32>
    %331 = arith.addf %327, %330 : vector<8x512xf32>
    %332 = vector.extract_strided_slice %331 {offsets = [0, 0], sizes = [8, 128], strides = [1, 1]} : vector<8x512xf32> to vector<8x128xf32>
    %333 = arith.negf %332 : vector<8x128xf32>
    %334 = math.exp %333 : vector<8x128xf32>
    %cst_76 = arith.constant 1.000000e+00 : f32
    %335 = vector.broadcast %cst_76 : f32 to vector<8x128xf32>
    %336 = arith.addf %335, %334 : vector<8x128xf32>
    %337 = arith.divf %335, %336 : vector<8x128xf32>
    %338 = vector.extract_strided_slice %331 {offsets = [0, 128], sizes = [8, 128], strides = [1, 1]} : vector<8x512xf32> to vector<8x128xf32>
    %339 = arith.negf %338 : vector<8x128xf32>
    %340 = math.exp %339 : vector<8x128xf32>
    %cst_77 = arith.constant 1.000000e+00 : f32
    %341 = vector.broadcast %cst_77 : f32 to vector<8x128xf32>
    %342 = arith.addf %341, %340 : vector<8x128xf32>
    %343 = arith.divf %341, %342 : vector<8x128xf32>
    %344 = vector.extract_strided_slice %331 {offsets = [0, 256], sizes = [8, 128], strides = [1, 1]} : vector<8x512xf32> to vector<8x128xf32>
    %345 = math.tanh %344 : vector<8x128xf32>
    %346 = vector.extract_strided_slice %331 {offsets = [0, 384], sizes = [8, 128], strides = [1, 1]} : vector<8x512xf32> to vector<8x128xf32>
    %347 = arith.negf %346 : vector<8x128xf32>
    %348 = math.exp %347 : vector<8x128xf32>
    %cst_78 = arith.constant 1.000000e+00 : f32
    %349 = vector.broadcast %cst_78 : f32 to vector<8x128xf32>
    %350 = arith.addf %349, %348 : vector<8x128xf32>
    %351 = arith.divf %349, %350 : vector<8x128xf32>
    %352 = arith.mulf %343, %291 : vector<8x128xf32>
    %353 = arith.mulf %337, %345 : vector<8x128xf32>
    %354 = arith.addf %352, %353 : vector<8x128xf32>
    %355 = math.tanh %354 : vector<8x128xf32>
    %356 = arith.mulf %351, %355 : vector<8x128xf32>
    %357 = arith.truncf %354 : vector<8x128xf32> to vector<8x128xbf16>
    %c0_79 = arith.constant 0 : index
    %c0_80 = arith.constant 0 : index
    %358 = vector.load %arg4[%c0_79, %c0_80] : memref<128x128xbf16, #tpu.memory_space<vmem>>, vector<128x128xbf16>
    %cst_81 = arith.constant dense<0.000000e+00> : vector<8x128xf32>
    %359 = tpu.matmul %357, %358, %cst_81 {dimension_numbers = #tpu.dot_dimension_numbers<[1], [0], [0], [1], [0, 0, 1, 1], [], []>} : vector<8x128xbf16>, vector<128x128xbf16>, vector<8x128xf32> -> vector<8x128xf32>
    %360 = arith.addf %359, %11 : vector<8x128xf32>
    %361 = vector.broadcast %318 : vector<8x1xf32> to vector<8x128xf32>
    %362 = arith.mulf %361, %8 : vector<8x128xf32>
    %363 = arith.addf %360, %362 : vector<8x128xf32>
    %364 = arith.negf %363 : vector<8x128xf32>
    %365 = math.exp %364 : vector<8x128xf32>
    %cst_82 = arith.constant 1.000000e+00 : f32
    %366 = vector.broadcast %cst_82 : f32 to vector<8x128xf32>
    %367 = arith.addf %366, %365 : vector<8x128xf32>
    %368 = arith.divf %366, %367 : vector<8x128xf32>
    %369 = vector.extract_strided_slice %368 {offsets = [0, 0], sizes = [8, 1], strides = [1, 1]} : vector<8x128xf32> to vector<8x1xf32>
    %370 = vector.extract_strided_slice %368 {offsets = [0, 1], sizes = [8, 1], strides = [1, 1]} : vector<8x128xf32> to vector<8x1xf32>
    %371 = vector.extract_strided_slice %368 {offsets = [0, 2], sizes = [8, 1], strides = [1, 1]} : vector<8x128xf32> to vector<8x1xf32>
    %cst_83 = arith.constant 2.000000e+00 : f32
    %372 = vector.broadcast %cst_83 : f32 to vector<8x1xf32>
    %373 = arith.mulf %372, %371 : vector<8x1xf32>
    %cst_84 = arith.constant 1.000000e+00 : f32
    %374 = vector.broadcast %cst_84 : f32 to vector<8x1xf32>
    %375 = arith.subf %373, %374 : vector<8x1xf32>
    %376 = vector.extract_strided_slice %368 {offsets = [0, 3], sizes = [8, 1], strides = [1, 1]} : vector<8x128xf32> to vector<8x1xf32>
    %377 = arith.mulf %370, %316 : vector<8x1xf32>
    %378 = arith.mulf %369, %375 : vector<8x1xf32>
    %379 = arith.addf %377, %378 : vector<8x1xf32>
    %380 = math.tanh %379 : vector<8x1xf32>
    %381 = arith.mulf %376, %380 : vector<8x1xf32>
    %c5_i32 = arith.constant 5 : i32
    %382 = vector.broadcast %c5_i32 : i32 to vector<8x128xi32>
    %383 = arith.cmpi eq, %12, %382 : vector<8x128xi32>
    %384 = vector.shape_cast %379 : vector<8x1xf32> to vector<8x1xf32>
    %385 = vector.broadcast %384 : vector<8x1xf32> to vector<8x128xf32>
    %386 = arith.select %383, %385, %323 : vector<8x128xi1>, vector<8x128xf32>
    %c0_85 = arith.constant 0 : index
    %c6 = arith.constant 6 : index
    %387 = vector.load %arg0[%c0_85, %c6] : memref<8x8xf32, #tpu.memory_space<vmem>>, vector<8x1xf32>
    %388 = vector.broadcast %387 : vector<8x1xf32> to vector<8x512xf32>
    %389 = arith.mulf %388, %2 : vector<8x512xf32>
    %390 = arith.addf %389, %5 : vector<8x512xf32>
    %391 = arith.truncf %356 : vector<8x128xf32> to vector<8x128xbf16>
    %c0_86 = arith.constant 0 : index
    %c0_87 = arith.constant 0 : index
    %392 = vector.load %arg2[%c0_86, %c0_87] : memref<128x512xbf16, #tpu.memory_space<vmem>>, vector<128x512xbf16>
    %cst_88 = arith.constant dense<0.000000e+00> : vector<8x512xf32>
    %393 = tpu.matmul %391, %392, %cst_88 {dimension_numbers = #tpu.dot_dimension_numbers<[1], [0], [0], [1], [0, 0, 1, 1], [], []>} : vector<8x128xbf16>, vector<128x512xbf16>, vector<8x512xf32> -> vector<8x512xf32>
    %394 = arith.addf %390, %393 : vector<8x512xf32>
    %395 = vector.extract_strided_slice %394 {offsets = [0, 0], sizes = [8, 128], strides = [1, 1]} : vector<8x512xf32> to vector<8x128xf32>
    %396 = arith.negf %395 : vector<8x128xf32>
    %397 = math.exp %396 : vector<8x128xf32>
    %cst_89 = arith.constant 1.000000e+00 : f32
    %398 = vector.broadcast %cst_89 : f32 to vector<8x128xf32>
    %399 = arith.addf %398, %397 : vector<8x128xf32>
    %400 = arith.divf %398, %399 : vector<8x128xf32>
    %401 = vector.extract_strided_slice %394 {offsets = [0, 128], sizes = [8, 128], strides = [1, 1]} : vector<8x512xf32> to vector<8x128xf32>
    %402 = arith.negf %401 : vector<8x128xf32>
    %403 = math.exp %402 : vector<8x128xf32>
    %cst_90 = arith.constant 1.000000e+00 : f32
    %404 = vector.broadcast %cst_90 : f32 to vector<8x128xf32>
    %405 = arith.addf %404, %403 : vector<8x128xf32>
    %406 = arith.divf %404, %405 : vector<8x128xf32>
    %407 = vector.extract_strided_slice %394 {offsets = [0, 256], sizes = [8, 128], strides = [1, 1]} : vector<8x512xf32> to vector<8x128xf32>
    %408 = math.tanh %407 : vector<8x128xf32>
    %409 = vector.extract_strided_slice %394 {offsets = [0, 384], sizes = [8, 128], strides = [1, 1]} : vector<8x512xf32> to vector<8x128xf32>
    %410 = arith.negf %409 : vector<8x128xf32>
    %411 = math.exp %410 : vector<8x128xf32>
    %cst_91 = arith.constant 1.000000e+00 : f32
    %412 = vector.broadcast %cst_91 : f32 to vector<8x128xf32>
    %413 = arith.addf %412, %411 : vector<8x128xf32>
    %414 = arith.divf %412, %413 : vector<8x128xf32>
    %415 = arith.mulf %406, %354 : vector<8x128xf32>
    %416 = arith.mulf %400, %408 : vector<8x128xf32>
    %417 = arith.addf %415, %416 : vector<8x128xf32>
    %418 = math.tanh %417 : vector<8x128xf32>
    %419 = arith.mulf %414, %418 : vector<8x128xf32>
    %420 = arith.truncf %417 : vector<8x128xf32> to vector<8x128xbf16>
    %c0_92 = arith.constant 0 : index
    %c0_93 = arith.constant 0 : index
    %421 = vector.load %arg4[%c0_92, %c0_93] : memref<128x128xbf16, #tpu.memory_space<vmem>>, vector<128x128xbf16>
    %cst_94 = arith.constant dense<0.000000e+00> : vector<8x128xf32>
    %422 = tpu.matmul %420, %421, %cst_94 {dimension_numbers = #tpu.dot_dimension_numbers<[1], [0], [0], [1], [0, 0, 1, 1], [], []>} : vector<8x128xbf16>, vector<128x128xbf16>, vector<8x128xf32> -> vector<8x128xf32>
    %423 = arith.addf %422, %11 : vector<8x128xf32>
    %424 = vector.broadcast %381 : vector<8x1xf32> to vector<8x128xf32>
    %425 = arith.mulf %424, %8 : vector<8x128xf32>
    %426 = arith.addf %423, %425 : vector<8x128xf32>
    %427 = arith.negf %426 : vector<8x128xf32>
    %428 = math.exp %427 : vector<8x128xf32>
    %cst_95 = arith.constant 1.000000e+00 : f32
    %429 = vector.broadcast %cst_95 : f32 to vector<8x128xf32>
    %430 = arith.addf %429, %428 : vector<8x128xf32>
    %431 = arith.divf %429, %430 : vector<8x128xf32>
    %432 = vector.extract_strided_slice %431 {offsets = [0, 0], sizes = [8, 1], strides = [1, 1]} : vector<8x128xf32> to vector<8x1xf32>
    %433 = vector.extract_strided_slice %431 {offsets = [0, 1], sizes = [8, 1], strides = [1, 1]} : vector<8x128xf32> to vector<8x1xf32>
    %434 = vector.extract_strided_slice %431 {offsets = [0, 2], sizes = [8, 1], strides = [1, 1]} : vector<8x128xf32> to vector<8x1xf32>
    %cst_96 = arith.constant 2.000000e+00 : f32
    %435 = vector.broadcast %cst_96 : f32 to vector<8x1xf32>
    %436 = arith.mulf %435, %434 : vector<8x1xf32>
    %cst_97 = arith.constant 1.000000e+00 : f32
    %437 = vector.broadcast %cst_97 : f32 to vector<8x1xf32>
    %438 = arith.subf %436, %437 : vector<8x1xf32>
    %439 = vector.extract_strided_slice %431 {offsets = [0, 3], sizes = [8, 1], strides = [1, 1]} : vector<8x128xf32> to vector<8x1xf32>
    %440 = arith.mulf %433, %379 : vector<8x1xf32>
    %441 = arith.mulf %432, %438 : vector<8x1xf32>
    %442 = arith.addf %440, %441 : vector<8x1xf32>
    %443 = math.tanh %442 : vector<8x1xf32>
    %444 = arith.mulf %439, %443 : vector<8x1xf32>
    %c6_i32 = arith.constant 6 : i32
    %445 = vector.broadcast %c6_i32 : i32 to vector<8x128xi32>
    %446 = arith.cmpi eq, %12, %445 : vector<8x128xi32>
    %447 = vector.shape_cast %442 : vector<8x1xf32> to vector<8x1xf32>
    %448 = vector.broadcast %447 : vector<8x1xf32> to vector<8x128xf32>
    %449 = arith.select %446, %448, %386 : vector<8x128xi1>, vector<8x128xf32>
    %c0_98 = arith.constant 0 : index
    %c7 = arith.constant 7 : index
    %450 = vector.load %arg0[%c0_98, %c7] : memref<8x8xf32, #tpu.memory_space<vmem>>, vector<8x1xf32>
    %451 = vector.broadcast %450 : vector<8x1xf32> to vector<8x512xf32>
    %452 = arith.mulf %451, %2 : vector<8x512xf32>
    %453 = arith.addf %452, %5 : vector<8x512xf32>
    %454 = arith.truncf %419 : vector<8x128xf32> to vector<8x128xbf16>
    %c0_99 = arith.constant 0 : index
    %c0_100 = arith.constant 0 : index
    %455 = vector.load %arg2[%c0_99, %c0_100] : memref<128x512xbf16, #tpu.memory_space<vmem>>, vector<128x512xbf16>
    %cst_101 = arith.constant dense<0.000000e+00> : vector<8x512xf32>
    %456 = tpu.matmul %454, %455, %cst_101 {dimension_numbers = #tpu.dot_dimension_numbers<[1], [0], [0], [1], [0, 0, 1, 1], [], []>} : vector<8x128xbf16>, vector<128x512xbf16>, vector<8x512xf32> -> vector<8x512xf32>
    %457 = arith.addf %453, %456 : vector<8x512xf32>
    %458 = vector.extract_strided_slice %457 {offsets = [0, 0], sizes = [8, 128], strides = [1, 1]} : vector<8x512xf32> to vector<8x128xf32>
    %459 = arith.negf %458 : vector<8x128xf32>
    %460 = math.exp %459 : vector<8x128xf32>
    %cst_102 = arith.constant 1.000000e+00 : f32
    %461 = vector.broadcast %cst_102 : f32 to vector<8x128xf32>
    %462 = arith.addf %461, %460 : vector<8x128xf32>
    %463 = arith.divf %461, %462 : vector<8x128xf32>
    %464 = vector.extract_strided_slice %457 {offsets = [0, 128], sizes = [8, 128], strides = [1, 1]} : vector<8x512xf32> to vector<8x128xf32>
    %465 = arith.negf %464 : vector<8x128xf32>
    %466 = math.exp %465 : vector<8x128xf32>
    %cst_103 = arith.constant 1.000000e+00 : f32
    %467 = vector.broadcast %cst_103 : f32 to vector<8x128xf32>
    %468 = arith.addf %467, %466 : vector<8x128xf32>
    %469 = arith.divf %467, %468 : vector<8x128xf32>
    %470 = vector.extract_strided_slice %457 {offsets = [0, 256], sizes = [8, 128], strides = [1, 1]} : vector<8x512xf32> to vector<8x128xf32>
    %471 = math.tanh %470 : vector<8x128xf32>
    %472 = vector.extract_strided_slice %457 {offsets = [0, 384], sizes = [8, 128], strides = [1, 1]} : vector<8x512xf32> to vector<8x128xf32>
    %473 = arith.negf %472 : vector<8x128xf32>
    %474 = math.exp %473 : vector<8x128xf32>
    %cst_104 = arith.constant 1.000000e+00 : f32
    %475 = vector.broadcast %cst_104 : f32 to vector<8x128xf32>
    %476 = arith.addf %475, %474 : vector<8x128xf32>
    %477 = arith.divf %475, %476 : vector<8x128xf32>
    %478 = arith.mulf %469, %417 : vector<8x128xf32>
    %479 = arith.mulf %463, %471 : vector<8x128xf32>
    %480 = arith.addf %478, %479 : vector<8x128xf32>
    %481 = math.tanh %480 : vector<8x128xf32>
    %482 = arith.mulf %477, %481 : vector<8x128xf32>
    %483 = arith.truncf %480 : vector<8x128xf32> to vector<8x128xbf16>
    %c0_105 = arith.constant 0 : index
    %c0_106 = arith.constant 0 : index
    %484 = vector.load %arg4[%c0_105, %c0_106] : memref<128x128xbf16, #tpu.memory_space<vmem>>, vector<128x128xbf16>
    %cst_107 = arith.constant dense<0.000000e+00> : vector<8x128xf32>
    %485 = tpu.matmul %483, %484, %cst_107 {dimension_numbers = #tpu.dot_dimension_numbers<[1], [0], [0], [1], [0, 0, 1, 1], [], []>} : vector<8x128xbf16>, vector<128x128xbf16>, vector<8x128xf32> -> vector<8x128xf32>
    %486 = arith.addf %485, %11 : vector<8x128xf32>
    %487 = vector.broadcast %444 : vector<8x1xf32> to vector<8x128xf32>
    %488 = arith.mulf %487, %8 : vector<8x128xf32>
    %489 = arith.addf %486, %488 : vector<8x128xf32>
    %490 = arith.negf %489 : vector<8x128xf32>
    %491 = math.exp %490 : vector<8x128xf32>
    %cst_108 = arith.constant 1.000000e+00 : f32
    %492 = vector.broadcast %cst_108 : f32 to vector<8x128xf32>
    %493 = arith.addf %492, %491 : vector<8x128xf32>
    %494 = arith.divf %492, %493 : vector<8x128xf32>
    %495 = vector.extract_strided_slice %494 {offsets = [0, 0], sizes = [8, 1], strides = [1, 1]} : vector<8x128xf32> to vector<8x1xf32>
    %496 = vector.extract_strided_slice %494 {offsets = [0, 1], sizes = [8, 1], strides = [1, 1]} : vector<8x128xf32> to vector<8x1xf32>
    %497 = vector.extract_strided_slice %494 {offsets = [0, 2], sizes = [8, 1], strides = [1, 1]} : vector<8x128xf32> to vector<8x1xf32>
    %cst_109 = arith.constant 2.000000e+00 : f32
    %498 = vector.broadcast %cst_109 : f32 to vector<8x1xf32>
    %499 = arith.mulf %498, %497 : vector<8x1xf32>
    %cst_110 = arith.constant 1.000000e+00 : f32
    %500 = vector.broadcast %cst_110 : f32 to vector<8x1xf32>
    %501 = arith.subf %499, %500 : vector<8x1xf32>
    %502 = vector.extract_strided_slice %494 {offsets = [0, 3], sizes = [8, 1], strides = [1, 1]} : vector<8x128xf32> to vector<8x1xf32>
    %503 = arith.mulf %496, %442 : vector<8x1xf32>
    %504 = arith.mulf %495, %501 : vector<8x1xf32>
    %505 = arith.addf %503, %504 : vector<8x1xf32>
    %506 = math.tanh %505 : vector<8x1xf32>
    %507 = arith.mulf %502, %506 : vector<8x1xf32>
    %c7_i32 = arith.constant 7 : i32
    %508 = vector.broadcast %c7_i32 : i32 to vector<8x128xi32>
    %509 = arith.cmpi eq, %12, %508 : vector<8x128xi32>
    %510 = vector.shape_cast %505 : vector<8x1xf32> to vector<8x1xf32>
    %511 = vector.broadcast %510 : vector<8x1xf32> to vector<8x128xf32>
    %512 = arith.select %509, %511, %449 : vector<8x128xi1>, vector<8x128xf32>
    %513 = vector.broadcast %505 : vector<8x1xf32> to vector<8x512xf32>
    %514 = arith.mulf %513, %2 : vector<8x512xf32>
    %515 = arith.addf %514, %5 : vector<8x512xf32>
    %516 = arith.truncf %482 : vector<8x128xf32> to vector<8x128xbf16>
    %c0_111 = arith.constant 0 : index
    %c0_112 = arith.constant 0 : index
    %517 = vector.load %arg2[%c0_111, %c0_112] : memref<128x512xbf16, #tpu.memory_space<vmem>>, vector<128x512xbf16>
    %cst_113 = arith.constant dense<0.000000e+00> : vector<8x512xf32>
    %518 = tpu.matmul %516, %517, %cst_113 {dimension_numbers = #tpu.dot_dimension_numbers<[1], [0], [0], [1], [0, 0, 1, 1], [], []>} : vector<8x128xbf16>, vector<128x512xbf16>, vector<8x512xf32> -> vector<8x512xf32>
    %519 = arith.addf %515, %518 : vector<8x512xf32>
    %520 = vector.extract_strided_slice %519 {offsets = [0, 0], sizes = [8, 128], strides = [1, 1]} : vector<8x512xf32> to vector<8x128xf32>
    %521 = arith.negf %520 : vector<8x128xf32>
    %522 = math.exp %521 : vector<8x128xf32>
    %cst_114 = arith.constant 1.000000e+00 : f32
    %523 = vector.broadcast %cst_114 : f32 to vector<8x128xf32>
    %524 = arith.addf %523, %522 : vector<8x128xf32>
    %525 = arith.divf %523, %524 : vector<8x128xf32>
    %526 = vector.extract_strided_slice %519 {offsets = [0, 128], sizes = [8, 128], strides = [1, 1]} : vector<8x512xf32> to vector<8x128xf32>
    %527 = arith.negf %526 : vector<8x128xf32>
    %528 = math.exp %527 : vector<8x128xf32>
    %cst_115 = arith.constant 1.000000e+00 : f32
    %529 = vector.broadcast %cst_115 : f32 to vector<8x128xf32>
    %530 = arith.addf %529, %528 : vector<8x128xf32>
    %531 = arith.divf %529, %530 : vector<8x128xf32>
    %532 = vector.extract_strided_slice %519 {offsets = [0, 256], sizes = [8, 128], strides = [1, 1]} : vector<8x512xf32> to vector<8x128xf32>
    %533 = math.tanh %532 : vector<8x128xf32>
    %534 = vector.extract_strided_slice %519 {offsets = [0, 384], sizes = [8, 128], strides = [1, 1]} : vector<8x512xf32> to vector<8x128xf32>
    %535 = arith.negf %534 : vector<8x128xf32>
    %536 = math.exp %535 : vector<8x128xf32>
    %cst_116 = arith.constant 1.000000e+00 : f32
    %537 = vector.broadcast %cst_116 : f32 to vector<8x128xf32>
    %538 = arith.addf %537, %536 : vector<8x128xf32>
    %539 = arith.divf %537, %538 : vector<8x128xf32>
    %540 = arith.mulf %531, %480 : vector<8x128xf32>
    %541 = arith.mulf %525, %533 : vector<8x128xf32>
    %542 = arith.addf %540, %541 : vector<8x128xf32>
    %543 = math.tanh %542 : vector<8x128xf32>
    %544 = arith.mulf %539, %543 : vector<8x128xf32>
    %545 = arith.truncf %542 : vector<8x128xf32> to vector<8x128xbf16>
    %c0_117 = arith.constant 0 : index
    %c0_118 = arith.constant 0 : index
    %546 = vector.load %arg4[%c0_117, %c0_118] : memref<128x128xbf16, #tpu.memory_space<vmem>>, vector<128x128xbf16>
    %cst_119 = arith.constant dense<0.000000e+00> : vector<8x128xf32>
    %547 = tpu.matmul %545, %546, %cst_119 {dimension_numbers = #tpu.dot_dimension_numbers<[1], [0], [0], [1], [0, 0, 1, 1], [], []>} : vector<8x128xbf16>, vector<128x128xbf16>, vector<8x128xf32> -> vector<8x128xf32>
    %548 = arith.addf %547, %11 : vector<8x128xf32>
    %549 = vector.broadcast %507 : vector<8x1xf32> to vector<8x128xf32>
    %550 = arith.mulf %549, %8 : vector<8x128xf32>
    %551 = arith.addf %548, %550 : vector<8x128xf32>
    %552 = arith.negf %551 : vector<8x128xf32>
    %553 = math.exp %552 : vector<8x128xf32>
    %cst_120 = arith.constant 1.000000e+00 : f32
    %554 = vector.broadcast %cst_120 : f32 to vector<8x128xf32>
    %555 = arith.addf %554, %553 : vector<8x128xf32>
    %556 = arith.divf %554, %555 : vector<8x128xf32>
    %557 = vector.extract_strided_slice %556 {offsets = [0, 0], sizes = [8, 1], strides = [1, 1]} : vector<8x128xf32> to vector<8x1xf32>
    %558 = vector.extract_strided_slice %556 {offsets = [0, 1], sizes = [8, 1], strides = [1, 1]} : vector<8x128xf32> to vector<8x1xf32>
    %559 = vector.extract_strided_slice %556 {offsets = [0, 2], sizes = [8, 1], strides = [1, 1]} : vector<8x128xf32> to vector<8x1xf32>
    %cst_121 = arith.constant 2.000000e+00 : f32
    %560 = vector.broadcast %cst_121 : f32 to vector<8x1xf32>
    %561 = arith.mulf %560, %559 : vector<8x1xf32>
    %cst_122 = arith.constant 1.000000e+00 : f32
    %562 = vector.broadcast %cst_122 : f32 to vector<8x1xf32>
    %563 = arith.subf %561, %562 : vector<8x1xf32>
    %564 = vector.extract_strided_slice %556 {offsets = [0, 3], sizes = [8, 1], strides = [1, 1]} : vector<8x128xf32> to vector<8x1xf32>
    %565 = arith.mulf %558, %505 : vector<8x1xf32>
    %566 = arith.mulf %557, %563 : vector<8x1xf32>
    %567 = arith.addf %565, %566 : vector<8x1xf32>
    %568 = math.tanh %567 : vector<8x1xf32>
    %569 = arith.mulf %564, %568 : vector<8x1xf32>
    %c8_i32 = arith.constant 8 : i32
    %570 = vector.broadcast %c8_i32 : i32 to vector<8x128xi32>
    %571 = arith.cmpi eq, %12, %570 : vector<8x128xi32>
    %572 = vector.shape_cast %567 : vector<8x1xf32> to vector<8x1xf32>
    %573 = vector.broadcast %572 : vector<8x1xf32> to vector<8x128xf32>
    %574 = arith.select %571, %573, %512 : vector<8x128xi1>, vector<8x128xf32>
    %575 = vector.broadcast %567 : vector<8x1xf32> to vector<8x512xf32>
    %576 = arith.mulf %575, %2 : vector<8x512xf32>
    %577 = arith.addf %576, %5 : vector<8x512xf32>
    %578 = arith.truncf %544 : vector<8x128xf32> to vector<8x128xbf16>
    %c0_123 = arith.constant 0 : index
    %c0_124 = arith.constant 0 : index
    %579 = vector.load %arg2[%c0_123, %c0_124] : memref<128x512xbf16, #tpu.memory_space<vmem>>, vector<128x512xbf16>
    %cst_125 = arith.constant dense<0.000000e+00> : vector<8x512xf32>
    %580 = tpu.matmul %578, %579, %cst_125 {dimension_numbers = #tpu.dot_dimension_numbers<[1], [0], [0], [1], [0, 0, 1, 1], [], []>} : vector<8x128xbf16>, vector<128x512xbf16>, vector<8x512xf32> -> vector<8x512xf32>
    %581 = arith.addf %577, %580 : vector<8x512xf32>
    %582 = vector.extract_strided_slice %581 {offsets = [0, 0], sizes = [8, 128], strides = [1, 1]} : vector<8x512xf32> to vector<8x128xf32>
    %583 = arith.negf %582 : vector<8x128xf32>
    %584 = math.exp %583 : vector<8x128xf32>
    %cst_126 = arith.constant 1.000000e+00 : f32
    %585 = vector.broadcast %cst_126 : f32 to vector<8x128xf32>
    %586 = arith.addf %585, %584 : vector<8x128xf32>
    %587 = arith.divf %585, %586 : vector<8x128xf32>
    %588 = vector.extract_strided_slice %581 {offsets = [0, 128], sizes = [8, 128], strides = [1, 1]} : vector<8x512xf32> to vector<8x128xf32>
    %589 = arith.negf %588 : vector<8x128xf32>
    %590 = math.exp %589 : vector<8x128xf32>
    %cst_127 = arith.constant 1.000000e+00 : f32
    %591 = vector.broadcast %cst_127 : f32 to vector<8x128xf32>
    %592 = arith.addf %591, %590 : vector<8x128xf32>
    %593 = arith.divf %591, %592 : vector<8x128xf32>
    %594 = vector.extract_strided_slice %581 {offsets = [0, 256], sizes = [8, 128], strides = [1, 1]} : vector<8x512xf32> to vector<8x128xf32>
    %595 = math.tanh %594 : vector<8x128xf32>
    %596 = vector.extract_strided_slice %581 {offsets = [0, 384], sizes = [8, 128], strides = [1, 1]} : vector<8x512xf32> to vector<8x128xf32>
    %597 = arith.negf %596 : vector<8x128xf32>
    %598 = math.exp %597 : vector<8x128xf32>
    %cst_128 = arith.constant 1.000000e+00 : f32
    %599 = vector.broadcast %cst_128 : f32 to vector<8x128xf32>
    %600 = arith.addf %599, %598 : vector<8x128xf32>
    %601 = arith.divf %599, %600 : vector<8x128xf32>
    %602 = arith.mulf %593, %542 : vector<8x128xf32>
    %603 = arith.mulf %587, %595 : vector<8x128xf32>
    %604 = arith.addf %602, %603 : vector<8x128xf32>
    %605 = math.tanh %604 : vector<8x128xf32>
    %606 = arith.mulf %601, %605 : vector<8x128xf32>
    %607 = arith.truncf %604 : vector<8x128xf32> to vector<8x128xbf16>
    %c0_129 = arith.constant 0 : index
    %c0_130 = arith.constant 0 : index
    %608 = vector.load %arg4[%c0_129, %c0_130] : memref<128x128xbf16, #tpu.memory_space<vmem>>, vector<128x128xbf16>
    %cst_131 = arith.constant dense<0.000000e+00> : vector<8x128xf32>
    %609 = tpu.matmul %607, %608, %cst_131 {dimension_numbers = #tpu.dot_dimension_numbers<[1], [0], [0], [1], [0, 0, 1, 1], [], []>} : vector<8x128xbf16>, vector<128x128xbf16>, vector<8x128xf32> -> vector<8x128xf32>
    %610 = arith.addf %609, %11 : vector<8x128xf32>
    %611 = vector.broadcast %569 : vector<8x1xf32> to vector<8x128xf32>
    %612 = arith.mulf %611, %8 : vector<8x128xf32>
    %613 = arith.addf %610, %612 : vector<8x128xf32>
    %614 = arith.negf %613 : vector<8x128xf32>
    %615 = math.exp %614 : vector<8x128xf32>
    %cst_132 = arith.constant 1.000000e+00 : f32
    %616 = vector.broadcast %cst_132 : f32 to vector<8x128xf32>
    %617 = arith.addf %616, %615 : vector<8x128xf32>
    %618 = arith.divf %616, %617 : vector<8x128xf32>
    %619 = vector.extract_strided_slice %618 {offsets = [0, 0], sizes = [8, 1], strides = [1, 1]} : vector<8x128xf32> to vector<8x1xf32>
    %620 = vector.extract_strided_slice %618 {offsets = [0, 1], sizes = [8, 1], strides = [1, 1]} : vector<8x128xf32> to vector<8x1xf32>
    %621 = vector.extract_strided_slice %618 {offsets = [0, 2], sizes = [8, 1], strides = [1, 1]} : vector<8x128xf32> to vector<8x1xf32>
    %cst_133 = arith.constant 2.000000e+00 : f32
    %622 = vector.broadcast %cst_133 : f32 to vector<8x1xf32>
    %623 = arith.mulf %622, %621 : vector<8x1xf32>
    %cst_134 = arith.constant 1.000000e+00 : f32
    %624 = vector.broadcast %cst_134 : f32 to vector<8x1xf32>
    %625 = arith.subf %623, %624 : vector<8x1xf32>
    %626 = vector.extract_strided_slice %618 {offsets = [0, 3], sizes = [8, 1], strides = [1, 1]} : vector<8x128xf32> to vector<8x1xf32>
    %627 = arith.mulf %620, %567 : vector<8x1xf32>
    %628 = arith.mulf %619, %625 : vector<8x1xf32>
    %629 = arith.addf %627, %628 : vector<8x1xf32>
    %630 = math.tanh %629 : vector<8x1xf32>
    %631 = arith.mulf %626, %630 : vector<8x1xf32>
    %c9_i32 = arith.constant 9 : i32
    %632 = vector.broadcast %c9_i32 : i32 to vector<8x128xi32>
    %633 = arith.cmpi eq, %12, %632 : vector<8x128xi32>
    %634 = vector.shape_cast %629 : vector<8x1xf32> to vector<8x1xf32>
    %635 = vector.broadcast %634 : vector<8x1xf32> to vector<8x128xf32>
    %636 = arith.select %633, %635, %574 : vector<8x128xi1>, vector<8x128xf32>
    %637 = vector.broadcast %629 : vector<8x1xf32> to vector<8x512xf32>
    %638 = arith.mulf %637, %2 : vector<8x512xf32>
    %639 = arith.addf %638, %5 : vector<8x512xf32>
    %640 = arith.truncf %606 : vector<8x128xf32> to vector<8x128xbf16>
    %c0_135 = arith.constant 0 : index
    %c0_136 = arith.constant 0 : index
    %641 = vector.load %arg2[%c0_135, %c0_136] : memref<128x512xbf16, #tpu.memory_space<vmem>>, vector<128x512xbf16>
    %cst_137 = arith.constant dense<0.000000e+00> : vector<8x512xf32>
    %642 = tpu.matmul %640, %641, %cst_137 {dimension_numbers = #tpu.dot_dimension_numbers<[1], [0], [0], [1], [0, 0, 1, 1], [], []>} : vector<8x128xbf16>, vector<128x512xbf16>, vector<8x512xf32> -> vector<8x512xf32>
    %643 = arith.addf %639, %642 : vector<8x512xf32>
    %644 = vector.extract_strided_slice %643 {offsets = [0, 0], sizes = [8, 128], strides = [1, 1]} : vector<8x512xf32> to vector<8x128xf32>
    %645 = arith.negf %644 : vector<8x128xf32>
    %646 = math.exp %645 : vector<8x128xf32>
    %cst_138 = arith.constant 1.000000e+00 : f32
    %647 = vector.broadcast %cst_138 : f32 to vector<8x128xf32>
    %648 = arith.addf %647, %646 : vector<8x128xf32>
    %649 = arith.divf %647, %648 : vector<8x128xf32>
    %650 = vector.extract_strided_slice %643 {offsets = [0, 128], sizes = [8, 128], strides = [1, 1]} : vector<8x512xf32> to vector<8x128xf32>
    %651 = arith.negf %650 : vector<8x128xf32>
    %652 = math.exp %651 : vector<8x128xf32>
    %cst_139 = arith.constant 1.000000e+00 : f32
    %653 = vector.broadcast %cst_139 : f32 to vector<8x128xf32>
    %654 = arith.addf %653, %652 : vector<8x128xf32>
    %655 = arith.divf %653, %654 : vector<8x128xf32>
    %656 = vector.extract_strided_slice %643 {offsets = [0, 256], sizes = [8, 128], strides = [1, 1]} : vector<8x512xf32> to vector<8x128xf32>
    %657 = math.tanh %656 : vector<8x128xf32>
    %658 = vector.extract_strided_slice %643 {offsets = [0, 384], sizes = [8, 128], strides = [1, 1]} : vector<8x512xf32> to vector<8x128xf32>
    %659 = arith.negf %658 : vector<8x128xf32>
    %660 = math.exp %659 : vector<8x128xf32>
    %cst_140 = arith.constant 1.000000e+00 : f32
    %661 = vector.broadcast %cst_140 : f32 to vector<8x128xf32>
    %662 = arith.addf %661, %660 : vector<8x128xf32>
    %663 = arith.divf %661, %662 : vector<8x128xf32>
    %664 = arith.mulf %655, %604 : vector<8x128xf32>
    %665 = arith.mulf %649, %657 : vector<8x128xf32>
    %666 = arith.addf %664, %665 : vector<8x128xf32>
    %667 = math.tanh %666 : vector<8x128xf32>
    %668 = arith.mulf %663, %667 : vector<8x128xf32>
    %669 = arith.truncf %666 : vector<8x128xf32> to vector<8x128xbf16>
    %c0_141 = arith.constant 0 : index
    %c0_142 = arith.constant 0 : index
    %670 = vector.load %arg4[%c0_141, %c0_142] : memref<128x128xbf16, #tpu.memory_space<vmem>>, vector<128x128xbf16>
    %cst_143 = arith.constant dense<0.000000e+00> : vector<8x128xf32>
    %671 = tpu.matmul %669, %670, %cst_143 {dimension_numbers = #tpu.dot_dimension_numbers<[1], [0], [0], [1], [0, 0, 1, 1], [], []>} : vector<8x128xbf16>, vector<128x128xbf16>, vector<8x128xf32> -> vector<8x128xf32>
    %672 = arith.addf %671, %11 : vector<8x128xf32>
    %673 = vector.broadcast %631 : vector<8x1xf32> to vector<8x128xf32>
    %674 = arith.mulf %673, %8 : vector<8x128xf32>
    %675 = arith.addf %672, %674 : vector<8x128xf32>
    %676 = arith.negf %675 : vector<8x128xf32>
    %677 = math.exp %676 : vector<8x128xf32>
    %cst_144 = arith.constant 1.000000e+00 : f32
    %678 = vector.broadcast %cst_144 : f32 to vector<8x128xf32>
    %679 = arith.addf %678, %677 : vector<8x128xf32>
    %680 = arith.divf %678, %679 : vector<8x128xf32>
    %681 = vector.extract_strided_slice %680 {offsets = [0, 0], sizes = [8, 1], strides = [1, 1]} : vector<8x128xf32> to vector<8x1xf32>
    %682 = vector.extract_strided_slice %680 {offsets = [0, 1], sizes = [8, 1], strides = [1, 1]} : vector<8x128xf32> to vector<8x1xf32>
    %683 = vector.extract_strided_slice %680 {offsets = [0, 2], sizes = [8, 1], strides = [1, 1]} : vector<8x128xf32> to vector<8x1xf32>
    %cst_145 = arith.constant 2.000000e+00 : f32
    %684 = vector.broadcast %cst_145 : f32 to vector<8x1xf32>
    %685 = arith.mulf %684, %683 : vector<8x1xf32>
    %cst_146 = arith.constant 1.000000e+00 : f32
    %686 = vector.broadcast %cst_146 : f32 to vector<8x1xf32>
    %687 = arith.subf %685, %686 : vector<8x1xf32>
    %688 = vector.extract_strided_slice %680 {offsets = [0, 3], sizes = [8, 1], strides = [1, 1]} : vector<8x128xf32> to vector<8x1xf32>
    %689 = arith.mulf %682, %629 : vector<8x1xf32>
    %690 = arith.mulf %681, %687 : vector<8x1xf32>
    %691 = arith.addf %689, %690 : vector<8x1xf32>
    %692 = math.tanh %691 : vector<8x1xf32>
    %693 = arith.mulf %688, %692 : vector<8x1xf32>
    %c10_i32 = arith.constant 10 : i32
    %694 = vector.broadcast %c10_i32 : i32 to vector<8x128xi32>
    %695 = arith.cmpi eq, %12, %694 : vector<8x128xi32>
    %696 = vector.shape_cast %691 : vector<8x1xf32> to vector<8x1xf32>
    %697 = vector.broadcast %696 : vector<8x1xf32> to vector<8x128xf32>
    %698 = arith.select %695, %697, %636 : vector<8x128xi1>, vector<8x128xf32>
    %699 = vector.broadcast %691 : vector<8x1xf32> to vector<8x512xf32>
    %700 = arith.mulf %699, %2 : vector<8x512xf32>
    %701 = arith.addf %700, %5 : vector<8x512xf32>
    %702 = arith.truncf %668 : vector<8x128xf32> to vector<8x128xbf16>
    %c0_147 = arith.constant 0 : index
    %c0_148 = arith.constant 0 : index
    %703 = vector.load %arg2[%c0_147, %c0_148] : memref<128x512xbf16, #tpu.memory_space<vmem>>, vector<128x512xbf16>
    %cst_149 = arith.constant dense<0.000000e+00> : vector<8x512xf32>
    %704 = tpu.matmul %702, %703, %cst_149 {dimension_numbers = #tpu.dot_dimension_numbers<[1], [0], [0], [1], [0, 0, 1, 1], [], []>} : vector<8x128xbf16>, vector<128x512xbf16>, vector<8x512xf32> -> vector<8x512xf32>
    %705 = arith.addf %701, %704 : vector<8x512xf32>
    %706 = vector.extract_strided_slice %705 {offsets = [0, 0], sizes = [8, 128], strides = [1, 1]} : vector<8x512xf32> to vector<8x128xf32>
    %707 = arith.negf %706 : vector<8x128xf32>
    %708 = math.exp %707 : vector<8x128xf32>
    %cst_150 = arith.constant 1.000000e+00 : f32
    %709 = vector.broadcast %cst_150 : f32 to vector<8x128xf32>
    %710 = arith.addf %709, %708 : vector<8x128xf32>
    %711 = arith.divf %709, %710 : vector<8x128xf32>
    %712 = vector.extract_strided_slice %705 {offsets = [0, 128], sizes = [8, 128], strides = [1, 1]} : vector<8x512xf32> to vector<8x128xf32>
    %713 = arith.negf %712 : vector<8x128xf32>
    %714 = math.exp %713 : vector<8x128xf32>
    %cst_151 = arith.constant 1.000000e+00 : f32
    %715 = vector.broadcast %cst_151 : f32 to vector<8x128xf32>
    %716 = arith.addf %715, %714 : vector<8x128xf32>
    %717 = arith.divf %715, %716 : vector<8x128xf32>
    %718 = vector.extract_strided_slice %705 {offsets = [0, 256], sizes = [8, 128], strides = [1, 1]} : vector<8x512xf32> to vector<8x128xf32>
    %719 = math.tanh %718 : vector<8x128xf32>
    %720 = arith.mulf %717, %666 : vector<8x128xf32>
    %721 = arith.mulf %711, %719 : vector<8x128xf32>
    %722 = arith.addf %720, %721 : vector<8x128xf32>
    %723 = arith.truncf %722 : vector<8x128xf32> to vector<8x128xbf16>
    %c0_152 = arith.constant 0 : index
    %c0_153 = arith.constant 0 : index
    %724 = vector.load %arg4[%c0_152, %c0_153] : memref<128x128xbf16, #tpu.memory_space<vmem>>, vector<128x128xbf16>
    %cst_154 = arith.constant dense<0.000000e+00> : vector<8x128xf32>
    %725 = tpu.matmul %723, %724, %cst_154 {dimension_numbers = #tpu.dot_dimension_numbers<[1], [0], [0], [1], [0, 0, 1, 1], [], []>} : vector<8x128xbf16>, vector<128x128xbf16>, vector<8x128xf32> -> vector<8x128xf32>
    %726 = arith.addf %725, %11 : vector<8x128xf32>
    %727 = vector.broadcast %693 : vector<8x1xf32> to vector<8x128xf32>
    %728 = arith.mulf %727, %8 : vector<8x128xf32>
    %729 = arith.addf %726, %728 : vector<8x128xf32>
    %730 = arith.negf %729 : vector<8x128xf32>
    %731 = math.exp %730 : vector<8x128xf32>
    %cst_155 = arith.constant 1.000000e+00 : f32
    %732 = vector.broadcast %cst_155 : f32 to vector<8x128xf32>
    %733 = arith.addf %732, %731 : vector<8x128xf32>
    %734 = arith.divf %732, %733 : vector<8x128xf32>
    %735 = vector.extract_strided_slice %734 {offsets = [0, 0], sizes = [8, 1], strides = [1, 1]} : vector<8x128xf32> to vector<8x1xf32>
    %736 = vector.extract_strided_slice %734 {offsets = [0, 1], sizes = [8, 1], strides = [1, 1]} : vector<8x128xf32> to vector<8x1xf32>
    %737 = vector.extract_strided_slice %734 {offsets = [0, 2], sizes = [8, 1], strides = [1, 1]} : vector<8x128xf32> to vector<8x1xf32>
    %cst_156 = arith.constant 2.000000e+00 : f32
    %738 = vector.broadcast %cst_156 : f32 to vector<8x1xf32>
    %739 = arith.mulf %738, %737 : vector<8x1xf32>
    %cst_157 = arith.constant 1.000000e+00 : f32
    %740 = vector.broadcast %cst_157 : f32 to vector<8x1xf32>
    %741 = arith.subf %739, %740 : vector<8x1xf32>
    %742 = arith.mulf %736, %691 : vector<8x1xf32>
    %743 = arith.mulf %735, %741 : vector<8x1xf32>
    %744 = arith.addf %742, %743 : vector<8x1xf32>
    %c11_i32 = arith.constant 11 : i32
    %745 = vector.broadcast %c11_i32 : i32 to vector<8x128xi32>
    %746 = arith.cmpi eq, %12, %745 : vector<8x128xi32>
    %747 = vector.shape_cast %744 : vector<8x1xf32> to vector<8x1xf32>
    %748 = vector.broadcast %747 : vector<8x1xf32> to vector<8x128xf32>
    %749 = arith.select %746, %748, %698 : vector<8x128xi1>, vector<8x128xf32>
    %c0_158 = arith.constant 0 : index
    %c0_159 = arith.constant 0 : index
    %750 = vector.load %arg7[%c0_158, %c0_159] : memref<8x128xf32, #tpu.memory_space<vmem>>, vector<8x128xf32>
    tpu.vector_store %arg7[%c0_158, %c0_159], %749 {strides = array<i32>} : memref<8x128xf32, #tpu.memory_space<vmem>>, vector<8x128xf32>,
    return
  }
}

</mosaic_0001>

<llo_original>
// kernel: lstm_model_forward.1
$region0: #{lstm_model_forward.1}
  #allocation0 [shape = 'u32[]', space=smem, size = 0x4, offset = 0x4, fixed_abs, tag = 'smem constant byte address 0x4 - core index']
  #allocation1 [shape = 'u32[144,128]{1,0:T(1,128)}', space=vmem, size = 0x12000, scoped, tag = 'internal scratch']
  %s0 = inlined_call_operand.vmem [shape: f32[8,8], index: 0, kind: input, shape index: {}]
  %s1 = inlined_call_operand.vmem [shape: f32[1,512], index: 1, kind: input, shape index: {}]
  %s2 = inlined_call_operand.hbm [shape: bf16[128,512], index: 2, kind: input, shape index: {}]
  %s3 = inlined_call_operand.vmem [shape: f32[1,512], index: 3, kind: input, shape index: {}]
  %s4 = inlined_call_operand.hbm [shape: bf16[128,128], index: 4, kind: input, shape index: {}]
  %s5 = inlined_call_operand.vmem [shape: f32[1,128], index: 5, kind: input, shape index: {}]
  %s6 = inlined_call_operand.vmem [shape: f32[1,128], index: 6, kind: input, shape index: {}]
  %s7 = inlined_call_operand.vmem [shape: f32[8,128], index: 7, kind: output, shape index: {}]
  %s8 = sld [smem:[#allocation0]]
  $region46: #{lstm_model_forward.1} parent=0
    _
  %s10 = ssub.s32 1, %s8
  %s11 = scalar_select 0, %s10, %s8
  $region1: #{lstm_model_forward.1} parent=0
    #allocation2 [shape = 'u8[131072]{0}', space=vmem, size = 0x20000, scoped, tag = 'input window, operand 2, single buffered']
    #allocation3 [shape = 's32[1]{0}', space=sflag, size = 0x4, scoped, tag = 'scoped memory for lstm_model_forward.1']
    #allocation4 [shape = 'u8[32768]{0}', space=vmem, size = 0x8000, scoped, tag = 'input window, operand 4, single buffered']
    #allocation5 [shape = 's32[1]{0}', space=sflag, size = 0x4, scoped, tag = 'scoped memory for lstm_model_forward.1']
    %12 = vsyncpa [#allocation3], 0
    %13 = vsyncpa [#allocation5], 0
    // Predicated region
    $region2: #{lstm_model_forward.1} parent=1 // pred_check
      _
    $region3: #{lstm_model_forward.1} parent=1 // pred_check_branch
      %15 = sbr.rel (0) target = $region5
    $region4: #{lstm_model_forward.1} parent=1 // pred_region
      _
    $region5: #{lstm_model_forward.1} parent=1 // pred_fallthru
      _
    // Predicated region
    $region6: #{lstm_model_forward.1} parent=1 // pred_check
      _
    $region7: #{lstm_model_forward.1} parent=1 // pred_check_branch
      %17 = sbr.rel (0) target = $region9
    $region8: #{lstm_model_forward.1} parent=1 // pred_region
      _
    $region9: #{lstm_model_forward.1} parent=1 // pred_fallthru
      _
    // Predicated region
    $region10: #{lstm_model_forward.1} parent=1 // pred_check
      _
    $region11: #{lstm_model_forward.1} parent=1 // pred_check_branch
      %19 = sbr.rel (0) target = $region13
    $region12: #{lstm_model_forward.1} parent=1 // pred_region
      %s21 = ssub.s32 4096, 4096
      %22 = vsyncadd [#allocation3], %s21
      %s23 = sshll.u32 [#allocation2], 4
      %s24 = int_to_ptr.vmem [resolvable:$true] %s23
      %29 = dma.hbm_to_vmem [thread:$0]  %s2, 4096, %s24, [#allocation3], 256, 256, 16
    $region13: #{lstm_model_forward.1} parent=1 // pred_fallthru
      _
    // Predicated region
    $region14: #{lstm_model_forward.1} parent=1 // pred_check
      _
    $region15: #{lstm_model_forward.1} parent=1 // pred_check_branch
      %31 = sbr.rel (0) target = $region17
    $region16: #{lstm_model_forward.1} parent=1 // pred_region
      _
    $region17: #{lstm_model_forward.1} parent=1 // pred_fallthru
      _
    // Predicated region
    $region18: #{lstm_model_forward.1} parent=1 // pred_check
      _
    $region19: #{lstm_model_forward.1} parent=1 // pred_check_branch
      %33 = sbr.rel (0) target = $region21
    $region20: #{lstm_model_forward.1} parent=1 // pred_region
      %s35 = ssub.s32 1024, 1024
      %36 = vsyncadd [#allocation5], %s35
      %s37 = sshll.u32 [#allocation4], 4
      %s38 = int_to_ptr.vmem [resolvable:$true] %s37
      %43 = dma.hbm_to_vmem [thread:$0]  %s4, 1024, %s38, [#allocation5], 64, 64, 4
    $region21: #{lstm_model_forward.1} parent=1 // pred_fallthru
      _
    // Predicated region
    $region22: #{lstm_model_forward.1} parent=1 // pred_check
      _
    $region23: #{lstm_model_forward.1} parent=1 // pred_check_branch
      %45 = sbr.rel (0) target = $region25
    $region24: #{lstm_model_forward.1} parent=1 // pred_region
      _
    $region25: #{lstm_model_forward.1} parent=1 // pred_fallthru
      _
    // Predicated region
    $region26: #{lstm_model_forward.1} parent=1 // pred_check
      _
    $region27: #{lstm_model_forward.1} parent=1 // pred_check_branch
      %47 = sbr.rel (0) target = $region29
    $region28: #{lstm_model_forward.1} parent=1 // pred_region
      _
    $region29: #{lstm_model_forward.1} parent=1 // pred_fallthru
      _
    // Predicated region
    $region30: #{lstm_model_forward.1} parent=1 // pred_check
      _
    $region31: #{lstm_model_forward.1} parent=1 // pred_check_branch
      %49 = sbr.rel (0) target = $region33
    $region32: #{lstm_model_forward.1} parent=1 // pred_region
      %50 = dma.done [#allocation3], 4096
    $region33: #{lstm_model_forward.1} parent=1 // pred_fallthru
      _
    // Predicated region
    $region34: #{lstm_model_forward.1} parent=1 // pred_check
      _
    $region35: #{lstm_model_forward.1} parent=1 // pred_check_branch
      %52 = sbr.rel (0) target = $region37
    $region36: #{lstm_model_forward.1} parent=1 // pred_region
      %53 = dma.done [#allocation5], 1024
    $region37: #{lstm_model_forward.1} parent=1 // pred_fallthru
      _
    %v55 = vld [vmem:[%s1] sm:$0xf]
    %v57 = vlaneseq
    %v58 = vshrl.u32 %v57, 7
    %v59 = vsub.s32 0, %v58
    %v60 = vrot.slane %v55, %v59
    %v61 = vlaneseq
    %v62 = vshrl.u32 %v61, 7
    %v63 = vsub.s32 1, %v62
    %v64 = vrot.slane %v55, %v63
    %v65 = vlaneseq
    %v66 = vshrl.u32 %v65, 7
    %v67 = vsub.s32 2, %v66
    %v68 = vrot.slane %v55, %v67
    %v69 = vlaneseq
    %v70 = vshrl.u32 %v69, 7
    %v71 = vsub.s32 3, %v70
    %v72 = vrot.slane %v55, %v71
    %v77 = vld [vmem:[%s3] sm:$0xf]
    %v79 = vlaneseq
    %v80 = vshrl.u32 %v79, 7
    %v81 = vsub.s32 0, %v80
    %v82 = vrot.slane %v77, %v81
    %v83 = vlaneseq
    %v84 = vshrl.u32 %v83, 7
    %v85 = vsub.s32 1, %v84
    %v86 = vrot.slane %v77, %v85
    %v87 = vlaneseq
    %v88 = vshrl.u32 %v87, 7
    %v89 = vsub.s32 2, %v88
    %v90 = vrot.slane %v77, %v89
    %v91 = vlaneseq
    %v92 = vshrl.u32 %v91, 7
    %v93 = vsub.s32 3, %v92
    %v94 = vrot.slane %v77, %v93
    %v99 = vld [vmem:[%s5] sm:$0x1]
    %v101 = vlaneseq
    %v102 = vshrl.u32 %v101, 7
    %v103 = vsub.s32 0, %v102
    %v104 = vrot.slane %v99, %v103
    %v106 = vld [vmem:[%s6] sm:$0x1]
    %v108 = vlaneseq
    %v109 = vshrl.u32 %v108, 7
    %v110 = vsub.s32 0, %v109
    %v111 = vrot.slane %v106, %v110
    %v113 = vlaneseq
    %v114 = vand.u32 %v113, 127
    %v115 = vld [vmem:[%s0] sm:$0xff]
    %117 = vset.pattern.permute.xlu0 0
    %118 = vperm.xlu0 %117, %v115
    %v119 = vpop.permute.xlu0 %118
    %v121 = vmul.f32 %v119, %v60
    %v122 = vmul.f32 %v119, %v64
    %v123 = vmul.f32 %v119, %v68
    %v124 = vmul.f32 %v119, %v72
    %v125 = vadd.f32 %v121, %v82
    %v126 = vadd.f32 %v122, %v86
    %v127 = vadd.f32 %v123, %v90
    %v128 = vadd.f32 %v124, %v94
    %v129 = vxor.u32 %v125, 2147483648
    %v130 = vmul.f32 %v129, 1.442695
    %v131 = vpow.pop %v130
    %v132 = vadd.f32 %v131, 1.0
    %v133 = vrcp.pop %v132
    %v134 = vmul.f32 1.0, %v133
    %v135 = vxor.u32 %v126, 2147483648
    %v136 = vmul.f32 %v135, 1.442695
    %v137 = vpow.pop %v136
    %v138 = vadd.f32 %v137, 1.0
    %v139 = vrcp.pop %v138
    %v140 = vmul.f32 1.0, %v139
    %v141 = vtanh.pop %v127
    %v142 = vxor.u32 %v128, 2147483648
    %v143 = vmul.f32 %v142, 1.442695
    %v144 = vpow.pop %v143
    %v145 = vadd.f32 %v144, 1.0
    %v146 = vrcp.pop %v145
    %v147 = vmul.f32 1.0, %v146
    %v148 = vmul.f32 %v140, 0.0
    %v149 = vmul.f32 %v134, %v141
    %v150 = vadd.f32 %v148, %v149
    %v151 = vtanh.pop %v150
    %v152 = vmul.f32 %v147, %v151
    %v153 = vpack.c.bf16 %v150, %v150
    %v154 = vld [vmem:[#allocation4] sm:$0xf]
    %v155 = vld [vmem:[#allocation4 + $0x4] sm:$0xf]
    %v156 = vld [vmem:[#allocation4 + $0x8] sm:$0xf]
    %v157 = vld [vmem:[#allocation4 + $0xc] sm:$0xf]
    %v158 = vld [vmem:[#allocation4 + $0x10] sm:$0xf]
    %v159 = vld [vmem:[#allocation4 + $0x14] sm:$0xf]
    %v160 = vld [vmem:[#allocation4 + $0x18] sm:$0xf]
    %v161 = vld [vmem:[#allocation4 + $0x1c] sm:$0xf]
    %v162 = vld [vmem:[#allocation4 + $0x20] sm:$0xf]
    %v163 = vld [vmem:[#allocation4 + $0x24] sm:$0xf]
    %v164 = vld [vmem:[#allocation4 + $0x28] sm:$0xf]
    %v165 = vld [vmem:[#allocation4 + $0x2c] sm:$0xf]
    %v166 = vld [vmem:[#allocation4 + $0x30] sm:$0xf]
    %v167 = vld [vmem:[#allocation4 + $0x34] sm:$0xf]
    %v168 = vld [vmem:[#allocation4 + $0x38] sm:$0xf]
    %v169 = vld [vmem:[#allocation4 + $0x3c] sm:$0xf]
    %v186 = vunpack.c.l.b16 %v154
    %v187 = vunpack.c.l.b16 %v155
    %v188 = vunpack.c.l.b16 %v156
    %v189 = vunpack.c.l.b16 %v157
    %v190 = vunpack.c.l.b16 %v158
    %v191 = vunpack.c.l.b16 %v159
    %v192 = vunpack.c.l.b16 %v160
    %v193 = vunpack.c.l.b16 %v161
    %v194 = vunpack.c.l.b16 %v162
    %v195 = vunpack.c.l.b16 %v163
    %v196 = vunpack.c.l.b16 %v164
    %v197 = vunpack.c.l.b16 %v165
    %v198 = vunpack.c.l.b16 %v166
    %v199 = vunpack.c.l.b16 %v167
    %v200 = vunpack.c.l.b16 %v168
    %v201 = vunpack.c.l.b16 %v169
    %v202 = vpack.c.b16 %v187, %v186
    %v203 = vpack.c.b16 %v189, %v188
    %v204 = vpack.c.b16 %v191, %v190
    %v205 = vpack.c.b16 %v193, %v192
    %v206 = vpack.c.b16 %v195, %v194
    %v207 = vpack.c.b16 %v197, %v196
    %v208 = vpack.c.b16 %v199, %v198
    %v209 = vpack.c.b16 %v201, %v200
    %218 = vmatprep.subr.bf16.mxu0 0
    %219 = vmatpush1.bf16.msra.mxu0 %v209
    %220 = vmatprep.subr.bf16.mxu0 0
    %221 = vmatpush1.bf16.msra.mxu0 %v208
    %222 = vmatprep.subr.bf16.mxu0 0
    %223 = vmatpush1.bf16.msra.mxu0 %v207
    %224 = vmatprep.subr.bf16.mxu0 0
    %225 = vmatpush1.bf16.msra.mxu0 %v206
    %226 = vmatprep.subr.bf16.mxu0 0
    %227 = vmatpush1.bf16.msra.mxu0 %v205
    %228 = vmatprep.subr.bf16.mxu0 0
    %229 = vmatpush1.bf16.msra.mxu0 %v204
    %230 = vmatprep.subr.bf16.mxu0 0
    %231 = vmatpush1.bf16.msra.mxu0 %v203
    %232 = vmatprep.subr.bf16.mxu0 0
    %233 = vmatpush1.bf16.msra.mxu0 %v202
    %234 = vmatprep.subr.bf16.mxu0 0
    %235 = vmatpush2.bf16.msra.mxu0 0
    %236 = vmatprep.subr.bf16.mxu0 0
    %237 = vmatpush2.bf16.msra.mxu0 0
    %238 = vmatprep.subr.bf16.mxu0 0
    %239 = vmatpush2.bf16.msra.mxu0 0
    %240 = vmatprep.subr.bf16.mxu0 0
    %241 = vmatpush2.bf16.msra.mxu0 0
    %242 = vmatprep.subr.bf16.mxu0 0
    %243 = vmatpush2.bf16.msra.mxu0 0
    %244 = vmatprep.subr.bf16.mxu0 0
    %245 = vmatpush2.bf16.msra.mxu0 0
    %246 = vmatprep.subr.bf16.mxu0 0
    %247 = vmatpush2.bf16.msra.mxu0 0
    %248 = vmatprep.subr.bf16.mxu0 0
    %249 = vmatpush2.bf16.msra.mxu0 0
    %250 = vmatprep.mubr.bf16.mxu0 0
    %251 = vmatmul.mubr.bf16.gmra.mxu0 %v153
    %v252 = vpop.f32.mrf.mxu0
    %v253 = vadd.f32 %v111, %v252
    %v254 = vpop.f32.mrf.mxu0
    %v255 = vpop.f32.mrf.mxu0
    %v256 = vpop.f32.mrf.mxu0
    %257 = vdwg.mxu0
    %v258 = vxor.u32 %v253, 2147483648
    %v259 = vmul.f32 %v258, 1.442695
    %v260 = vpow.pop %v259
    %v261 = vadd.f32 %v260, 1.0
    %v262 = vrcp.pop %v261
    %v263 = vmul.f32 1.0, %v262
    %v264 = vmul.f32 %v263, 2.0
    %v265 = vsub.f32 %v264, 1.0
    %v266 = vmul.f32 %v263, 0.0
    %268 = vrot.lane.b32.xlu0 %v265, 126
    %v269 = vpop.permute.xlu0 %268
    %v271 = vmul.f32 %v263, %v269
    %273 = vrot.lane.b32.xlu0 %v271, 1
    %v274 = vpop.permute.xlu0 %273
    %v276 = vadd.f32 %v266, %v274
    %v277 = vtanh.pop %v276
    %279 = vrot.lane.b32.xlu0 %v277, 2
    %v280 = vpop.permute.xlu0 %279
    %v282 = vmul.f32 %v263, %v280
    %vm283 = vcmp.eq.s32.totalorder %v114, 0
    %285 = vset.pattern.permute.xlu0 1
    %286 = vperm.xlu0 %285, %v276
    %v287 = vpop.permute.xlu0 %286
    %v289 = vsel %vm283, %v287, 0.0
    %290 = vset.pattern.permute.xlu0 1
    %291 = vperm.xlu0 %290, %v115
    %v292 = vpop.permute.xlu0 %291
    %v294 = vmul.f32 %v292, %v60
    %v295 = vmul.f32 %v292, %v64
    %v296 = vmul.f32 %v292, %v68
    %v297 = vmul.f32 %v292, %v72
    %v298 = vadd.f32 %v294, %v82
    %v299 = vadd.f32 %v295, %v86
    %v300 = vadd.f32 %v296, %v90
    %v301 = vadd.f32 %v297, %v94
    %v302 = vpack.c.bf16 %v152, %v152
    %v303 = vld [vmem:[#allocation2] sm:$0xff]
    %v304 = vld [vmem:[#allocation2 + $0x8] sm:$0xff]
    %v305 = vld [vmem:[#allocation2 + $0x10] sm:$0xff]
    %v306 = vld [vmem:[#allocation2 + $0x18] sm:$0xff]
    %v307 = vld [vmem:[#allocation2 + $0x20] sm:$0xff]
    %v308 = vld [vmem:[#allocation2 + $0x28] sm:$0xff]
    %v309 = vld [vmem:[#allocation2 + $0x30] sm:$0xff]
    %v310 = vld [vmem:[#allocation2 + $0x38] sm:$0xff]
    %v311 = vld [vmem:[#allocation2 + $0x40] sm:$0xff]
    %v312 = vld [vmem:[#allocation2 + $0x48] sm:$0xff]
    %v313 = vld [vmem:[#allocation2 + $0x50] sm:$0xff]
    %v314 = vld [vmem:[#allocation2 + $0x58] sm:$0xff]
    %v315 = vld [vmem:[#allocation2 + $0x60] sm:$0xff]
    %v316 = vld [vmem:[#allocation2 + $0x68] sm:$0xff]
    %v317 = vld [vmem:[#allocation2 + $0x70] sm:$0xff]
    %v318 = vld [vmem:[#allocation2 + $0x78] sm:$0xff]
    %v319 = vld [vmem:[#allocation2 + $0x80] sm:$0xff]
    %v320 = vld [vmem:[#allocation2 + $0x88] sm:$0xff]
    %v321 = vld [vmem:[#allocation2 + $0x90] sm:$0xff]
    %v322 = vld [vmem:[#allocation2 + $0x98] sm:$0xff]
    %v323 = vld [vmem:[#allocation2 + $0xa0] sm:$0xff]
    %v324 = vld [vmem:[#allocation2 + $0xa8] sm:$0xff]
    %v325 = vld [vmem:[#allocation2 + $0xb0] sm:$0xff]
    %v326 = vld [vmem:[#allocation2 + $0xb8] sm:$0xff]
    %v327 = vld [vmem:[#allocation2 + $0xc0] sm:$0xff]
    %v328 = vld [vmem:[#allocation2 + $0xc8] sm:$0xff]
    %v329 = vld [vmem:[#allocation2 + $0xd0] sm:$0xff]
    %v330 = vld [vmem:[#allocation2 + $0xd8] sm:$0xff]
    %v331 = vld [vmem:[#allocation2 + $0xe0] sm:$0xff]
    %v332 = vld [vmem:[#allocation2 + $0xe8] sm:$0xff]
    %v333 = vld [vmem:[#allocation2 + $0xf0] sm:$0xff]
    %v334 = vld [vmem:[#allocation2 + $0xf8] sm:$0xff]
    %v367 = vunpack.c.l.b16 %v303
    %v368 = vunpack.c.h.b16 %v303
    %v369 = vunpack.c.l.b16 %v304
    %v370 = vunpack.c.h.b16 %v304
    %v371 = vunpack.c.l.b16 %v305
    %v372 = vunpack.c.h.b16 %v305
    %v373 = vunpack.c.l.b16 %v306
    %v374 = vunpack.c.h.b16 %v306
    %v375 = vunpack.c.l.b16 %v307
    %v376 = vunpack.c.h.b16 %v307
    %v377 = vunpack.c.l.b16 %v308
    %v378 = vunpack.c.h.b16 %v308
    %v379 = vunpack.c.l.b16 %v309
    %v380 = vunpack.c.h.b16 %v309
    %v381 = vunpack.c.l.b16 %v310
    %v382 = vunpack.c.h.b16 %v310
    %v383 = vunpack.c.l.b16 %v311
    %v384 = vunpack.c.h.b16 %v311
    %v385 = vunpack.c.l.b16 %v312
    %v386 = vunpack.c.h.b16 %v312
    %v387 = vunpack.c.l.b16 %v313
    %v388 = vunpack.c.h.b16 %v313
    %v389 = vunpack.c.l.b16 %v314
    %v390 = vunpack.c.h.b16 %v314
    %v391 = vunpack.c.l.b16 %v315
    %v392 = vunpack.c.h.b16 %v315
    %v393 = vunpack.c.l.b16 %v316
    %v394 = vunpack.c.h.b16 %v316
    %v395 = vunpack.c.l.b16 %v317
    %v396 = vunpack.c.h.b16 %v317
    %v397 = vunpack.c.l.b16 %v318
    %v398 = vunpack.c.h.b16 %v318
    %v399 = vunpack.c.l.b16 %v319
    %v400 = vunpack.c.h.b16 %v319
    %v401 = vunpack.c.l.b16 %v320
    %v402 = vunpack.c.h.b16 %v320
    %v403 = vunpack.c.l.b16 %v321
    %v404 = vunpack.c.h.b16 %v321
    %v405 = vunpack.c.l.b16 %v322
    %v406 = vunpack.c.h.b16 %v322
    %v407 = vunpack.c.l.b16 %v323
    %v408 = vunpack.c.h.b16 %v323
    %v409 = vunpack.c.l.b16 %v324
    %v410 = vunpack.c.h.b16 %v324
    %v411 = vunpack.c.l.b16 %v325
    %v412 = vunpack.c.h.b16 %v325
    %v413 = vunpack.c.l.b16 %v326
    %v414 = vunpack.c.h.b16 %v326
    %v415 = vunpack.c.l.b16 %v327
    %v416 = vunpack.c.h.b16 %v327
    %v417 = vunpack.c.l.b16 %v328
    %v418 = vunpack.c.h.b16 %v328
    %v419 = vunpack.c.l.b16 %v329
    %v420 = vunpack.c.h.b16 %v329
    %v421 = vunpack.c.l.b16 %v330
    %v422 = vunpack.c.h.b16 %v330
    %v423 = vunpack.c.l.b16 %v331
    %v424 = vunpack.c.h.b16 %v331
    %v425 = vunpack.c.l.b16 %v332
    %v426 = vunpack.c.h.b16 %v332
    %v427 = vunpack.c.l.b16 %v333
    %v428 = vunpack.c.h.b16 %v333
    %v429 = vunpack.c.l.b16 %v334
    %v430 = vunpack.c.h.b16 %v334
    %v431 = vpack.c.b16 %v371, %v367
    %v432 = vpack.c.b16 %v372, %v368
    %v433 = vpack.c.b16 %v373, %v369
    %v434 = vpack.c.b16 %v374, %v370
    %v435 = vpack.c.b16 %v379, %v375
    %v436 = vpack.c.b16 %v380, %v376
    %v437 = vpack.c.b16 %v381, %v377
    %v438 = vpack.c.b16 %v382, %v378
    %v439 = vpack.c.b16 %v387, %v383
    %v440 = vpack.c.b16 %v388, %v384
    %v441 = vpack.c.b16 %v389, %v385
    %v442 = vpack.c.b16 %v390, %v386
    %v443 = vpack.c.b16 %v395, %v391
    %v444 = vpack.c.b16 %v396, %v392
    %v445 = vpack.c.b16 %v397, %v393
    %v446 = vpack.c.b16 %v398, %v394
    %v447 = vpack.c.b16 %v403, %v399
    %v448 = vpack.c.b16 %v404, %v400
    %v449 = vpack.c.b16 %v405, %v401
    %v450 = vpack.c.b16 %v406, %v402
    %v451 = vpack.c.b16 %v411, %v407
    %v452 = vpack.c.b16 %v412, %v408
    %v453 = vpack.c.b16 %v413, %v409
    %v454 = vpack.c.b16 %v414, %v410
    %v455 = vpack.c.b16 %v419, %v415
    %v456 = vpack.c.b16 %v420, %v416
    %v457 = vpack.c.b16 %v421, %v417
    %v458 = vpack.c.b16 %v422, %v418
    %v459 = vpack.c.b16 %v427, %v423
    %v460 = vpack.c.b16 %v428, %v424
    %v461 = vpack.c.b16 %v429, %v425
    %v462 = vpack.c.b16 %v430, %v426
    %495 = vmatprep.subr.bf16.mxu0 %v460
    %496 = vmatpush1.bf16.msra.mxu0 %v459
    %497 = vmatprep.subr.bf16.mxu0 %v456
    %498 = vmatpush1.bf16.msra.mxu0 %v455
    %499 = vmatprep.subr.bf16.mxu0 %v452
    %500 = vmatpush1.bf16.msra.mxu0 %v451
    %501 = vmatprep.subr.bf16.mxu0 %v448
    %502 = vmatpush1.bf16.msra.mxu0 %v447
    %503 = vmatprep.subr.bf16.mxu0 %v444
    %504 = vmatpush1.bf16.msra.mxu0 %v443
    %505 = vmatprep.subr.bf16.mxu0 %v440
    %506 = vmatpush1.bf16.msra.mxu0 %v439
    %507 = vmatprep.subr.bf16.mxu0 %v436
    %508 = vmatpush1.bf16.msra.mxu0 %v435
    %509 = vmatprep.subr.bf16.mxu0 %v432
    %510 = vmatpush1.bf16.msra.mxu0 %v431
    %511 = vmatprep.subr.bf16.mxu0 0
    %512 = vmatpush2.bf16.msra.mxu0 0
    %513 = vmatprep.subr.bf16.mxu0 0
    %514 = vmatpush2.bf16.msra.mxu0 0
    %515 = vmatprep.subr.bf16.mxu0 0
    %516 = vmatpush2.bf16.msra.mxu0 0
    %517 = vmatprep.subr.bf16.mxu0 0
    %518 = vmatpush2.bf16.msra.mxu0 0
    %519 = vmatprep.subr.bf16.mxu0 0
    %520 = vmatpush2.bf16.msra.mxu0 0
    %521 = vmatprep.subr.bf16.mxu0 0
    %522 = vmatpush2.bf16.msra.mxu0 0
    %523 = vmatprep.subr.bf16.mxu0 0
    %524 = vmatpush2.bf16.msra.mxu0 0
    %525 = vmatprep.subr.bf16.mxu0 0
    %526 = vmatpush2.bf16.msra.mxu0 0
    %527 = vmatprep.mubr.bf16.mxu0 0
    %528 = vmatmul.mubr.bf16.gmra.mxu0 %v302
    %v529 = vpop.f32.mrf.mxu0
    %v530 = vadd.f32 0.0, %v529
    %v531 = vpop.f32.mrf.mxu0
    %v532 = vadd.f32 0.0, %v531
    %v533 = vpop.f32.mrf.mxu0
    %v534 = vpop.f32.mrf.mxu0
    %535 = vdwg.mxu0
    %536 = vmatprep.subr.bf16.mxu0 %v462
    %537 = vmatpush1.bf16.msra.mxu0 %v461
    %538 = vmatprep.subr.bf16.mxu0 %v458
    %539 = vmatpush1.bf16.msra.mxu0 %v457
    %540 = vmatprep.subr.bf16.mxu0 %v454
    %541 = vmatpush1.bf16.msra.mxu0 %v453
    %542 = vmatprep.subr.bf16.mxu0 %v450
    %543 = vmatpush1.bf16.msra.mxu0 %v449
    %544 = vmatprep.subr.bf16.mxu0 %v446
    %545 = vmatpush1.bf16.msra.mxu0 %v445
    %546 = vmatprep.subr.bf16.mxu0 %v442
    %547 = vmatpush1.bf16.msra.mxu0 %v441
    %548 = vmatprep.subr.bf16.mxu0 %v438
    %549 = vmatpush1.bf16.msra.mxu0 %v437
    %550 = vmatprep.subr.bf16.mxu0 %v434
    %551 = vmatpush1.bf16.msra.mxu0 %v433
    %552 = vmatprep.subr.bf16.mxu0 0
    %553 = vmatpush2.bf16.msra.mxu0 0
    %554 = vmatprep.subr.bf16.mxu0 0
    %555 = vmatpush2.bf16.msra.mxu0 0
    %556 = vmatprep.subr.bf16.mxu0 0
    %557 = vmatpush2.bf16.msra.mxu0 0
    %558 = vmatprep.subr.bf16.mxu0 0
    %559 = vmatpush2.bf16.msra.mxu0 0
    %560 = vmatprep.subr.bf16.mxu0 0
    %561 = vmatpush2.bf16.msra.mxu0 0
    %562 = vmatprep.subr.bf16.mxu0 0
    %563 = vmatpush2.bf16.msra.mxu0 0
    %564 = vmatprep.subr.bf16.mxu0 0
    %565 = vmatpush2.bf16.msra.mxu0 0
    %566 = vmatprep.subr.bf16.mxu0 0
    %567 = vmatpush2.bf16.msra.mxu0 0
    %568 = vmatprep.mubr.bf16.mxu0 0
    %569 = vmatmul.mubr.bf16.gmra.mxu0 %v302
    %v570 = vpop.f32.mrf.mxu0
    %v571 = vadd.f32 0.0, %v570
    %v572 = vpop.f32.mrf.mxu0
    %v573 = vadd.f32 0.0, %v572
    %v574 = vpop.f32.mrf.mxu0
    %v575 = vpop.f32.mrf.mxu0
    %576 = vdwg.mxu0
    %v577 = vadd.f32 %v298, %v530
    %v578 = vadd.f32 %v299, %v532
    %v579 = vadd.f32 %v300, %v571
    %v580 = vadd.f32 %v301, %v573
    %v581 = vxor.u32 %v577, 2147483648
    %v582 = vmul.f32 %v581, 1.442695
    %v583 = vpow.pop %v582
    %v584 = vadd.f32 %v583, 1.0
    %v585 = vrcp.pop %v584
    %v586 = vmul.f32 1.0, %v585
    %v587 = vxor.u32 %v578, 2147483648
    %v588 = vmul.f32 %v587, 1.442695
    %v589 = vpow.pop %v588
    %v590 = vadd.f32 %v589, 1.0
    %v591 = vrcp.pop %v590
    %v592 = vmul.f32 1.0, %v591
    %v593 = vtanh.pop %v579
    %v594 = vxor.u32 %v580, 2147483648
    %v595 = vmul.f32 %v594, 1.442695
    %v596 = vpow.pop %v595
    %v597 = vadd.f32 %v596, 1.0
    %v598 = vrcp.pop %v597
    %v599 = vmul.f32 1.0, %v598
    %v600 = vmul.f32 %v592, %v150
    %v601 = vmul.f32 %v586, %v593
    %v602 = vadd.f32 %v600, %v601
    %v603 = vtanh.pop %v602
    %v604 = vmul.f32 %v599, %v603
    %v605 = vpack.c.bf16 %v602, %v602
    %606 = vmatprep.subr.bf16.mxu0 0
    %607 = vmatpush1.bf16.msra.mxu0 %v209
    %608 = vmatprep.subr.bf16.mxu0 0
    %609 = vmatpush1.bf16.msra.mxu0 %v208
    %610 = vmatprep.subr.bf16.mxu0 0
    %611 = vmatpush1.bf16.msra.mxu0 %v207
    %612 = vmatprep.subr.bf16.mxu0 0
    %613 = vmatpush1.bf16.msra.mxu0 %v206
    %614 = vmatprep.subr.bf16.mxu0 0
    %615 = vmatpush1.bf16.msra.mxu0 %v205
    %616 = vmatprep.subr.bf16.mxu0 0
    %617 = vmatpush1.bf16.msra.mxu0 %v204
    %618 = vmatprep.subr.bf16.mxu0 0
    %619 = vmatpush1.bf16.msra.mxu0 %v203
    %620 = vmatprep.subr.bf16.mxu0 0
    %621 = vmatpush1.bf16.msra.mxu0 %v202
    %622 = vmatprep.subr.bf16.mxu0 0
    %623 = vmatpush2.bf16.msra.mxu0 0
    %624 = vmatprep.subr.bf16.mxu0 0
    %625 = vmatpush2.bf16.msra.mxu0 0
    %626 = vmatprep.subr.bf16.mxu0 0
    %627 = vmatpush2.bf16.msra.mxu0 0
    %628 = vmatprep.subr.bf16.mxu0 0
    %629 = vmatpush2.bf16.msra.mxu0 0
    %630 = vmatprep.subr.bf16.mxu0 0
    %631 = vmatpush2.bf16.msra.mxu0 0
    %632 = vmatprep.subr.bf16.mxu0 0
    %633 = vmatpush2.bf16.msra.mxu0 0
    %634 = vmatprep.subr.bf16.mxu0 0
    %635 = vmatpush2.bf16.msra.mxu0 0
    %636 = vmatprep.subr.bf16.mxu0 0
    %637 = vmatpush2.bf16.msra.mxu0 0
    %638 = vmatprep.mubr.bf16.mxu0 0
    %639 = vmatmul.mubr.bf16.gmra.mxu0 %v605
    %v640 = vpop.f32.mrf.mxu0
    %v641 = vadd.f32 %v111, %v640
    %v642 = vpop.f32.mrf.mxu0
    %v643 = vpop.f32.mrf.mxu0
    %v644 = vpop.f32.mrf.mxu0
    %645 = vdwg.mxu0
    %647 = vset.pattern.permute.xlu0 3
    %648 = vperm.xlu0 %647, %v282
    %v649 = vpop.permute.xlu0 %648
    %v651 = vmul.f32 %v649, %v104
    %v652 = vadd.f32 %v641, %v651
    %v653 = vxor.u32 %v652, 2147483648
    %v654 = vmul.f32 %v653, 1.442695
    %v655 = vpow.pop %v654
    %v656 = vadd.f32 %v655, 1.0
    %v657 = vrcp.pop %v656
    %v658 = vmul.f32 1.0, %v657
    %v659 = vmul.f32 %v658, 2.0
    %v660 = vsub.f32 %v659, 1.0
    %v661 = vmul.f32 %v658, %v276
    %663 = vrot.lane.b32.xlu0 %v660, 126
    %v664 = vpop.permute.xlu0 %663
    %v666 = vmul.f32 %v658, %v664
    %668 = vrot.lane.b32.xlu0 %v666, 1
    %v669 = vpop.permute.xlu0 %668
    %v671 = vadd.f32 %v661, %v669
    %v672 = vtanh.pop %v671
    %674 = vrot.lane.b32.xlu0 %v672, 2
    %v675 = vpop.permute.xlu0 %674
    %v677 = vmul.f32 %v658, %v675
    %vm678 = vcmp.eq.s32.totalorder %v114, 1
    %680 = vset.pattern.permute.xlu0 1
    %681 = vperm.xlu0 %680, %v671
    %v682 = vpop.permute.xlu0 %681
    %v684 = vsel %vm678, %v682, %v289
    %685 = vset.pattern.permute.xlu0 2
    %686 = vperm.xlu0 %685, %v115
    %v687 = vpop.permute.xlu0 %686
    %v689 = vmul.f32 %v687, %v60
    %v690 = vmul.f32 %v687, %v64
    %v691 = vmul.f32 %v687, %v68
    %v692 = vmul.f32 %v687, %v72
    %v693 = vadd.f32 %v689, %v82
    %v694 = vadd.f32 %v690, %v86
    %v695 = vadd.f32 %v691, %v90
    %v696 = vadd.f32 %v692, %v94
    %v697 = vpack.c.bf16 %v604, %v604
    %698 = vmatprep.subr.bf16.mxu0 %v460
    %699 = vmatpush1.bf16.msra.mxu0 %v459
    %700 = vmatprep.subr.bf16.mxu0 %v456
    %701 = vmatpush1.bf16.msra.mxu0 %v455
    %702 = vmatprep.subr.bf16.mxu0 %v452
    %703 = vmatpush1.bf16.msra.mxu0 %v451
    %704 = vmatprep.subr.bf16.mxu0 %v448
    %705 = vmatpush1.bf16.msra.mxu0 %v447
    %706 = vmatprep.subr.bf16.mxu0 %v444
    %707 = vmatpush1.bf16.msra.mxu0 %v443
    %708 = vmatprep.subr.bf16.mxu0 %v440
    %709 = vmatpush1.bf16.msra.mxu0 %v439
    %710 = vmatprep.subr.bf16.mxu0 %v436
    %711 = vmatpush1.bf16.msra.mxu0 %v435
    %712 = vmatprep.subr.bf16.mxu0 %v432
    %713 = vmatpush1.bf16.msra.mxu0 %v431
    %714 = vmatprep.subr.bf16.mxu0 0
    %715 = vmatpush2.bf16.msra.mxu0 0
    %716 = vmatprep.subr.bf16.mxu0 0
    %717 = vmatpush2.bf16.msra.mxu0 0
    %718 = vmatprep.subr.bf16.mxu0 0
    %719 = vmatpush2.bf16.msra.mxu0 0
    %720 = vmatprep.subr.bf16.mxu0 0
    %721 = vmatpush2.bf16.msra.mxu0 0
    %722 = vmatprep.subr.bf16.mxu0 0
    %723 = vmatpush2.bf16.msra.mxu0 0
    %724 = vmatprep.subr.bf16.mxu0 0
    %725 = vmatpush2.bf16.msra.mxu0 0
    %726 = vmatprep.subr.bf16.mxu0 0
    %727 = vmatpush2.bf16.msra.mxu0 0
    %728 = vmatprep.subr.bf16.mxu0 0
    %729 = vmatpush2.bf16.msra.mxu0 0
    %730 = vmatprep.mubr.bf16.mxu0 0
    %731 = vmatmul.mubr.bf16.gmra.mxu0 %v697
    %v732 = vpop.f32.mrf.mxu0
    %v733 = vadd.f32 0.0, %v732
    %v734 = vpop.f32.mrf.mxu0
    %v735 = vadd.f32 0.0, %v734
    %v736 = vpop.f32.mrf.mxu0
    %v737 = vpop.f32.mrf.mxu0
    %738 = vdwg.mxu0
    %739 = vmatprep.subr.bf16.mxu0 %v462
    %740 = vmatpush1.bf16.msra.mxu0 %v461
    %741 = vmatprep.subr.bf16.mxu0 %v458
    %742 = vmatpush1.bf16.msra.mxu0 %v457
    %743 = vmatprep.subr.bf16.mxu0 %v454
    %744 = vmatpush1.bf16.msra.mxu0 %v453
    %745 = vmatprep.subr.bf16.mxu0 %v450
    %746 = vmatpush1.bf16.msra.mxu0 %v449
    %747 = vmatprep.subr.bf16.mxu0 %v446
    %748 = vmatpush1.bf16.msra.mxu0 %v445
    %749 = vmatprep.subr.bf16.mxu0 %v442
    %750 = vmatpush1.bf16.msra.mxu0 %v441
    %751 = vmatprep.subr.bf16.mxu0 %v438
    %752 = vmatpush1.bf16.msra.mxu0 %v437
    %753 = vmatprep.subr.bf16.mxu0 %v434
    %754 = vmatpush1.bf16.msra.mxu0 %v433
    %755 = vmatprep.subr.bf16.mxu0 0
    %756 = vmatpush2.bf16.msra.mxu0 0
    %757 = vmatprep.subr.bf16.mxu0 0
    %758 = vmatpush2.bf16.msra.mxu0 0
    %759 = vmatprep.subr.bf16.mxu0 0
    %760 = vmatpush2.bf16.msra.mxu0 0
    %761 = vmatprep.subr.bf16.mxu0 0
    %762 = vmatpush2.bf16.msra.mxu0 0
    %763 = vmatprep.subr.bf16.mxu0 0
    %764 = vmatpush2.bf16.msra.mxu0 0
    %765 = vmatprep.subr.bf16.mxu0 0
    %766 = vmatpush2.bf16.msra.mxu0 0
    %767 = vmatprep.subr.bf16.mxu0 0
    %768 = vmatpush2.bf16.msra.mxu0 0
    %769 = vmatprep.subr.bf16.mxu0 0
    %770 = vmatpush2.bf16.msra.mxu0 0
    %771 = vmatprep.mubr.bf16.mxu0 0
    %772 = vmatmul.mubr.bf16.gmra.mxu0 %v697
    %v773 = vpop.f32.mrf.mxu0
    %v774 = vadd.f32 0.0, %v773
    %v775 = vpop.f32.mrf.mxu0
    %v776 = vadd.f32 0.0, %v775
    %v777 = vpop.f32.mrf.mxu0
    %v778 = vpop.f32.mrf.mxu0
    %779 = vdwg.mxu0
    %v780 = vadd.f32 %v693, %v733
    %v781 = vadd.f32 %v694, %v735
    %v782 = vadd.f32 %v695, %v774
    %v783 = vadd.f32 %v696, %v776
    %v784 = vxor.u32 %v780, 2147483648
    %v785 = vmul.f32 %v784, 1.442695
    %v786 = vpow.pop %v785
    %v787 = vadd.f32 %v786, 1.0
    %v788 = vrcp.pop %v787
    %v789 = vmul.f32 1.0, %v788
    %v790 = vxor.u32 %v781, 2147483648
    %v791 = vmul.f32 %v790, 1.442695
    %v792 = vpow.pop %v791
    %v793 = vadd.f32 %v792, 1.0
    %v794 = vrcp.pop %v793
    %v795 = vmul.f32 1.0, %v794
    %v796 = vtanh.pop %v782
    %v797 = vxor.u32 %v783, 2147483648
    %v798 = vmul.f32 %v797, 1.442695
    %v799 = vpow.pop %v798
    %v800 = vadd.f32 %v799, 1.0
    %v801 = vrcp.pop %v800
    %v802 = vmul.f32 1.0, %v801
    %v803 = vmul.f32 %v795, %v602
    %v804 = vmul.f32 %v789, %v796
    %v805 = vadd.f32 %v803, %v804
    %v806 = vtanh.pop %v805
    %v807 = vmul.f32 %v802, %v806
    %v808 = vpack.c.bf16 %v805, %v805
    %809 = vmatprep.subr.bf16.mxu0 0
    %810 = vmatpush1.bf16.msra.mxu0 %v209
    %811 = vmatprep.subr.bf16.mxu0 0
    %812 = vmatpush1.bf16.msra.mxu0 %v208
    %813 = vmatprep.subr.bf16.mxu0 0
    %814 = vmatpush1.bf16.msra.mxu0 %v207
    %815 = vmatprep.subr.bf16.mxu0 0
    %816 = vmatpush1.bf16.msra.mxu0 %v206
    %817 = vmatprep.subr.bf16.mxu0 0
    %818 = vmatpush1.bf16.msra.mxu0 %v205
    %819 = vmatprep.subr.bf16.mxu0 0
    %820 = vmatpush1.bf16.msra.mxu0 %v204
    %821 = vmatprep.subr.bf16.mxu0 0
    %822 = vmatpush1.bf16.msra.mxu0 %v203
    %823 = vmatprep.subr.bf16.mxu0 0
    %824 = vmatpush1.bf16.msra.mxu0 %v202
    %825 = vmatprep.subr.bf16.mxu0 0
    %826 = vmatpush2.bf16.msra.mxu0 0
    %827 = vmatprep.subr.bf16.mxu0 0
    %828 = vmatpush2.bf16.msra.mxu0 0
    %829 = vmatprep.subr.bf16.mxu0 0
    %830 = vmatpush2.bf16.msra.mxu0 0
    %831 = vmatprep.subr.bf16.mxu0 0
    %832 = vmatpush2.bf16.msra.mxu0 0
    %833 = vmatprep.subr.bf16.mxu0 0
    %834 = vmatpush2.bf16.msra.mxu0 0
    %835 = vmatprep.subr.bf16.mxu0 0
    %836 = vmatpush2.bf16.msra.mxu0 0
    %837 = vmatprep.subr.bf16.mxu0 0
    %838 = vmatpush2.bf16.msra.mxu0 0
    %839 = vmatprep.subr.bf16.mxu0 0
    %840 = vmatpush2.bf16.msra.mxu0 0
    %841 = vmatprep.mubr.bf16.mxu0 0
    %842 = vmatmul.mubr.bf16.gmra.mxu0 %v808
    %v843 = vpop.f32.mrf.mxu0
    %v844 = vadd.f32 %v111, %v843
    %v845 = vpop.f32.mrf.mxu0
    %v846 = vpop.f32.mrf.mxu0
    %v847 = vpop.f32.mrf.mxu0
    %848 = vdwg.mxu0
    %850 = vset.pattern.permute.xlu0 3
    %851 = vperm.xlu0 %850, %v677
    %v852 = vpop.permute.xlu0 %851
    %v854 = vmul.f32 %v852, %v104
    %v855 = vadd.f32 %v844, %v854
    %v856 = vxor.u32 %v855, 2147483648
    %v857 = vmul.f32 %v856, 1.442695
    %v858 = vpow.pop %v857
    %v859 = vadd.f32 %v858, 1.0
    %v860 = vrcp.pop %v859
    %v861 = vmul.f32 1.0, %v860
    %v862 = vmul.f32 %v861, 2.0
    %v863 = vsub.f32 %v862, 1.0
    %v864 = vmul.f32 %v861, %v671
    %866 = vrot.lane.b32.xlu0 %v863, 126
    %v867 = vpop.permute.xlu0 %866
    %v869 = vmul.f32 %v861, %v867
    %871 = vrot.lane.b32.xlu0 %v869, 1
    %v872 = vpop.permute.xlu0 %871
    %v874 = vadd.f32 %v864, %v872
    %v875 = vtanh.pop %v874
    %877 = vrot.lane.b32.xlu0 %v875, 2
    %v878 = vpop.permute.xlu0 %877
    %v880 = vmul.f32 %v861, %v878
    %vm881 = vcmp.eq.s32.totalorder %v114, 2
    %883 = vset.pattern.permute.xlu0 1
    %884 = vperm.xlu0 %883, %v874
    %v885 = vpop.permute.xlu0 %884
    %v887 = vsel %vm881, %v885, %v684
    %888 = vset.pattern.permute.xlu0 3
    %889 = vperm.xlu0 %888, %v115
    %v890 = vpop.permute.xlu0 %889
    %v892 = vmul.f32 %v890, %v60
    %v893 = vmul.f32 %v890, %v64
    %v894 = vmul.f32 %v890, %v68
    %v895 = vmul.f32 %v890, %v72
    %v896 = vadd.f32 %v892, %v82
    %v897 = vadd.f32 %v893, %v86
    %v898 = vadd.f32 %v894, %v90
    %v899 = vadd.f32 %v895, %v94
    %v900 = vpack.c.bf16 %v807, %v807
    %901 = vmatprep.subr.bf16.mxu0 %v460
    %902 = vmatpush1.bf16.msra.mxu0 %v459
    %903 = vmatprep.subr.bf16.mxu0 %v456
    %904 = vmatpush1.bf16.msra.mxu0 %v455
    %905 = vmatprep.subr.bf16.mxu0 %v452
    %906 = vmatpush1.bf16.msra.mxu0 %v451
    %907 = vmatprep.subr.bf16.mxu0 %v448
    %908 = vmatpush1.bf16.msra.mxu0 %v447
    %909 = vmatprep.subr.bf16.mxu0 %v444
    %910 = vmatpush1.bf16.msra.mxu0 %v443
    %911 = vmatprep.subr.bf16.mxu0 %v440
    %912 = vmatpush1.bf16.msra.mxu0 %v439
    %913 = vmatprep.subr.bf16.mxu0 %v436
    %914 = vmatpush1.bf16.msra.mxu0 %v435
    %915 = vmatprep.subr.bf16.mxu0 %v432
    %916 = vmatpush1.bf16.msra.mxu0 %v431
    %917 = vmatprep.subr.bf16.mxu0 0
    %918 = vmatpush2.bf16.msra.mxu0 0
    %919 = vmatprep.subr.bf16.mxu0 0
    %920 = vmatpush2.bf16.msra.mxu0 0
    %921 = vmatprep.subr.bf16.mxu0 0
    %922 = vmatpush2.bf16.msra.mxu0 0
    %923 = vmatprep.subr.bf16.mxu0 0
    %924 = vmatpush2.bf16.msra.mxu0 0
    %925 = vmatprep.subr.bf16.mxu0 0
    %926 = vmatpush2.bf16.msra.mxu0 0
    %927 = vmatprep.subr.bf16.mxu0 0
    %928 = vmatpush2.bf16.msra.mxu0 0
    %929 = vmatprep.subr.bf16.mxu0 0
    %930 = vmatpush2.bf16.msra.mxu0 0
    %931 = vmatprep.subr.bf16.mxu0 0
    %932 = vmatpush2.bf16.msra.mxu0 0
    %933 = vmatprep.mubr.bf16.mxu0 0
    %934 = vmatmul.mubr.bf16.gmra.mxu0 %v900
    %v935 = vpop.f32.mrf.mxu0
    %v936 = vadd.f32 0.0, %v935
    %v937 = vpop.f32.mrf.mxu0
    %v938 = vadd.f32 0.0, %v937
    %v939 = vpop.f32.mrf.mxu0
    %v940 = vpop.f32.mrf.mxu0
    %941 = vdwg.mxu0
    %942 = vmatprep.subr.bf16.mxu0 %v462
    %943 = vmatpush1.bf16.msra.mxu0 %v461
    %944 = vmatprep.subr.bf16.mxu0 %v458
    %945 = vmatpush1.bf16.msra.mxu0 %v457
    %946 = vmatprep.subr.bf16.mxu0 %v454
    %947 = vmatpush1.bf16.msra.mxu0 %v453
    %948 = vmatprep.subr.bf16.mxu0 %v450
    %949 = vmatpush1.bf16.msra.mxu0 %v449
    %950 = vmatprep.subr.bf16.mxu0 %v446
    %951 = vmatpush1.bf16.msra.mxu0 %v445
    %952 = vmatprep.subr.bf16.mxu0 %v442
    %953 = vmatpush1.bf16.msra.mxu0 %v441
    %954 = vmatprep.subr.bf16.mxu0 %v438
    %955 = vmatpush1.bf16.msra.mxu0 %v437
    %956 = vmatprep.subr.bf16.mxu0 %v434
    %957 = vmatpush1.bf16.msra.mxu0 %v433
    %958 = vmatprep.subr.bf16.mxu0 0
    %959 = vmatpush2.bf16.msra.mxu0 0
    %960 = vmatprep.subr.bf16.mxu0 0
    %961 = vmatpush2.bf16.msra.mxu0 0
    %962 = vmatprep.subr.bf16.mxu0 0
    %963 = vmatpush2.bf16.msra.mxu0 0
    %964 = vmatprep.subr.bf16.mxu0 0
    %965 = vmatpush2.bf16.msra.mxu0 0
    %966 = vmatprep.subr.bf16.mxu0 0
    %967 = vmatpush2.bf16.msra.mxu0 0
    %968 = vmatprep.subr.bf16.mxu0 0
    %969 = vmatpush2.bf16.msra.mxu0 0
    %970 = vmatprep.subr.bf16.mxu0 0
    %971 = vmatpush2.bf16.msra.mxu0 0
    %972 = vmatprep.subr.bf16.mxu0 0
    %973 = vmatpush2.bf16.msra.mxu0 0
    %974 = vmatprep.mubr.bf16.mxu0 0
    %975 = vmatmul.mubr.bf16.gmra.mxu0 %v900
    %v976 = vpop.f32.mrf.mxu0
    %v977 = vadd.f32 0.0, %v976
    %v978 = vpop.f32.mrf.mxu0
    %v979 = vadd.f32 0.0, %v978
    %v980 = vpop.f32.mrf.mxu0
    %v981 = vpop.f32.mrf.mxu0
    %982 = vdwg.mxu0
    %v983 = vadd.f32 %v896, %v936
    %v984 = vadd.f32 %v897, %v938
    %v985 = vadd.f32 %v898, %v977
    %v986 = vadd.f32 %v899, %v979
    %v987 = vxor.u32 %v983, 2147483648
    %v988 = vmul.f32 %v987, 1.442695
    %v989 = vpow.pop %v988
    %v990 = vadd.f32 %v989, 1.0
    %v991 = vrcp.pop %v990
    %v992 = vmul.f32 1.0, %v991
    %v993 = vxor.u32 %v984, 2147483648
    %v994 = vmul.f32 %v993, 1.442695
    %v995 = vpow.pop %v994
    %v996 = vadd.f32 %v995, 1.0
    %v997 = vrcp.pop %v996
    %v998 = vmul.f32 1.0, %v997
    %v999 = vtanh.pop %v985
    %v1000 = vxor.u32 %v986, 2147483648
    %v1001 = vmul.f32 %v1000, 1.442695
    %v1002 = vpow.pop %v1001
    %v1003 = vadd.f32 %v1002, 1.0
    %v1004 = vrcp.pop %v1003
    %v1005 = vmul.f32 1.0, %v1004
    %v1006 = vmul.f32 %v998, %v805
    %v1007 = vmul.f32 %v992, %v999
    %v1008 = vadd.f32 %v1006, %v1007
    %v1009 = vtanh.pop %v1008
    %v1010 = vmul.f32 %v1005, %v1009
    %v1011 = vpack.c.bf16 %v1008, %v1008
    %1012 = vmatprep.subr.bf16.mxu0 0
    %1013 = vmatpush1.bf16.msra.mxu0 %v209
    %1014 = vmatprep.subr.bf16.mxu0 0
    %1015 = vmatpush1.bf16.msra.mxu0 %v208
    %1016 = vmatprep.subr.bf16.mxu0 0
    %1017 = vmatpush1.bf16.msra.mxu0 %v207
    %1018 = vmatprep.subr.bf16.mxu0 0
    %1019 = vmatpush1.bf16.msra.mxu0 %v206
    %1020 = vmatprep.subr.bf16.mxu0 0
    %1021 = vmatpush1.bf16.msra.mxu0 %v205
    %1022 = vmatprep.subr.bf16.mxu0 0
    %1023 = vmatpush1.bf16.msra.mxu0 %v204
    %1024 = vmatprep.subr.bf16.mxu0 0
    %1025 = vmatpush1.bf16.msra.mxu0 %v203
    %1026 = vmatprep.subr.bf16.mxu0 0
    %1027 = vmatpush1.bf16.msra.mxu0 %v202
    %1028 = vmatprep.subr.bf16.mxu0 0
    %1029 = vmatpush2.bf16.msra.mxu0 0
    %1030 = vmatprep.subr.bf16.mxu0 0
    %1031 = vmatpush2.bf16.msra.mxu0 0
    %1032 = vmatprep.subr.bf16.mxu0 0
    %1033 = vmatpush2.bf16.msra.mxu0 0
    %1034 = vmatprep.subr.bf16.mxu0 0
    %1035 = vmatpush2.bf16.msra.mxu0 0
    %1036 = vmatprep.subr.bf16.mxu0 0
    %1037 = vmatpush2.bf16.msra.mxu0 0
    %1038 = vmatprep.subr.bf16.mxu0 0
    %1039 = vmatpush2.bf16.msra.mxu0 0
    %1040 = vmatprep.subr.bf16.mxu0 0
    %1041 = vmatpush2.bf16.msra.mxu0 0
    %1042 = vmatprep.subr.bf16.mxu0 0
    %1043 = vmatpush2.bf16.msra.mxu0 0
    %1044 = vmatprep.mubr.bf16.mxu0 0
    %1045 = vmatmul.mubr.bf16.gmra.mxu0 %v1011
    %v1046 = vpop.f32.mrf.mxu0
    %v1047 = vadd.f32 %v111, %v1046
    %v1048 = vpop.f32.mrf.mxu0
    %v1049 = vpop.f32.mrf.mxu0
    %v1050 = vpop.f32.mrf.mxu0
    %1051 = vdwg.mxu0
    %1053 = vset.pattern.permute.xlu0 3
    %1054 = vperm.xlu0 %1053, %v880
    %v1055 = vpop.permute.xlu0 %1054
    %v1057 = vmul.f32 %v1055, %v104
    %v1058 = vadd.f32 %v1047, %v1057
    %v1059 = vxor.u32 %v1058, 2147483648
    %v1060 = vmul.f32 %v1059, 1.442695
    %v1061 = vpow.pop %v1060
    %v1062 = vadd.f32 %v1061, 1.0
    %v1063 = vrcp.pop %v1062
    %v1064 = vmul.f32 1.0, %v1063
    %v1065 = vmul.f32 %v1064, 2.0
    %v1066 = vsub.f32 %v1065, 1.0
    %v1067 = vmul.f32 %v1064, %v874
    %1069 = vrot.lane.b32.xlu0 %v1066, 126
    %v1070 = vpop.permute.xlu0 %1069
    %v1072 = vmul.f32 %v1064, %v1070
    %1074 = vrot.lane.b32.xlu0 %v1072, 1
    %v1075 = vpop.permute.xlu0 %1074
    %v1077 = vadd.f32 %v1067, %v1075
    %v1078 = vtanh.pop %v1077
    %1080 = vrot.lane.b32.xlu0 %v1078, 2
    %v1081 = vpop.permute.xlu0 %1080
    %v1083 = vmul.f32 %v1064, %v1081
    %vm1084 = vcmp.eq.s32.totalorder %v114, 3
    %1086 = vset.pattern.permute.xlu0 1
    %1087 = vperm.xlu0 %1086, %v1077
    %v1088 = vpop.permute.xlu0 %1087
    %v1090 = vsel %vm1084, %v1088, %v887
    %1091 = vset.pattern.permute.xlu0 4
    %1092 = vperm.xlu0 %1091, %v115
    %v1093 = vpop.permute.xlu0 %1092
    %v1095 = vmul.f32 %v1093, %v60
    %v1096 = vmul.f32 %v1093, %v64
    %v1097 = vmul.f32 %v1093, %v68
    %v1098 = vmul.f32 %v1093, %v72
    %v1099 = vadd.f32 %v1095, %v82
    %v1100 = vadd.f32 %v1096, %v86
    %v1101 = vadd.f32 %v1097, %v90
    %v1102 = vadd.f32 %v1098, %v94
    %v1103 = vpack.c.bf16 %v1010, %v1010
    %1104 = vmatprep.subr.bf16.mxu0 %v460
    %1105 = vmatpush1.bf16.msra.mxu0 %v459
    %1106 = vmatprep.subr.bf16.mxu0 %v456
    %1107 = vmatpush1.bf16.msra.mxu0 %v455
    %1108 = vmatprep.subr.bf16.mxu0 %v452
    %1109 = vmatpush1.bf16.msra.mxu0 %v451
    %1110 = vmatprep.subr.bf16.mxu0 %v448
    %1111 = vmatpush1.bf16.msra.mxu0 %v447
    %1112 = vmatprep.subr.bf16.mxu0 %v444
    %1113 = vmatpush1.bf16.msra.mxu0 %v443
    %1114 = vmatprep.subr.bf16.mxu0 %v440
    %1115 = vmatpush1.bf16.msra.mxu0 %v439
    %1116 = vmatprep.subr.bf16.mxu0 %v436
    %1117 = vmatpush1.bf16.msra.mxu0 %v435
    %1118 = vmatprep.subr.bf16.mxu0 %v432
    %1119 = vmatpush1.bf16.msra.mxu0 %v431
    %1120 = vmatprep.subr.bf16.mxu0 0
    %1121 = vmatpush2.bf16.msra.mxu0 0
    %1122 = vmatprep.subr.bf16.mxu0 0
    %1123 = vmatpush2.bf16.msra.mxu0 0
    %1124 = vmatprep.subr.bf16.mxu0 0
    %1125 = vmatpush2.bf16.msra.mxu0 0
    %1126 = vmatprep.subr.bf16.mxu0 0
    %1127 = vmatpush2.bf16.msra.mxu0 0
    %1128 = vmatprep.subr.bf16.mxu0 0
    %1129 = vmatpush2.bf16.msra.mxu0 0
    %1130 = vmatprep.subr.bf16.mxu0 0
    %1131 = vmatpush2.bf16.msra.mxu0 0
    %1132 = vmatprep.subr.bf16.mxu0 0
    %1133 = vmatpush2.bf16.msra.mxu0 0
    %1134 = vmatprep.subr.bf16.mxu0 0
    %1135 = vmatpush2.bf16.msra.mxu0 0
    %1136 = vmatprep.mubr.bf16.mxu0 0
    %1137 = vmatmul.mubr.bf16.gmra.mxu0 %v1103
    %v1138 = vpop.f32.mrf.mxu0
    %v1139 = vadd.f32 0.0, %v1138
    %v1140 = vpop.f32.mrf.mxu0
    %v1141 = vadd.f32 0.0, %v1140
    %v1142 = vpop.f32.mrf.mxu0
    %v1143 = vpop.f32.mrf.mxu0
    %1144 = vdwg.mxu0
    %1145 = vmatprep.subr.bf16.mxu0 %v462
    %1146 = vmatpush1.bf16.msra.mxu0 %v461
    %1147 = vmatprep.subr.bf16.mxu0 %v458
    %1148 = vmatpush1.bf16.msra.mxu0 %v457
    %1149 = vmatprep.subr.bf16.mxu0 %v454
    %1150 = vmatpush1.bf16.msra.mxu0 %v453
    %1151 = vmatprep.subr.bf16.mxu0 %v450
    %1152 = vmatpush1.bf16.msra.mxu0 %v449
    %1153 = vmatprep.subr.bf16.mxu0 %v446
    %1154 = vmatpush1.bf16.msra.mxu0 %v445
    %1155 = vmatprep.subr.bf16.mxu0 %v442
    %1156 = vmatpush1.bf16.msra.mxu0 %v441
    %1157 = vmatprep.subr.bf16.mxu0 %v438
    %1158 = vmatpush1.bf16.msra.mxu0 %v437
    %1159 = vmatprep.subr.bf16.mxu0 %v434
    %1160 = vmatpush1.bf16.msra.mxu0 %v433
    %1161 = vmatprep.subr.bf16.mxu0 0
    %1162 = vmatpush2.bf16.msra.mxu0 0
    %1163 = vmatprep.subr.bf16.mxu0 0
    %1164 = vmatpush2.bf16.msra.mxu0 0
    %1165 = vmatprep.subr.bf16.mxu0 0
    %1166 = vmatpush2.bf16.msra.mxu0 0
    %1167 = vmatprep.subr.bf16.mxu0 0
    %1168 = vmatpush2.bf16.msra.mxu0 0
    %1169 = vmatprep.subr.bf16.mxu0 0
    %1170 = vmatpush2.bf16.msra.mxu0 0
    %1171 = vmatprep.subr.bf16.mxu0 0
    %1172 = vmatpush2.bf16.msra.mxu0 0
    %1173 = vmatprep.subr.bf16.mxu0 0
    %1174 = vmatpush2.bf16.msra.mxu0 0
    %1175 = vmatprep.subr.bf16.mxu0 0
    %1176 = vmatpush2.bf16.msra.mxu0 0
    %1177 = vmatprep.mubr.bf16.mxu0 0
    %1178 = vmatmul.mubr.bf16.gmra.mxu0 %v1103
    %v1179 = vpop.f32.mrf.mxu0
    %v1180 = vadd.f32 0.0, %v1179
    %v1181 = vpop.f32.mrf.mxu0
    %v1182 = vadd.f32 0.0, %v1181
    %v1183 = vpop.f32.mrf.mxu0
    %v1184 = vpop.f32.mrf.mxu0
    %1185 = vdwg.mxu0
    %v1186 = vadd.f32 %v1099, %v1139
    %v1187 = vadd.f32 %v1100, %v1141
    %v1188 = vadd.f32 %v1101, %v1180
    %v1189 = vadd.f32 %v1102, %v1182
    %v1190 = vxor.u32 %v1186, 2147483648
    %v1191 = vmul.f32 %v1190, 1.442695
    %v1192 = vpow.pop %v1191
    %v1193 = vadd.f32 %v1192, 1.0
    %v1194 = vrcp.pop %v1193
    %v1195 = vmul.f32 1.0, %v1194
    %v1196 = vxor.u32 %v1187, 2147483648
    %v1197 = vmul.f32 %v1196, 1.442695
    %v1198 = vpow.pop %v1197
    %v1199 = vadd.f32 %v1198, 1.0
    %v1200 = vrcp.pop %v1199
    %v1201 = vmul.f32 1.0, %v1200
    %v1202 = vtanh.pop %v1188
    %v1203 = vxor.u32 %v1189, 2147483648
    %v1204 = vmul.f32 %v1203, 1.442695
    %v1205 = vpow.pop %v1204
    %v1206 = vadd.f32 %v1205, 1.0
    %v1207 = vrcp.pop %v1206
    %v1208 = vmul.f32 1.0, %v1207
    %v1209 = vmul.f32 %v1201, %v1008
    %v1210 = vmul.f32 %v1195, %v1202
    %v1211 = vadd.f32 %v1209, %v1210
    %v1212 = vtanh.pop %v1211
    %v1213 = vmul.f32 %v1208, %v1212
    %v1214 = vpack.c.bf16 %v1211, %v1211
    %1215 = vmatprep.subr.bf16.mxu0 0
    %1216 = vmatpush1.bf16.msra.mxu0 %v209
    %1217 = vmatprep.subr.bf16.mxu0 0
    %1218 = vmatpush1.bf16.msra.mxu0 %v208
    %1219 = vmatprep.subr.bf16.mxu0 0
    %1220 = vmatpush1.bf16.msra.mxu0 %v207
    %1221 = vmatprep.subr.bf16.mxu0 0
    %1222 = vmatpush1.bf16.msra.mxu0 %v206
    %1223 = vmatprep.subr.bf16.mxu0 0
    %1224 = vmatpush1.bf16.msra.mxu0 %v205
    %1225 = vmatprep.subr.bf16.mxu0 0
    %1226 = vmatpush1.bf16.msra.mxu0 %v204
    %1227 = vmatprep.subr.bf16.mxu0 0
    %1228 = vmatpush1.bf16.msra.mxu0 %v203
    %1229 = vmatprep.subr.bf16.mxu0 0
    %1230 = vmatpush1.bf16.msra.mxu0 %v202
    %1231 = vmatprep.subr.bf16.mxu0 0
    %1232 = vmatpush2.bf16.msra.mxu0 0
    %1233 = vmatprep.subr.bf16.mxu0 0
    %1234 = vmatpush2.bf16.msra.mxu0 0
    %1235 = vmatprep.subr.bf16.mxu0 0
    %1236 = vmatpush2.bf16.msra.mxu0 0
    %1237 = vmatprep.subr.bf16.mxu0 0
    %1238 = vmatpush2.bf16.msra.mxu0 0
    %1239 = vmatprep.subr.bf16.mxu0 0
    %1240 = vmatpush2.bf16.msra.mxu0 0
    %1241 = vmatprep.subr.bf16.mxu0 0
    %1242 = vmatpush2.bf16.msra.mxu0 0
    %1243 = vmatprep.subr.bf16.mxu0 0
    %1244 = vmatpush2.bf16.msra.mxu0 0
    %1245 = vmatprep.subr.bf16.mxu0 0
    %1246 = vmatpush2.bf16.msra.mxu0 0
    %1247 = vmatprep.mubr.bf16.mxu0 0
    %1248 = vmatmul.mubr.bf16.gmra.mxu0 %v1214
    %v1249 = vpop.f32.mrf.mxu0
    %v1250 = vadd.f32 %v111, %v1249
    %v1251 = vpop.f32.mrf.mxu0
    %v1252 = vpop.f32.mrf.mxu0
    %v1253 = vpop.f32.mrf.mxu0
    %1254 = vdwg.mxu0
    %1256 = vset.pattern.permute.xlu0 3
    %1257 = vperm.xlu0 %1256, %v1083
    %v1258 = vpop.permute.xlu0 %1257
    %v1260 = vmul.f32 %v1258, %v104
    %v1261 = vadd.f32 %v1250, %v1260
    %v1262 = vxor.u32 %v1261, 2147483648
    %v1263 = vmul.f32 %v1262, 1.442695
    %v1264 = vpow.pop %v1263
    %v1265 = vadd.f32 %v1264, 1.0
    %v1266 = vrcp.pop %v1265
    %v1267 = vmul.f32 1.0, %v1266
    %v1268 = vmul.f32 %v1267, 2.0
    %v1269 = vsub.f32 %v1268, 1.0
    %v1270 = vmul.f32 %v1267, %v1077
    %1272 = vrot.lane.b32.xlu0 %v1269, 126
    %v1273 = vpop.permute.xlu0 %1272
    %v1275 = vmul.f32 %v1267, %v1273
    %1277 = vrot.lane.b32.xlu0 %v1275, 1
    %v1278 = vpop.permute.xlu0 %1277
    %v1280 = vadd.f32 %v1270, %v1278
    %v1281 = vtanh.pop %v1280
    %1283 = vrot.lane.b32.xlu0 %v1281, 2
    %v1284 = vpop.permute.xlu0 %1283
    %v1286 = vmul.f32 %v1267, %v1284
    %vm1287 = vcmp.eq.s32.totalorder %v114, 4
    %1289 = vset.pattern.permute.xlu0 1
    %1290 = vperm.xlu0 %1289, %v1280
    %v1291 = vpop.permute.xlu0 %1290
    %v1293 = vsel %vm1287, %v1291, %v1090
    %1294 = vset.pattern.permute.xlu0 5
    %1295 = vperm.xlu0 %1294, %v115
    %v1296 = vpop.permute.xlu0 %1295
    %v1298 = vmul.f32 %v1296, %v60
    %v1299 = vmul.f32 %v1296, %v64
    %v1300 = vmul.f32 %v1296, %v68
    %v1301 = vmul.f32 %v1296, %v72
    %v1302 = vadd.f32 %v1298, %v82
    %v1303 = vadd.f32 %v1299, %v86
    %v1304 = vadd.f32 %v1300, %v90
    %v1305 = vadd.f32 %v1301, %v94
    %v1306 = vpack.c.bf16 %v1213, %v1213
    %1307 = vmatprep.subr.bf16.mxu0 %v460
    %1308 = vmatpush1.bf16.msra.mxu0 %v459
    %1309 = vmatprep.subr.bf16.mxu0 %v456
    %1310 = vmatpush1.bf16.msra.mxu0 %v455
    %1311 = vmatprep.subr.bf16.mxu0 %v452
    %1312 = vmatpush1.bf16.msra.mxu0 %v451
    %1313 = vmatprep.subr.bf16.mxu0 %v448
    %1314 = vmatpush1.bf16.msra.mxu0 %v447
    %1315 = vmatprep.subr.bf16.mxu0 %v444
    %1316 = vmatpush1.bf16.msra.mxu0 %v443
    %1317 = vmatprep.subr.bf16.mxu0 %v440
    %1318 = vmatpush1.bf16.msra.mxu0 %v439
    %1319 = vmatprep.subr.bf16.mxu0 %v436
    %1320 = vmatpush1.bf16.msra.mxu0 %v435
    %1321 = vmatprep.subr.bf16.mxu0 %v432
    %1322 = vmatpush1.bf16.msra.mxu0 %v431
    %1323 = vmatprep.subr.bf16.mxu0 0
    %1324 = vmatpush2.bf16.msra.mxu0 0
    %1325 = vmatprep.subr.bf16.mxu0 0
    %1326 = vmatpush2.bf16.msra.mxu0 0
    %1327 = vmatprep.subr.bf16.mxu0 0
    %1328 = vmatpush2.bf16.msra.mxu0 0
    %1329 = vmatprep.subr.bf16.mxu0 0
    %1330 = vmatpush2.bf16.msra.mxu0 0
    %1331 = vmatprep.subr.bf16.mxu0 0
    %1332 = vmatpush2.bf16.msra.mxu0 0
    %1333 = vmatprep.subr.bf16.mxu0 0
    %1334 = vmatpush2.bf16.msra.mxu0 0
    %1335 = vmatprep.subr.bf16.mxu0 0
    %1336 = vmatpush2.bf16.msra.mxu0 0
    %1337 = vmatprep.subr.bf16.mxu0 0
    %1338 = vmatpush2.bf16.msra.mxu0 0
    %1339 = vmatprep.mubr.bf16.mxu0 0
    %1340 = vmatmul.mubr.bf16.gmra.mxu0 %v1306
    %v1341 = vpop.f32.mrf.mxu0
    %v1342 = vadd.f32 0.0, %v1341
    %v1343 = vpop.f32.mrf.mxu0
    %v1344 = vadd.f32 0.0, %v1343
    %v1345 = vpop.f32.mrf.mxu0
    %v1346 = vpop.f32.mrf.mxu0
    %1347 = vdwg.mxu0
    %1348 = vmatprep.subr.bf16.mxu0 %v462
    %1349 = vmatpush1.bf16.msra.mxu0 %v461
    %1350 = vmatprep.subr.bf16.mxu0 %v458
    %1351 = vmatpush1.bf16.msra.mxu0 %v457
    %1352 = vmatprep.subr.bf16.mxu0 %v454
    %1353 = vmatpush1.bf16.msra.mxu0 %v453
    %1354 = vmatprep.subr.bf16.mxu0 %v450
    %1355 = vmatpush1.bf16.msra.mxu0 %v449
    %1356 = vmatprep.subr.bf16.mxu0 %v446
    %1357 = vmatpush1.bf16.msra.mxu0 %v445
    %1358 = vmatprep.subr.bf16.mxu0 %v442
    %1359 = vmatpush1.bf16.msra.mxu0 %v441
    %1360 = vmatprep.subr.bf16.mxu0 %v438
    %1361 = vmatpush1.bf16.msra.mxu0 %v437
    %1362 = vmatprep.subr.bf16.mxu0 %v434
    %1363 = vmatpush1.bf16.msra.mxu0 %v433
    %1364 = vmatprep.subr.bf16.mxu0 0
    %1365 = vmatpush2.bf16.msra.mxu0 0
    %1366 = vmatprep.subr.bf16.mxu0 0
    %1367 = vmatpush2.bf16.msra.mxu0 0
    %1368 = vmatprep.subr.bf16.mxu0 0
    %1369 = vmatpush2.bf16.msra.mxu0 0
    %1370 = vmatprep.subr.bf16.mxu0 0
    %1371 = vmatpush2.bf16.msra.mxu0 0
    %1372 = vmatprep.subr.bf16.mxu0 0
    %1373 = vmatpush2.bf16.msra.mxu0 0
    %1374 = vmatprep.subr.bf16.mxu0 0
    %1375 = vmatpush2.bf16.msra.mxu0 0
    %1376 = vmatprep.subr.bf16.mxu0 0
    %1377 = vmatpush2.bf16.msra.mxu0 0
    %1378 = vmatprep.subr.bf16.mxu0 0
    %1379 = vmatpush2.bf16.msra.mxu0 0
    %1380 = vmatprep.mubr.bf16.mxu0 0
    %1381 = vmatmul.mubr.bf16.gmra.mxu0 %v1306
    %v1382 = vpop.f32.mrf.mxu0
    %v1383 = vadd.f32 0.0, %v1382
    %v1384 = vpop.f32.mrf.mxu0
    %v1385 = vadd.f32 0.0, %v1384
    %v1386 = vpop.f32.mrf.mxu0
    %v1387 = vpop.f32.mrf.mxu0
    %1388 = vdwg.mxu0
    %v1389 = vadd.f32 %v1302, %v1342
    %v1390 = vadd.f32 %v1303, %v1344
    %v1391 = vadd.f32 %v1304, %v1383
    %v1392 = vadd.f32 %v1305, %v1385
    %v1393 = vxor.u32 %v1389, 2147483648
    %v1394 = vmul.f32 %v1393, 1.442695
    %v1395 = vpow.pop %v1394
    %v1396 = vadd.f32 %v1395, 1.0
    %v1397 = vrcp.pop %v1396
    %v1398 = vmul.f32 1.0, %v1397
    %v1399 = vxor.u32 %v1390, 2147483648
    %v1400 = vmul.f32 %v1399, 1.442695
    %v1401 = vpow.pop %v1400
    %v1402 = vadd.f32 %v1401, 1.0
    %v1403 = vrcp.pop %v1402
    %v1404 = vmul.f32 1.0, %v1403
    %v1405 = vtanh.pop %v1391
    %v1406 = vxor.u32 %v1392, 2147483648
    %v1407 = vmul.f32 %v1406, 1.442695
    %v1408 = vpow.pop %v1407
    %v1409 = vadd.f32 %v1408, 1.0
    %v1410 = vrcp.pop %v1409
    %v1411 = vmul.f32 1.0, %v1410
    %v1412 = vmul.f32 %v1404, %v1211
    %v1413 = vmul.f32 %v1398, %v1405
    %v1414 = vadd.f32 %v1412, %v1413
    %v1415 = vtanh.pop %v1414
    %v1416 = vmul.f32 %v1411, %v1415
    %v1417 = vpack.c.bf16 %v1414, %v1414
    %1418 = vmatprep.subr.bf16.mxu0 0
    %1419 = vmatpush1.bf16.msra.mxu0 %v209
    %1420 = vmatprep.subr.bf16.mxu0 0
    %1421 = vmatpush1.bf16.msra.mxu0 %v208
    %1422 = vmatprep.subr.bf16.mxu0 0
    %1423 = vmatpush1.bf16.msra.mxu0 %v207
    %1424 = vmatprep.subr.bf16.mxu0 0
    %1425 = vmatpush1.bf16.msra.mxu0 %v206
    %1426 = vmatprep.subr.bf16.mxu0 0
    %1427 = vmatpush1.bf16.msra.mxu0 %v205
    %1428 = vmatprep.subr.bf16.mxu0 0
    %1429 = vmatpush1.bf16.msra.mxu0 %v204
    %1430 = vmatprep.subr.bf16.mxu0 0
    %1431 = vmatpush1.bf16.msra.mxu0 %v203
    %1432 = vmatprep.subr.bf16.mxu0 0
    %1433 = vmatpush1.bf16.msra.mxu0 %v202
    %1434 = vmatprep.subr.bf16.mxu0 0
    %1435 = vmatpush2.bf16.msra.mxu0 0
    %1436 = vmatprep.subr.bf16.mxu0 0
    %1437 = vmatpush2.bf16.msra.mxu0 0
    %1438 = vmatprep.subr.bf16.mxu0 0
    %1439 = vmatpush2.bf16.msra.mxu0 0
    %1440 = vmatprep.subr.bf16.mxu0 0
    %1441 = vmatpush2.bf16.msra.mxu0 0
    %1442 = vmatprep.subr.bf16.mxu0 0
    %1443 = vmatpush2.bf16.msra.mxu0 0
    %1444 = vmatprep.subr.bf16.mxu0 0
    %1445 = vmatpush2.bf16.msra.mxu0 0
    %1446 = vmatprep.subr.bf16.mxu0 0
    %1447 = vmatpush2.bf16.msra.mxu0 0
    %1448 = vmatprep.subr.bf16.mxu0 0
    %1449 = vmatpush2.bf16.msra.mxu0 0
    %1450 = vmatprep.mubr.bf16.mxu0 0
    %1451 = vmatmul.mubr.bf16.gmra.mxu0 %v1417
    %v1452 = vpop.f32.mrf.mxu0
    %v1453 = vadd.f32 %v111, %v1452
    %v1454 = vpop.f32.mrf.mxu0
    %v1455 = vpop.f32.mrf.mxu0
    %v1456 = vpop.f32.mrf.mxu0
    %1457 = vdwg.mxu0
    %1459 = vset.pattern.permute.xlu0 3
    %1460 = vperm.xlu0 %1459, %v1286
    %v1461 = vpop.permute.xlu0 %1460
    %v1463 = vmul.f32 %v1461, %v104
    %v1464 = vadd.f32 %v1453, %v1463
    %v1465 = vxor.u32 %v1464, 2147483648
    %v1466 = vmul.f32 %v1465, 1.442695
    %v1467 = vpow.pop %v1466
    %v1468 = vadd.f32 %v1467, 1.0
    %v1469 = vrcp.pop %v1468
    %v1470 = vmul.f32 1.0, %v1469
    %v1471 = vmul.f32 %v1470, 2.0
    %v1472 = vsub.f32 %v1471, 1.0
    %v1473 = vmul.f32 %v1470, %v1280
    %1475 = vrot.lane.b32.xlu0 %v1472, 126
    %v1476 = vpop.permute.xlu0 %1475
    %v1478 = vmul.f32 %v1470, %v1476
    %1480 = vrot.lane.b32.xlu0 %v1478, 1
    %v1481 = vpop.permute.xlu0 %1480
    %v1483 = vadd.f32 %v1473, %v1481
    %v1484 = vtanh.pop %v1483
    %1486 = vrot.lane.b32.xlu0 %v1484, 2
    %v1487 = vpop.permute.xlu0 %1486
    %v1489 = vmul.f32 %v1470, %v1487
    %vm1490 = vcmp.eq.s32.totalorder %v114, 5
    %1492 = vset.pattern.permute.xlu0 1
    %1493 = vperm.xlu0 %1492, %v1483
    %v1494 = vpop.permute.xlu0 %1493
    %v1496 = vsel %vm1490, %v1494, %v1293
    %1497 = vset.pattern.permute.xlu0 6
    %1498 = vperm.xlu0 %1497, %v115
    %v1499 = vpop.permute.xlu0 %1498
    %v1501 = vmul.f32 %v1499, %v60
    %v1502 = vmul.f32 %v1499, %v64
    %v1503 = vmul.f32 %v1499, %v68
    %v1504 = vmul.f32 %v1499, %v72
    %v1505 = vadd.f32 %v1501, %v82
    %v1506 = vadd.f32 %v1502, %v86
    %v1507 = vadd.f32 %v1503, %v90
    %v1508 = vadd.f32 %v1504, %v94
    %v1509 = vpack.c.bf16 %v1416, %v1416
    %1510 = vmatprep.subr.bf16.mxu0 %v460
    %1511 = vmatpush1.bf16.msra.mxu0 %v459
    %1512 = vmatprep.subr.bf16.mxu0 %v456
    %1513 = vmatpush1.bf16.msra.mxu0 %v455
    %1514 = vmatprep.subr.bf16.mxu0 %v452
    %1515 = vmatpush1.bf16.msra.mxu0 %v451
    %1516 = vmatprep.subr.bf16.mxu0 %v448
    %1517 = vmatpush1.bf16.msra.mxu0 %v447
    %1518 = vmatprep.subr.bf16.mxu0 %v444
    %1519 = vmatpush1.bf16.msra.mxu0 %v443
    %1520 = vmatprep.subr.bf16.mxu0 %v440
    %1521 = vmatpush1.bf16.msra.mxu0 %v439
    %1522 = vmatprep.subr.bf16.mxu0 %v436
    %1523 = vmatpush1.bf16.msra.mxu0 %v435
    %1524 = vmatprep.subr.bf16.mxu0 %v432
    %1525 = vmatpush1.bf16.msra.mxu0 %v431
    %1526 = vmatprep.subr.bf16.mxu0 0
    %1527 = vmatpush2.bf16.msra.mxu0 0
    %1528 = vmatprep.subr.bf16.mxu0 0
    %1529 = vmatpush2.bf16.msra.mxu0 0
    %1530 = vmatprep.subr.bf16.mxu0 0
    %1531 = vmatpush2.bf16.msra.mxu0 0
    %1532 = vmatprep.subr.bf16.mxu0 0
    %1533 = vmatpush2.bf16.msra.mxu0 0
    %1534 = vmatprep.subr.bf16.mxu0 0
    %1535 = vmatpush2.bf16.msra.mxu0 0
    %1536 = vmatprep.subr.bf16.mxu0 0
    %1537 = vmatpush2.bf16.msra.mxu0 0
    %1538 = vmatprep.subr.bf16.mxu0 0
    %1539 = vmatpush2.bf16.msra.mxu0 0
    %1540 = vmatprep.subr.bf16.mxu0 0
    %1541 = vmatpush2.bf16.msra.mxu0 0
    %1542 = vmatprep.mubr.bf16.mxu0 0
    %1543 = vmatmul.mubr.bf16.gmra.mxu0 %v1509
    %v1544 = vpop.f32.mrf.mxu0
    %v1545 = vadd.f32 0.0, %v1544
    %v1546 = vpop.f32.mrf.mxu0
    %v1547 = vadd.f32 0.0, %v1546
    %v1548 = vpop.f32.mrf.mxu0
    %v1549 = vpop.f32.mrf.mxu0
    %1550 = vdwg.mxu0
    %1551 = vmatprep.subr.bf16.mxu0 %v462
    %1552 = vmatpush1.bf16.msra.mxu0 %v461
    %1553 = vmatprep.subr.bf16.mxu0 %v458
    %1554 = vmatpush1.bf16.msra.mxu0 %v457
    %1555 = vmatprep.subr.bf16.mxu0 %v454
    %1556 = vmatpush1.bf16.msra.mxu0 %v453
    %1557 = vmatprep.subr.bf16.mxu0 %v450
    %1558 = vmatpush1.bf16.msra.mxu0 %v449
    %1559 = vmatprep.subr.bf16.mxu0 %v446
    %1560 = vmatpush1.bf16.msra.mxu0 %v445
    %1561 = vmatprep.subr.bf16.mxu0 %v442
    %1562 = vmatpush1.bf16.msra.mxu0 %v441
    %1563 = vmatprep.subr.bf16.mxu0 %v438
    %1564 = vmatpush1.bf16.msra.mxu0 %v437
    %1565 = vmatprep.subr.bf16.mxu0 %v434
    %1566 = vmatpush1.bf16.msra.mxu0 %v433
    %1567 = vmatprep.subr.bf16.mxu0 0
    %1568 = vmatpush2.bf16.msra.mxu0 0
    %1569 = vmatprep.subr.bf16.mxu0 0
    %1570 = vmatpush2.bf16.msra.mxu0 0
    %1571 = vmatprep.subr.bf16.mxu0 0
    %1572 = vmatpush2.bf16.msra.mxu0 0
    %1573 = vmatprep.subr.bf16.mxu0 0
    %1574 = vmatpush2.bf16.msra.mxu0 0
    %1575 = vmatprep.subr.bf16.mxu0 0
    %1576 = vmatpush2.bf16.msra.mxu0 0
    %1577 = vmatprep.subr.bf16.mxu0 0
    %1578 = vmatpush2.bf16.msra.mxu0 0
    %1579 = vmatprep.subr.bf16.mxu0 0
    %1580 = vmatpush2.bf16.msra.mxu0 0
    %1581 = vmatprep.subr.bf16.mxu0 0
    %1582 = vmatpush2.bf16.msra.mxu0 0
    %1583 = vmatprep.mubr.bf16.mxu0 0
    %1584 = vmatmul.mubr.bf16.gmra.mxu0 %v1509
    %v1585 = vpop.f32.mrf.mxu0
    %v1586 = vadd.f32 0.0, %v1585
    %v1587 = vpop.f32.mrf.mxu0
    %v1588 = vadd.f32 0.0, %v1587
    %v1589 = vpop.f32.mrf.mxu0
    %v1590 = vpop.f32.mrf.mxu0
    %1591 = vdwg.mxu0
    %v1592 = vadd.f32 %v1505, %v1545
    %v1593 = vadd.f32 %v1506, %v1547
    %v1594 = vadd.f32 %v1507, %v1586
    %v1595 = vadd.f32 %v1508, %v1588
    %v1596 = vxor.u32 %v1592, 2147483648
    %v1597 = vmul.f32 %v1596, 1.442695
    %v1598 = vpow.pop %v1597
    %v1599 = vadd.f32 %v1598, 1.0
    %v1600 = vrcp.pop %v1599
    %v1601 = vmul.f32 1.0, %v1600
    %v1602 = vxor.u32 %v1593, 2147483648
    %v1603 = vmul.f32 %v1602, 1.442695
    %v1604 = vpow.pop %v1603
    %v1605 = vadd.f32 %v1604, 1.0
    %v1606 = vrcp.pop %v1605
    %v1607 = vmul.f32 1.0, %v1606
    %v1608 = vtanh.pop %v1594
    %v1609 = vxor.u32 %v1595, 2147483648
    %v1610 = vmul.f32 %v1609, 1.442695
    %v1611 = vpow.pop %v1610
    %v1612 = vadd.f32 %v1611, 1.0
    %v1613 = vrcp.pop %v1612
    %v1614 = vmul.f32 1.0, %v1613
    %v1615 = vmul.f32 %v1607, %v1414
    %v1616 = vmul.f32 %v1601, %v1608
    %v1617 = vadd.f32 %v1615, %v1616
    %v1618 = vtanh.pop %v1617
    %v1619 = vmul.f32 %v1614, %v1618
    %v1620 = vpack.c.bf16 %v1617, %v1617
    %1621 = vmatprep.subr.bf16.mxu0 0
    %1622 = vmatpush1.bf16.msra.mxu0 %v209
    %1623 = vmatprep.subr.bf16.mxu0 0
    %1624 = vmatpush1.bf16.msra.mxu0 %v208
    %1625 = vmatprep.subr.bf16.mxu0 0
    %1626 = vmatpush1.bf16.msra.mxu0 %v207
    %1627 = vmatprep.subr.bf16.mxu0 0
    %1628 = vmatpush1.bf16.msra.mxu0 %v206
    %1629 = vmatprep.subr.bf16.mxu0 0
    %1630 = vmatpush1.bf16.msra.mxu0 %v205
    %1631 = vmatprep.subr.bf16.mxu0 0
    %1632 = vmatpush1.bf16.msra.mxu0 %v204
    %1633 = vmatprep.subr.bf16.mxu0 0
    %1634 = vmatpush1.bf16.msra.mxu0 %v203
    %1635 = vmatprep.subr.bf16.mxu0 0
    %1636 = vmatpush1.bf16.msra.mxu0 %v202
    %1637 = vmatprep.subr.bf16.mxu0 0
    %1638 = vmatpush2.bf16.msra.mxu0 0
    %1639 = vmatprep.subr.bf16.mxu0 0
    %1640 = vmatpush2.bf16.msra.mxu0 0
    %1641 = vmatprep.subr.bf16.mxu0 0
    %1642 = vmatpush2.bf16.msra.mxu0 0
    %1643 = vmatprep.subr.bf16.mxu0 0
    %1644 = vmatpush2.bf16.msra.mxu0 0
    %1645 = vmatprep.subr.bf16.mxu0 0
    %1646 = vmatpush2.bf16.msra.mxu0 0
    %1647 = vmatprep.subr.bf16.mxu0 0
    %1648 = vmatpush2.bf16.msra.mxu0 0
    %1649 = vmatprep.subr.bf16.mxu0 0
    %1650 = vmatpush2.bf16.msra.mxu0 0
    %1651 = vmatprep.subr.bf16.mxu0 0
    %1652 = vmatpush2.bf16.msra.mxu0 0
    %1653 = vmatprep.mubr.bf16.mxu0 0
    %1654 = vmatmul.mubr.bf16.gmra.mxu0 %v1620
    %v1655 = vpop.f32.mrf.mxu0
    %v1656 = vadd.f32 %v111, %v1655
    %v1657 = vpop.f32.mrf.mxu0
    %v1658 = vpop.f32.mrf.mxu0
    %v1659 = vpop.f32.mrf.mxu0
    %1660 = vdwg.mxu0
    %1662 = vset.pattern.permute.xlu0 3
    %1663 = vperm.xlu0 %1662, %v1489
    %v1664 = vpop.permute.xlu0 %1663
    %v1666 = vmul.f32 %v1664, %v104
    %v1667 = vadd.f32 %v1656, %v1666
    %v1668 = vxor.u32 %v1667, 2147483648
    %v1669 = vmul.f32 %v1668, 1.442695
    %v1670 = vpow.pop %v1669
    %v1671 = vadd.f32 %v1670, 1.0
    %v1672 = vrcp.pop %v1671
    %v1673 = vmul.f32 1.0, %v1672
    %v1674 = vmul.f32 %v1673, 2.0
    %v1675 = vsub.f32 %v1674, 1.0
    %v1676 = vmul.f32 %v1673, %v1483
    %1678 = vrot.lane.b32.xlu0 %v1675, 126
    %v1679 = vpop.permute.xlu0 %1678
    %v1681 = vmul.f32 %v1673, %v1679
    %1683 = vrot.lane.b32.xlu0 %v1681, 1
    %v1684 = vpop.permute.xlu0 %1683
    %v1686 = vadd.f32 %v1676, %v1684
    %v1687 = vtanh.pop %v1686
    %1689 = vrot.lane.b32.xlu0 %v1687, 2
    %v1690 = vpop.permute.xlu0 %1689
    %v1692 = vmul.f32 %v1673, %v1690
    %vm1693 = vcmp.eq.s32.totalorder %v114, 6
    %1695 = vset.pattern.permute.xlu0 1
    %1696 = vperm.xlu0 %1695, %v1686
    %v1697 = vpop.permute.xlu0 %1696
    %v1699 = vsel %vm1693, %v1697, %v1496
    %1700 = vset.pattern.permute.xlu0 7
    %1701 = vperm.xlu0 %1700, %v115
    %v1702 = vpop.permute.xlu0 %1701
    %v1704 = vmul.f32 %v1702, %v60
    %v1705 = vmul.f32 %v1702, %v64
    %v1706 = vmul.f32 %v1702, %v68
    %v1707 = vmul.f32 %v1702, %v72
    %v1708 = vadd.f32 %v1704, %v82
    %v1709 = vadd.f32 %v1705, %v86
    %v1710 = vadd.f32 %v1706, %v90
    %v1711 = vadd.f32 %v1707, %v94
    %v1712 = vpack.c.bf16 %v1619, %v1619
    %1713 = vmatprep.subr.bf16.mxu0 %v460
    %1714 = vmatpush1.bf16.msra.mxu0 %v459
    %1715 = vmatprep.subr.bf16.mxu0 %v456
    %1716 = vmatpush1.bf16.msra.mxu0 %v455
    %1717 = vmatprep.subr.bf16.mxu0 %v452
    %1718 = vmatpush1.bf16.msra.mxu0 %v451
    %1719 = vmatprep.subr.bf16.mxu0 %v448
    %1720 = vmatpush1.bf16.msra.mxu0 %v447
    %1721 = vmatprep.subr.bf16.mxu0 %v444
    %1722 = vmatpush1.bf16.msra.mxu0 %v443
    %1723 = vmatprep.subr.bf16.mxu0 %v440
    %1724 = vmatpush1.bf16.msra.mxu0 %v439
    %1725 = vmatprep.subr.bf16.mxu0 %v436
    %1726 = vmatpush1.bf16.msra.mxu0 %v435
    %1727 = vmatprep.subr.bf16.mxu0 %v432
    %1728 = vmatpush1.bf16.msra.mxu0 %v431
    %1729 = vmatprep.subr.bf16.mxu0 0
    %1730 = vmatpush2.bf16.msra.mxu0 0
    %1731 = vmatprep.subr.bf16.mxu0 0
    %1732 = vmatpush2.bf16.msra.mxu0 0
    %1733 = vmatprep.subr.bf16.mxu0 0
    %1734 = vmatpush2.bf16.msra.mxu0 0
    %1735 = vmatprep.subr.bf16.mxu0 0
    %1736 = vmatpush2.bf16.msra.mxu0 0
    %1737 = vmatprep.subr.bf16.mxu0 0
    %1738 = vmatpush2.bf16.msra.mxu0 0
    %1739 = vmatprep.subr.bf16.mxu0 0
    %1740 = vmatpush2.bf16.msra.mxu0 0
    %1741 = vmatprep.subr.bf16.mxu0 0
    %1742 = vmatpush2.bf16.msra.mxu0 0
    %1743 = vmatprep.subr.bf16.mxu0 0
    %1744 = vmatpush2.bf16.msra.mxu0 0
    %1745 = vmatprep.mubr.bf16.mxu0 0
    %1746 = vmatmul.mubr.bf16.gmra.mxu0 %v1712
    %v1747 = vpop.f32.mrf.mxu0
    %v1748 = vadd.f32 0.0, %v1747
    %v1749 = vpop.f32.mrf.mxu0
    %v1750 = vadd.f32 0.0, %v1749
    %v1751 = vpop.f32.mrf.mxu0
    %v1752 = vpop.f32.mrf.mxu0
    %1753 = vdwg.mxu0
    %1754 = vmatprep.subr.bf16.mxu0 %v462
    %1755 = vmatpush1.bf16.msra.mxu0 %v461
    %1756 = vmatprep.subr.bf16.mxu0 %v458
    %1757 = vmatpush1.bf16.msra.mxu0 %v457
    %1758 = vmatprep.subr.bf16.mxu0 %v454
    %1759 = vmatpush1.bf16.msra.mxu0 %v453
    %1760 = vmatprep.subr.bf16.mxu0 %v450
    %1761 = vmatpush1.bf16.msra.mxu0 %v449
    %1762 = vmatprep.subr.bf16.mxu0 %v446
    %1763 = vmatpush1.bf16.msra.mxu0 %v445
    %1764 = vmatprep.subr.bf16.mxu0 %v442
    %1765 = vmatpush1.bf16.msra.mxu0 %v441
    %1766 = vmatprep.subr.bf16.mxu0 %v438
    %1767 = vmatpush1.bf16.msra.mxu0 %v437
    %1768 = vmatprep.subr.bf16.mxu0 %v434
    %1769 = vmatpush1.bf16.msra.mxu0 %v433
    %1770 = vmatprep.subr.bf16.mxu0 0
    %1771 = vmatpush2.bf16.msra.mxu0 0
    %1772 = vmatprep.subr.bf16.mxu0 0
    %1773 = vmatpush2.bf16.msra.mxu0 0
    %1774 = vmatprep.subr.bf16.mxu0 0
    %1775 = vmatpush2.bf16.msra.mxu0 0
    %1776 = vmatprep.subr.bf16.mxu0 0
    %1777 = vmatpush2.bf16.msra.mxu0 0
    %1778 = vmatprep.subr.bf16.mxu0 0
    %1779 = vmatpush2.bf16.msra.mxu0 0
    %1780 = vmatprep.subr.bf16.mxu0 0
    %1781 = vmatpush2.bf16.msra.mxu0 0
    %1782 = vmatprep.subr.bf16.mxu0 0
    %1783 = vmatpush2.bf16.msra.mxu0 0
    %1784 = vmatprep.subr.bf16.mxu0 0
    %1785 = vmatpush2.bf16.msra.mxu0 0
    %1786 = vmatprep.mubr.bf16.mxu0 0
    %1787 = vmatmul.mubr.bf16.gmra.mxu0 %v1712
    %v1788 = vpop.f32.mrf.mxu0
    %v1789 = vadd.f32 0.0, %v1788
    %v1790 = vpop.f32.mrf.mxu0
    %v1791 = vadd.f32 0.0, %v1790
    %v1792 = vpop.f32.mrf.mxu0
    %v1793 = vpop.f32.mrf.mxu0
    %1794 = vdwg.mxu0
    %v1795 = vadd.f32 %v1708, %v1748
    %v1796 = vadd.f32 %v1709, %v1750
    %v1797 = vadd.f32 %v1710, %v1789
    %v1798 = vadd.f32 %v1711, %v1791
    %v1799 = vxor.u32 %v1795, 2147483648
    %v1800 = vmul.f32 %v1799, 1.442695
    %v1801 = vpow.pop %v1800
    %v1802 = vadd.f32 %v1801, 1.0
    %v1803 = vrcp.pop %v1802
    %v1804 = vmul.f32 1.0, %v1803
    %v1805 = vxor.u32 %v1796, 2147483648
    %v1806 = vmul.f32 %v1805, 1.442695
    %v1807 = vpow.pop %v1806
    %v1808 = vadd.f32 %v1807, 1.0
    %v1809 = vrcp.pop %v1808
    %v1810 = vmul.f32 1.0, %v1809
    %v1811 = vtanh.pop %v1797
    %v1812 = vxor.u32 %v1798, 2147483648
    %v1813 = vmul.f32 %v1812, 1.442695
    %v1814 = vpow.pop %v1813
    %v1815 = vadd.f32 %v1814, 1.0
    %v1816 = vrcp.pop %v1815
    %v1817 = vmul.f32 1.0, %v1816
    %v1818 = vmul.f32 %v1810, %v1617
    %v1819 = vmul.f32 %v1804, %v1811
    %v1820 = vadd.f32 %v1818, %v1819
    %v1821 = vtanh.pop %v1820
    %v1822 = vmul.f32 %v1817, %v1821
    %v1823 = vpack.c.bf16 %v1820, %v1820
    %1824 = vmatprep.subr.bf16.mxu0 0
    %1825 = vmatpush1.bf16.msra.mxu0 %v209
    %1826 = vmatprep.subr.bf16.mxu0 0
    %1827 = vmatpush1.bf16.msra.mxu0 %v208
    %1828 = vmatprep.subr.bf16.mxu0 0
    %1829 = vmatpush1.bf16.msra.mxu0 %v207
    %1830 = vmatprep.subr.bf16.mxu0 0
    %1831 = vmatpush1.bf16.msra.mxu0 %v206
    %1832 = vmatprep.subr.bf16.mxu0 0
    %1833 = vmatpush1.bf16.msra.mxu0 %v205
    %1834 = vmatprep.subr.bf16.mxu0 0
    %1835 = vmatpush1.bf16.msra.mxu0 %v204
    %1836 = vmatprep.subr.bf16.mxu0 0
    %1837 = vmatpush1.bf16.msra.mxu0 %v203
    %1838 = vmatprep.subr.bf16.mxu0 0
    %1839 = vmatpush1.bf16.msra.mxu0 %v202
    %1840 = vmatprep.subr.bf16.mxu0 0
    %1841 = vmatpush2.bf16.msra.mxu0 0
    %1842 = vmatprep.subr.bf16.mxu0 0
    %1843 = vmatpush2.bf16.msra.mxu0 0
    %1844 = vmatprep.subr.bf16.mxu0 0
    %1845 = vmatpush2.bf16.msra.mxu0 0
    %1846 = vmatprep.subr.bf16.mxu0 0
    %1847 = vmatpush2.bf16.msra.mxu0 0
    %1848 = vmatprep.subr.bf16.mxu0 0
    %1849 = vmatpush2.bf16.msra.mxu0 0
    %1850 = vmatprep.subr.bf16.mxu0 0
    %1851 = vmatpush2.bf16.msra.mxu0 0
    %1852 = vmatprep.subr.bf16.mxu0 0
    %1853 = vmatpush2.bf16.msra.mxu0 0
    %1854 = vmatprep.subr.bf16.mxu0 0
    %1855 = vmatpush2.bf16.msra.mxu0 0
    %1856 = vmatprep.mubr.bf16.mxu0 0
    %1857 = vmatmul.mubr.bf16.gmra.mxu0 %v1823
    %v1858 = vpop.f32.mrf.mxu0
    %v1859 = vadd.f32 %v111, %v1858
    %v1860 = vpop.f32.mrf.mxu0
    %v1861 = vpop.f32.mrf.mxu0
    %v1862 = vpop.f32.mrf.mxu0
    %1863 = vdwg.mxu0
    %1865 = vset.pattern.permute.xlu0 3
    %1866 = vperm.xlu0 %1865, %v1692
    %v1867 = vpop.permute.xlu0 %1866
    %v1869 = vmul.f32 %v1867, %v104
    %v1870 = vadd.f32 %v1859, %v1869
    %v1871 = vxor.u32 %v1870, 2147483648
    %v1872 = vmul.f32 %v1871, 1.442695
    %v1873 = vpow.pop %v1872
    %v1874 = vadd.f32 %v1873, 1.0
    %v1875 = vrcp.pop %v1874
    %v1876 = vmul.f32 1.0, %v1875
    %v1877 = vmul.f32 %v1876, 2.0
    %v1878 = vsub.f32 %v1877, 1.0
    %v1879 = vmul.f32 %v1876, %v1686
    %1881 = vrot.lane.b32.xlu0 %v1878, 126
    %v1882 = vpop.permute.xlu0 %1881
    %v1884 = vmul.f32 %v1876, %v1882
    %1886 = vrot.lane.b32.xlu0 %v1884, 1
    %v1887 = vpop.permute.xlu0 %1886
    %v1889 = vadd.f32 %v1879, %v1887
    %v1890 = vtanh.pop %v1889
    %1892 = vrot.lane.b32.xlu0 %v1890, 2
    %v1893 = vpop.permute.xlu0 %1892
    %v1895 = vmul.f32 %v1876, %v1893
    %vm1896 = vcmp.eq.s32.totalorder %v114, 7
    %1898 = vset.pattern.permute.xlu0 1
    %1899 = vperm.xlu0 %1898, %v1889
    %v1900 = vpop.permute.xlu0 %1899
    %v1902 = vsel %vm1896, %v1900, %v1699
    %v1903 = vmul.f32 %v1900, %v60
    %v1904 = vmul.f32 %v1900, %v64
    %v1905 = vmul.f32 %v1900, %v68
    %v1906 = vmul.f32 %v1900, %v72
    %v1907 = vadd.f32 %v1903, %v82
    %v1908 = vadd.f32 %v1904, %v86
    %v1909 = vadd.f32 %v1905, %v90
    %v1910 = vadd.f32 %v1906, %v94
    %v1911 = vpack.c.bf16 %v1822, %v1822
    %1912 = vmatprep.subr.bf16.mxu0 %v460
    %1913 = vmatpush1.bf16.msra.mxu0 %v459
    %1914 = vmatprep.subr.bf16.mxu0 %v456
    %1915 = vmatpush1.bf16.msra.mxu0 %v455
    %1916 = vmatprep.subr.bf16.mxu0 %v452
    %1917 = vmatpush1.bf16.msra.mxu0 %v451
    %1918 = vmatprep.subr.bf16.mxu0 %v448
    %1919 = vmatpush1.bf16.msra.mxu0 %v447
    %1920 = vmatprep.subr.bf16.mxu0 %v444
    %1921 = vmatpush1.bf16.msra.mxu0 %v443
    %1922 = vmatprep.subr.bf16.mxu0 %v440
    %1923 = vmatpush1.bf16.msra.mxu0 %v439
    %1924 = vmatprep.subr.bf16.mxu0 %v436
    %1925 = vmatpush1.bf16.msra.mxu0 %v435
    %1926 = vmatprep.subr.bf16.mxu0 %v432
    %1927 = vmatpush1.bf16.msra.mxu0 %v431
    %1928 = vmatprep.subr.bf16.mxu0 0
    %1929 = vmatpush2.bf16.msra.mxu0 0
    %1930 = vmatprep.subr.bf16.mxu0 0
    %1931 = vmatpush2.bf16.msra.mxu0 0
    %1932 = vmatprep.subr.bf16.mxu0 0
    %1933 = vmatpush2.bf16.msra.mxu0 0
    %1934 = vmatprep.subr.bf16.mxu0 0
    %1935 = vmatpush2.bf16.msra.mxu0 0
    %1936 = vmatprep.subr.bf16.mxu0 0
    %1937 = vmatpush2.bf16.msra.mxu0 0
    %1938 = vmatprep.subr.bf16.mxu0 0
    %1939 = vmatpush2.bf16.msra.mxu0 0
    %1940 = vmatprep.subr.bf16.mxu0 0
    %1941 = vmatpush2.bf16.msra.mxu0 0
    %1942 = vmatprep.subr.bf16.mxu0 0
    %1943 = vmatpush2.bf16.msra.mxu0 0
    %1944 = vmatprep.mubr.bf16.mxu0 0
    %1945 = vmatmul.mubr.bf16.gmra.mxu0 %v1911
    %v1946 = vpop.f32.mrf.mxu0
    %v1947 = vadd.f32 0.0, %v1946
    %v1948 = vpop.f32.mrf.mxu0
    %v1949 = vadd.f32 0.0, %v1948
    %v1950 = vpop.f32.mrf.mxu0
    %v1951 = vpop.f32.mrf.mxu0
    %1952 = vdwg.mxu0
    %1953 = vmatprep.subr.bf16.mxu0 %v462
    %1954 = vmatpush1.bf16.msra.mxu0 %v461
    %1955 = vmatprep.subr.bf16.mxu0 %v458
    %1956 = vmatpush1.bf16.msra.mxu0 %v457
    %1957 = vmatprep.subr.bf16.mxu0 %v454
    %1958 = vmatpush1.bf16.msra.mxu0 %v453
    %1959 = vmatprep.subr.bf16.mxu0 %v450
    %1960 = vmatpush1.bf16.msra.mxu0 %v449
    %1961 = vmatprep.subr.bf16.mxu0 %v446
    %1962 = vmatpush1.bf16.msra.mxu0 %v445
    %1963 = vmatprep.subr.bf16.mxu0 %v442
    %1964 = vmatpush1.bf16.msra.mxu0 %v441
    %1965 = vmatprep.subr.bf16.mxu0 %v438
    %1966 = vmatpush1.bf16.msra.mxu0 %v437
    %1967 = vmatprep.subr.bf16.mxu0 %v434
    %1968 = vmatpush1.bf16.msra.mxu0 %v433
    %1969 = vmatprep.subr.bf16.mxu0 0
    %1970 = vmatpush2.bf16.msra.mxu0 0
    %1971 = vmatprep.subr.bf16.mxu0 0
    %1972 = vmatpush2.bf16.msra.mxu0 0
    %1973 = vmatprep.subr.bf16.mxu0 0
    %1974 = vmatpush2.bf16.msra.mxu0 0
    %1975 = vmatprep.subr.bf16.mxu0 0
    %1976 = vmatpush2.bf16.msra.mxu0 0
    %1977 = vmatprep.subr.bf16.mxu0 0
    %1978 = vmatpush2.bf16.msra.mxu0 0
    %1979 = vmatprep.subr.bf16.mxu0 0
    %1980 = vmatpush2.bf16.msra.mxu0 0
    %1981 = vmatprep.subr.bf16.mxu0 0
    %1982 = vmatpush2.bf16.msra.mxu0 0
    %1983 = vmatprep.subr.bf16.mxu0 0
    %1984 = vmatpush2.bf16.msra.mxu0 0
    %1985 = vmatprep.mubr.bf16.mxu0 0
    %1986 = vmatmul.mubr.bf16.gmra.mxu0 %v1911
    %v1987 = vpop.f32.mrf.mxu0
    %v1988 = vadd.f32 0.0, %v1987
    %v1989 = vpop.f32.mrf.mxu0
    %v1990 = vadd.f32 0.0, %v1989
    %v1991 = vpop.f32.mrf.mxu0
    %v1992 = vpop.f32.mrf.mxu0
    %1993 = vdwg.mxu0
    %v1994 = vadd.f32 %v1907, %v1947
    %v1995 = vadd.f32 %v1908, %v1949
    %v1996 = vadd.f32 %v1909, %v1988
    %v1997 = vadd.f32 %v1910, %v1990
    %v1998 = vxor.u32 %v1994, 2147483648
    %v1999 = vmul.f32 %v1998, 1.442695
    %v2000 = vpow.pop %v1999
    %v2001 = vadd.f32 %v2000, 1.0
    %v2002 = vrcp.pop %v2001
    %v2003 = vmul.f32 1.0, %v2002
    %v2004 = vxor.u32 %v1995, 2147483648
    %v2005 = vmul.f32 %v2004, 1.442695
    %v2006 = vpow.pop %v2005
    %v2007 = vadd.f32 %v2006, 1.0
    %v2008 = vrcp.pop %v2007
    %v2009 = vmul.f32 1.0, %v2008
    %v2010 = vtanh.pop %v1996
    %v2011 = vxor.u32 %v1997, 2147483648
    %v2012 = vmul.f32 %v2011, 1.442695
    %v2013 = vpow.pop %v2012
    %v2014 = vadd.f32 %v2013, 1.0
    %v2015 = vrcp.pop %v2014
    %v2016 = vmul.f32 1.0, %v2015
    %v2017 = vmul.f32 %v2009, %v1820
    %v2018 = vmul.f32 %v2003, %v2010
    %v2019 = vadd.f32 %v2017, %v2018
    %v2020 = vtanh.pop %v2019
    %v2021 = vmul.f32 %v2016, %v2020
    %v2022 = vpack.c.bf16 %v2019, %v2019
    %2023 = vmatprep.subr.bf16.mxu0 0
    %2024 = vmatpush1.bf16.msra.mxu0 %v209
    %2025 = vmatprep.subr.bf16.mxu0 0
    %2026 = vmatpush1.bf16.msra.mxu0 %v208
    %2027 = vmatprep.subr.bf16.mxu0 0
    %2028 = vmatpush1.bf16.msra.mxu0 %v207
    %2029 = vmatprep.subr.bf16.mxu0 0
    %2030 = vmatpush1.bf16.msra.mxu0 %v206
    %2031 = vmatprep.subr.bf16.mxu0 0
    %2032 = vmatpush1.bf16.msra.mxu0 %v205
    %2033 = vmatprep.subr.bf16.mxu0 0
    %2034 = vmatpush1.bf16.msra.mxu0 %v204
    %2035 = vmatprep.subr.bf16.mxu0 0
    %2036 = vmatpush1.bf16.msra.mxu0 %v203
    %2037 = vmatprep.subr.bf16.mxu0 0
    %2038 = vmatpush1.bf16.msra.mxu0 %v202
    %2039 = vmatprep.subr.bf16.mxu0 0
    %2040 = vmatpush2.bf16.msra.mxu0 0
    %2041 = vmatprep.subr.bf16.mxu0 0
    %2042 = vmatpush2.bf16.msra.mxu0 0
    %2043 = vmatprep.subr.bf16.mxu0 0
    %2044 = vmatpush2.bf16.msra.mxu0 0
    %2045 = vmatprep.subr.bf16.mxu0 0
    %2046 = vmatpush2.bf16.msra.mxu0 0
    %2047 = vmatprep.subr.bf16.mxu0 0
    %2048 = vmatpush2.bf16.msra.mxu0 0
    %2049 = vmatprep.subr.bf16.mxu0 0
    %2050 = vmatpush2.bf16.msra.mxu0 0
    %2051 = vmatprep.subr.bf16.mxu0 0
    %2052 = vmatpush2.bf16.msra.mxu0 0
    %2053 = vmatprep.subr.bf16.mxu0 0
    %2054 = vmatpush2.bf16.msra.mxu0 0
    %2055 = vmatprep.mubr.bf16.mxu0 0
    %2056 = vmatmul.mubr.bf16.gmra.mxu0 %v2022
    %v2057 = vpop.f32.mrf.mxu0
    %v2058 = vadd.f32 %v111, %v2057
    %v2059 = vpop.f32.mrf.mxu0
    %v2060 = vpop.f32.mrf.mxu0
    %v2061 = vpop.f32.mrf.mxu0
    %2062 = vdwg.mxu0
    %2064 = vset.pattern.permute.xlu0 3
    %2065 = vperm.xlu0 %2064, %v1895
    %v2066 = vpop.permute.xlu0 %2065
    %v2068 = vmul.f32 %v2066, %v104
    %v2069 = vadd.f32 %v2058, %v2068
    %v2070 = vxor.u32 %v2069, 2147483648
    %v2071 = vmul.f32 %v2070, 1.442695
    %v2072 = vpow.pop %v2071
    %v2073 = vadd.f32 %v2072, 1.0
    %v2074 = vrcp.pop %v2073
    %v2075 = vmul.f32 1.0, %v2074
    %v2076 = vmul.f32 %v2075, 2.0
    %v2077 = vsub.f32 %v2076, 1.0
    %v2078 = vmul.f32 %v2075, %v1889
    %2080 = vrot.lane.b32.xlu0 %v2077, 126
    %v2081 = vpop.permute.xlu0 %2080
    %v2083 = vmul.f32 %v2075, %v2081
    %2085 = vrot.lane.b32.xlu0 %v2083, 1
    %v2086 = vpop.permute.xlu0 %2085
    %v2088 = vadd.f32 %v2078, %v2086
    %v2089 = vtanh.pop %v2088
    %2091 = vrot.lane.b32.xlu0 %v2089, 2
    %v2092 = vpop.permute.xlu0 %2091
    %v2094 = vmul.f32 %v2075, %v2092
    %vm2095 = vcmp.eq.s32.totalorder %v114, 8
    %2097 = vset.pattern.permute.xlu0 1
    %2098 = vperm.xlu0 %2097, %v2088
    %v2099 = vpop.permute.xlu0 %2098
    %v2101 = vsel %vm2095, %v2099, %v1902
    %v2102 = vmul.f32 %v2099, %v60
    %v2103 = vmul.f32 %v2099, %v64
    %v2104 = vmul.f32 %v2099, %v68
    %v2105 = vmul.f32 %v2099, %v72
    %v2106 = vadd.f32 %v2102, %v82
    %v2107 = vadd.f32 %v2103, %v86
    %v2108 = vadd.f32 %v2104, %v90
    %v2109 = vadd.f32 %v2105, %v94
    %v2110 = vpack.c.bf16 %v2021, %v2021
    %2111 = vmatprep.subr.bf16.mxu0 %v460
    %2112 = vmatpush1.bf16.msra.mxu0 %v459
    %2113 = vmatprep.subr.bf16.mxu0 %v456
    %2114 = vmatpush1.bf16.msra.mxu0 %v455
    %2115 = vmatprep.subr.bf16.mxu0 %v452
    %2116 = vmatpush1.bf16.msra.mxu0 %v451
    %2117 = vmatprep.subr.bf16.mxu0 %v448
    %2118 = vmatpush1.bf16.msra.mxu0 %v447
    %2119 = vmatprep.subr.bf16.mxu0 %v444
    %2120 = vmatpush1.bf16.msra.mxu0 %v443
    %2121 = vmatprep.subr.bf16.mxu0 %v440
    %2122 = vmatpush1.bf16.msra.mxu0 %v439
    %2123 = vmatprep.subr.bf16.mxu0 %v436
    %2124 = vmatpush1.bf16.msra.mxu0 %v435
    %2125 = vmatprep.subr.bf16.mxu0 %v432
    %2126 = vmatpush1.bf16.msra.mxu0 %v431
    %2127 = vmatprep.subr.bf16.mxu0 0
    %2128 = vmatpush2.bf16.msra.mxu0 0
    %2129 = vmatprep.subr.bf16.mxu0 0
    %2130 = vmatpush2.bf16.msra.mxu0 0
    %2131 = vmatprep.subr.bf16.mxu0 0
    %2132 = vmatpush2.bf16.msra.mxu0 0
    %2133 = vmatprep.subr.bf16.mxu0 0
    %2134 = vmatpush2.bf16.msra.mxu0 0
    %2135 = vmatprep.subr.bf16.mxu0 0
    %2136 = vmatpush2.bf16.msra.mxu0 0
    %2137 = vmatprep.subr.bf16.mxu0 0
    %2138 = vmatpush2.bf16.msra.mxu0 0
    %2139 = vmatprep.subr.bf16.mxu0 0
    %2140 = vmatpush2.bf16.msra.mxu0 0
    %2141 = vmatprep.subr.bf16.mxu0 0
    %2142 = vmatpush2.bf16.msra.mxu0 0
    %2143 = vmatprep.mubr.bf16.mxu0 0
    %2144 = vmatmul.mubr.bf16.gmra.mxu0 %v2110
    %v2145 = vpop.f32.mrf.mxu0
    %v2146 = vadd.f32 0.0, %v2145
    %v2147 = vpop.f32.mrf.mxu0
    %v2148 = vadd.f32 0.0, %v2147
    %v2149 = vpop.f32.mrf.mxu0
    %v2150 = vpop.f32.mrf.mxu0
    %2151 = vdwg.mxu0
    %2152 = vmatprep.subr.bf16.mxu0 %v462
    %2153 = vmatpush1.bf16.msra.mxu0 %v461
    %2154 = vmatprep.subr.bf16.mxu0 %v458
    %2155 = vmatpush1.bf16.msra.mxu0 %v457
    %2156 = vmatprep.subr.bf16.mxu0 %v454
    %2157 = vmatpush1.bf16.msra.mxu0 %v453
    %2158 = vmatprep.subr.bf16.mxu0 %v450
    %2159 = vmatpush1.bf16.msra.mxu0 %v449
    %2160 = vmatprep.subr.bf16.mxu0 %v446
    %2161 = vmatpush1.bf16.msra.mxu0 %v445
    %2162 = vmatprep.subr.bf16.mxu0 %v442
    %2163 = vmatpush1.bf16.msra.mxu0 %v441
    %2164 = vmatprep.subr.bf16.mxu0 %v438
    %2165 = vmatpush1.bf16.msra.mxu0 %v437
    %2166 = vmatprep.subr.bf16.mxu0 %v434
    %2167 = vmatpush1.bf16.msra.mxu0 %v433
    %2168 = vmatprep.subr.bf16.mxu0 0
    %2169 = vmatpush2.bf16.msra.mxu0 0
    %2170 = vmatprep.subr.bf16.mxu0 0
    %2171 = vmatpush2.bf16.msra.mxu0 0
    %2172 = vmatprep.subr.bf16.mxu0 0
    %2173 = vmatpush2.bf16.msra.mxu0 0
    %2174 = vmatprep.subr.bf16.mxu0 0
    %2175 = vmatpush2.bf16.msra.mxu0 0
    %2176 = vmatprep.subr.bf16.mxu0 0
    %2177 = vmatpush2.bf16.msra.mxu0 0
    %2178 = vmatprep.subr.bf16.mxu0 0
    %2179 = vmatpush2.bf16.msra.mxu0 0
    %2180 = vmatprep.subr.bf16.mxu0 0
    %2181 = vmatpush2.bf16.msra.mxu0 0
    %2182 = vmatprep.subr.bf16.mxu0 0
    %2183 = vmatpush2.bf16.msra.mxu0 0
    %2184 = vmatprep.mubr.bf16.mxu0 0
    %2185 = vmatmul.mubr.bf16.gmra.mxu0 %v2110
    %v2186 = vpop.f32.mrf.mxu0
    %v2187 = vadd.f32 0.0, %v2186
    %v2188 = vpop.f32.mrf.mxu0
    %v2189 = vadd.f32 0.0, %v2188
    %v2190 = vpop.f32.mrf.mxu0
    %v2191 = vpop.f32.mrf.mxu0
    %2192 = vdwg.mxu0
    %v2193 = vadd.f32 %v2106, %v2146
    %v2194 = vadd.f32 %v2107, %v2148
    %v2195 = vadd.f32 %v2108, %v2187
    %v2196 = vadd.f32 %v2109, %v2189
    %v2197 = vxor.u32 %v2193, 2147483648
    %v2198 = vmul.f32 %v2197, 1.442695
    %v2199 = vpow.pop %v2198
    %v2200 = vadd.f32 %v2199, 1.0
    %v2201 = vrcp.pop %v2200
    %v2202 = vmul.f32 1.0, %v2201
    %v2203 = vxor.u32 %v2194, 2147483648
    %v2204 = vmul.f32 %v2203, 1.442695
    %v2205 = vpow.pop %v2204
    %v2206 = vadd.f32 %v2205, 1.0
    %v2207 = vrcp.pop %v2206
    %v2208 = vmul.f32 1.0, %v2207
    %v2209 = vtanh.pop %v2195
    %v2210 = vxor.u32 %v2196, 2147483648
    %v2211 = vmul.f32 %v2210, 1.442695
    %v2212 = vpow.pop %v2211
    %v2213 = vadd.f32 %v2212, 1.0
    %v2214 = vrcp.pop %v2213
    %v2215 = vmul.f32 1.0, %v2214
    %v2216 = vmul.f32 %v2208, %v2019
    %v2217 = vmul.f32 %v2202, %v2209
    %v2218 = vadd.f32 %v2216, %v2217
    %v2219 = vtanh.pop %v2218
    %v2220 = vmul.f32 %v2215, %v2219
    %v2221 = vpack.c.bf16 %v2218, %v2218
    %2222 = vmatprep.subr.bf16.mxu0 0
    %2223 = vmatpush1.bf16.msra.mxu0 %v209
    %2224 = vmatprep.subr.bf16.mxu0 0
    %2225 = vmatpush1.bf16.msra.mxu0 %v208
    %2226 = vmatprep.subr.bf16.mxu0 0
    %2227 = vmatpush1.bf16.msra.mxu0 %v207
    %2228 = vmatprep.subr.bf16.mxu0 0
    %2229 = vmatpush1.bf16.msra.mxu0 %v206
    %2230 = vmatprep.subr.bf16.mxu0 0
    %2231 = vmatpush1.bf16.msra.mxu0 %v205
    %2232 = vmatprep.subr.bf16.mxu0 0
    %2233 = vmatpush1.bf16.msra.mxu0 %v204
    %2234 = vmatprep.subr.bf16.mxu0 0
    %2235 = vmatpush1.bf16.msra.mxu0 %v203
    %2236 = vmatprep.subr.bf16.mxu0 0
    %2237 = vmatpush1.bf16.msra.mxu0 %v202
    %2238 = vmatprep.subr.bf16.mxu0 0
    %2239 = vmatpush2.bf16.msra.mxu0 0
    %2240 = vmatprep.subr.bf16.mxu0 0
    %2241 = vmatpush2.bf16.msra.mxu0 0
    %2242 = vmatprep.subr.bf16.mxu0 0
    %2243 = vmatpush2.bf16.msra.mxu0 0
    %2244 = vmatprep.subr.bf16.mxu0 0
    %2245 = vmatpush2.bf16.msra.mxu0 0
    %2246 = vmatprep.subr.bf16.mxu0 0
    %2247 = vmatpush2.bf16.msra.mxu0 0
    %2248 = vmatprep.subr.bf16.mxu0 0
    %2249 = vmatpush2.bf16.msra.mxu0 0
    %2250 = vmatprep.subr.bf16.mxu0 0
    %2251 = vmatpush2.bf16.msra.mxu0 0
    %2252 = vmatprep.subr.bf16.mxu0 0
    %2253 = vmatpush2.bf16.msra.mxu0 0
    %2254 = vmatprep.mubr.bf16.mxu0 0
    %2255 = vmatmul.mubr.bf16.gmra.mxu0 %v2221
    %v2256 = vpop.f32.mrf.mxu0
    %v2257 = vadd.f32 %v111, %v2256
    %v2258 = vpop.f32.mrf.mxu0
    %v2259 = vpop.f32.mrf.mxu0
    %v2260 = vpop.f32.mrf.mxu0
    %2261 = vdwg.mxu0
    %2263 = vset.pattern.permute.xlu0 3
    %2264 = vperm.xlu0 %2263, %v2094
    %v2265 = vpop.permute.xlu0 %2264
    %v2267 = vmul.f32 %v2265, %v104
    %v2268 = vadd.f32 %v2257, %v2267
    %v2269 = vxor.u32 %v2268, 2147483648
    %v2270 = vmul.f32 %v2269, 1.442695
    %v2271 = vpow.pop %v2270
    %v2272 = vadd.f32 %v2271, 1.0
    %v2273 = vrcp.pop %v2272
    %v2274 = vmul.f32 1.0, %v2273
    %v2275 = vmul.f32 %v2274, 2.0
    %v2276 = vsub.f32 %v2275, 1.0
    %v2277 = vmul.f32 %v2274, %v2088
    %2279 = vrot.lane.b32.xlu0 %v2276, 126
    %v2280 = vpop.permute.xlu0 %2279
    %v2282 = vmul.f32 %v2274, %v2280
    %2284 = vrot.lane.b32.xlu0 %v2282, 1
    %v2285 = vpop.permute.xlu0 %2284
    %v2287 = vadd.f32 %v2277, %v2285
    %v2288 = vtanh.pop %v2287
    %2290 = vrot.lane.b32.xlu0 %v2288, 2
    %v2291 = vpop.permute.xlu0 %2290
    %v2293 = vmul.f32 %v2274, %v2291
    %vm2294 = vcmp.eq.s32.totalorder %v114, 9
    %2296 = vset.pattern.permute.xlu0 1
    %2297 = vperm.xlu0 %2296, %v2287
    %v2298 = vpop.permute.xlu0 %2297
    %v2300 = vsel %vm2294, %v2298, %v2101
    %v2301 = vmul.f32 %v2298, %v60
    %v2302 = vmul.f32 %v2298, %v64
    %v2303 = vmul.f32 %v2298, %v68
    %v2304 = vmul.f32 %v2298, %v72
    %v2305 = vadd.f32 %v2301, %v82
    %v2306 = vadd.f32 %v2302, %v86
    %v2307 = vadd.f32 %v2303, %v90
    %v2308 = vadd.f32 %v2304, %v94
    %v2309 = vpack.c.bf16 %v2220, %v2220
    %2310 = vmatprep.subr.bf16.mxu0 %v460
    %2311 = vmatpush1.bf16.msra.mxu0 %v459
    %2312 = vmatprep.subr.bf16.mxu0 %v456
    %2313 = vmatpush1.bf16.msra.mxu0 %v455
    %2314 = vmatprep.subr.bf16.mxu0 %v452
    %2315 = vmatpush1.bf16.msra.mxu0 %v451
    %2316 = vmatprep.subr.bf16.mxu0 %v448
    %2317 = vmatpush1.bf16.msra.mxu0 %v447
    %2318 = vmatprep.subr.bf16.mxu0 %v444
    %2319 = vmatpush1.bf16.msra.mxu0 %v443
    %2320 = vmatprep.subr.bf16.mxu0 %v440
    %2321 = vmatpush1.bf16.msra.mxu0 %v439
    %2322 = vmatprep.subr.bf16.mxu0 %v436
    %2323 = vmatpush1.bf16.msra.mxu0 %v435
    %2324 = vmatprep.subr.bf16.mxu0 %v432
    %2325 = vmatpush1.bf16.msra.mxu0 %v431
    %2326 = vmatprep.subr.bf16.mxu0 0
    %2327 = vmatpush2.bf16.msra.mxu0 0
    %2328 = vmatprep.subr.bf16.mxu0 0
    %2329 = vmatpush2.bf16.msra.mxu0 0
    %2330 = vmatprep.subr.bf16.mxu0 0
    %2331 = vmatpush2.bf16.msra.mxu0 0
    %2332 = vmatprep.subr.bf16.mxu0 0
    %2333 = vmatpush2.bf16.msra.mxu0 0
    %2334 = vmatprep.subr.bf16.mxu0 0
    %2335 = vmatpush2.bf16.msra.mxu0 0
    %2336 = vmatprep.subr.bf16.mxu0 0
    %2337 = vmatpush2.bf16.msra.mxu0 0
    %2338 = vmatprep.subr.bf16.mxu0 0
    %2339 = vmatpush2.bf16.msra.mxu0 0
    %2340 = vmatprep.subr.bf16.mxu0 0
    %2341 = vmatpush2.bf16.msra.mxu0 0
    %2342 = vmatprep.mubr.bf16.mxu0 0
    %2343 = vmatmul.mubr.bf16.gmra.mxu0 %v2309
    %v2344 = vpop.f32.mrf.mxu0
    %v2345 = vadd.f32 0.0, %v2344
    %v2346 = vpop.f32.mrf.mxu0
    %v2347 = vadd.f32 0.0, %v2346
    %v2348 = vpop.f32.mrf.mxu0
    %v2349 = vpop.f32.mrf.mxu0
    %2350 = vdwg.mxu0
    %2351 = vmatprep.subr.bf16.mxu0 %v462
    %2352 = vmatpush1.bf16.msra.mxu0 %v461
    %2353 = vmatprep.subr.bf16.mxu0 %v458
    %2354 = vmatpush1.bf16.msra.mxu0 %v457
    %2355 = vmatprep.subr.bf16.mxu0 %v454
    %2356 = vmatpush1.bf16.msra.mxu0 %v453
    %2357 = vmatprep.subr.bf16.mxu0 %v450
    %2358 = vmatpush1.bf16.msra.mxu0 %v449
    %2359 = vmatprep.subr.bf16.mxu0 %v446
    %2360 = vmatpush1.bf16.msra.mxu0 %v445
    %2361 = vmatprep.subr.bf16.mxu0 %v442
    %2362 = vmatpush1.bf16.msra.mxu0 %v441
    %2363 = vmatprep.subr.bf16.mxu0 %v438
    %2364 = vmatpush1.bf16.msra.mxu0 %v437
    %2365 = vmatprep.subr.bf16.mxu0 %v434
    %2366 = vmatpush1.bf16.msra.mxu0 %v433
    %2367 = vmatprep.subr.bf16.mxu0 0
    %2368 = vmatpush2.bf16.msra.mxu0 0
    %2369 = vmatprep.subr.bf16.mxu0 0
    %2370 = vmatpush2.bf16.msra.mxu0 0
    %2371 = vmatprep.subr.bf16.mxu0 0
    %2372 = vmatpush2.bf16.msra.mxu0 0
    %2373 = vmatprep.subr.bf16.mxu0 0
    %2374 = vmatpush2.bf16.msra.mxu0 0
    %2375 = vmatprep.subr.bf16.mxu0 0
    %2376 = vmatpush2.bf16.msra.mxu0 0
    %2377 = vmatprep.subr.bf16.mxu0 0
    %2378 = vmatpush2.bf16.msra.mxu0 0
    %2379 = vmatprep.subr.bf16.mxu0 0
    %2380 = vmatpush2.bf16.msra.mxu0 0
    %2381 = vmatprep.subr.bf16.mxu0 0
    %2382 = vmatpush2.bf16.msra.mxu0 0
    %2383 = vmatprep.mubr.bf16.mxu0 0
    %2384 = vmatmul.mubr.bf16.gmra.mxu0 %v2309
    %v2385 = vpop.f32.mrf.mxu0
    %v2386 = vadd.f32 0.0, %v2385
    %v2387 = vpop.f32.mrf.mxu0
    %v2388 = vadd.f32 0.0, %v2387
    %v2389 = vpop.f32.mrf.mxu0
    %v2390 = vpop.f32.mrf.mxu0
    %2391 = vdwg.mxu0
    %v2392 = vadd.f32 %v2305, %v2345
    %v2393 = vadd.f32 %v2306, %v2347
    %v2394 = vadd.f32 %v2307, %v2386
    %v2395 = vadd.f32 %v2308, %v2388
    %v2396 = vxor.u32 %v2392, 2147483648
    %v2397 = vmul.f32 %v2396, 1.442695
    %v2398 = vpow.pop %v2397
    %v2399 = vadd.f32 %v2398, 1.0
    %v2400 = vrcp.pop %v2399
    %v2401 = vmul.f32 1.0, %v2400
    %v2402 = vxor.u32 %v2393, 2147483648
    %v2403 = vmul.f32 %v2402, 1.442695
    %v2404 = vpow.pop %v2403
    %v2405 = vadd.f32 %v2404, 1.0
    %v2406 = vrcp.pop %v2405
    %v2407 = vmul.f32 1.0, %v2406
    %v2408 = vtanh.pop %v2394
    %v2409 = vxor.u32 %v2395, 2147483648
    %v2410 = vmul.f32 %v2409, 1.442695
    %v2411 = vpow.pop %v2410
    %v2412 = vadd.f32 %v2411, 1.0
    %v2413 = vrcp.pop %v2412
    %v2414 = vmul.f32 1.0, %v2413
    %v2415 = vmul.f32 %v2407, %v2218
    %v2416 = vmul.f32 %v2401, %v2408
    %v2417 = vadd.f32 %v2415, %v2416
    %v2418 = vtanh.pop %v2417
    %v2419 = vmul.f32 %v2414, %v2418
    %v2420 = vpack.c.bf16 %v2417, %v2417
    %2421 = vmatprep.subr.bf16.mxu0 0
    %2422 = vmatpush1.bf16.msra.mxu0 %v209
    %2423 = vmatprep.subr.bf16.mxu0 0
    %2424 = vmatpush1.bf16.msra.mxu0 %v208
    %2425 = vmatprep.subr.bf16.mxu0 0
    %2426 = vmatpush1.bf16.msra.mxu0 %v207
    %2427 = vmatprep.subr.bf16.mxu0 0
    %2428 = vmatpush1.bf16.msra.mxu0 %v206
    %2429 = vmatprep.subr.bf16.mxu0 0
    %2430 = vmatpush1.bf16.msra.mxu0 %v205
    %2431 = vmatprep.subr.bf16.mxu0 0
    %2432 = vmatpush1.bf16.msra.mxu0 %v204
    %2433 = vmatprep.subr.bf16.mxu0 0
    %2434 = vmatpush1.bf16.msra.mxu0 %v203
    %2435 = vmatprep.subr.bf16.mxu0 0
    %2436 = vmatpush1.bf16.msra.mxu0 %v202
    %2437 = vmatprep.subr.bf16.mxu0 0
    %2438 = vmatpush2.bf16.msra.mxu0 0
    %2439 = vmatprep.subr.bf16.mxu0 0
    %2440 = vmatpush2.bf16.msra.mxu0 0
    %2441 = vmatprep.subr.bf16.mxu0 0
    %2442 = vmatpush2.bf16.msra.mxu0 0
    %2443 = vmatprep.subr.bf16.mxu0 0
    %2444 = vmatpush2.bf16.msra.mxu0 0
    %2445 = vmatprep.subr.bf16.mxu0 0
    %2446 = vmatpush2.bf16.msra.mxu0 0
    %2447 = vmatprep.subr.bf16.mxu0 0
    %2448 = vmatpush2.bf16.msra.mxu0 0
    %2449 = vmatprep.subr.bf16.mxu0 0
    %2450 = vmatpush2.bf16.msra.mxu0 0
    %2451 = vmatprep.subr.bf16.mxu0 0
    %2452 = vmatpush2.bf16.msra.mxu0 0
    %2453 = vmatprep.mubr.bf16.mxu0 0
    %2454 = vmatmul.mubr.bf16.gmra.mxu0 %v2420
    %v2455 = vpop.f32.mrf.mxu0
    %v2456 = vadd.f32 %v111, %v2455
    %v2457 = vpop.f32.mrf.mxu0
    %v2458 = vpop.f32.mrf.mxu0
    %v2459 = vpop.f32.mrf.mxu0
    %2460 = vdwg.mxu0
    %2462 = vset.pattern.permute.xlu0 3
    %2463 = vperm.xlu0 %2462, %v2293
    %v2464 = vpop.permute.xlu0 %2463
    %v2466 = vmul.f32 %v2464, %v104
    %v2467 = vadd.f32 %v2456, %v2466
    %v2468 = vxor.u32 %v2467, 2147483648
    %v2469 = vmul.f32 %v2468, 1.442695
    %v2470 = vpow.pop %v2469
    %v2471 = vadd.f32 %v2470, 1.0
    %v2472 = vrcp.pop %v2471
    %v2473 = vmul.f32 1.0, %v2472
    %v2474 = vmul.f32 %v2473, 2.0
    %v2475 = vsub.f32 %v2474, 1.0
    %v2476 = vmul.f32 %v2473, %v2287
    %2478 = vrot.lane.b32.xlu0 %v2475, 126
    %v2479 = vpop.permute.xlu0 %2478
    %v2481 = vmul.f32 %v2473, %v2479
    %2483 = vrot.lane.b32.xlu0 %v2481, 1
    %v2484 = vpop.permute.xlu0 %2483
    %v2486 = vadd.f32 %v2476, %v2484
    %v2487 = vtanh.pop %v2486
    %2489 = vrot.lane.b32.xlu0 %v2487, 2
    %v2490 = vpop.permute.xlu0 %2489
    %v2492 = vmul.f32 %v2473, %v2490
    %vm2493 = vcmp.eq.s32.totalorder %v114, 10
    %2495 = vset.pattern.permute.xlu0 1
    %2496 = vperm.xlu0 %2495, %v2486
    %v2497 = vpop.permute.xlu0 %2496
    %v2499 = vsel %vm2493, %v2497, %v2300
    %v2500 = vmul.f32 %v2497, %v60
    %v2501 = vmul.f32 %v2497, %v64
    %v2502 = vmul.f32 %v2497, %v68
    %v2503 = vadd.f32 %v2500, %v82
    %v2504 = vadd.f32 %v2501, %v86
    %v2505 = vadd.f32 %v2502, %v90
    %v2506 = vpack.c.bf16 %v2419, %v2419
    %2507 = vmatprep.subr.bf16.mxu0 %v460
    %2508 = vmatpush1.bf16.msra.mxu0 %v459
    %2509 = vmatprep.subr.bf16.mxu0 %v456
    %2510 = vmatpush1.bf16.msra.mxu0 %v455
    %2511 = vmatprep.subr.bf16.mxu0 %v452
    %2512 = vmatpush1.bf16.msra.mxu0 %v451
    %2513 = vmatprep.subr.bf16.mxu0 %v448
    %2514 = vmatpush1.bf16.msra.mxu0 %v447
    %2515 = vmatprep.subr.bf16.mxu0 %v444
    %2516 = vmatpush1.bf16.msra.mxu0 %v443
    %2517 = vmatprep.subr.bf16.mxu0 %v440
    %2518 = vmatpush1.bf16.msra.mxu0 %v439
    %2519 = vmatprep.subr.bf16.mxu0 %v436
    %2520 = vmatpush1.bf16.msra.mxu0 %v435
    %2521 = vmatprep.subr.bf16.mxu0 %v432
    %2522 = vmatpush1.bf16.msra.mxu0 %v431
    %2523 = vmatprep.subr.bf16.mxu0 0
    %2524 = vmatpush2.bf16.msra.mxu0 0
    %2525 = vmatprep.subr.bf16.mxu0 0
    %2526 = vmatpush2.bf16.msra.mxu0 0
    %2527 = vmatprep.subr.bf16.mxu0 0
    %2528 = vmatpush2.bf16.msra.mxu0 0
    %2529 = vmatprep.subr.bf16.mxu0 0
    %2530 = vmatpush2.bf16.msra.mxu0 0
    %2531 = vmatprep.subr.bf16.mxu0 0
    %2532 = vmatpush2.bf16.msra.mxu0 0
    %2533 = vmatprep.subr.bf16.mxu0 0
    %2534 = vmatpush2.bf16.msra.mxu0 0
    %2535 = vmatprep.subr.bf16.mxu0 0
    %2536 = vmatpush2.bf16.msra.mxu0 0
    %2537 = vmatprep.subr.bf16.mxu0 0
    %2538 = vmatpush2.bf16.msra.mxu0 0
    %2539 = vmatprep.mubr.bf16.mxu0 0
    %2540 = vmatmul.mubr.bf16.gmra.mxu0 %v2506
    %v2541 = vpop.f32.mrf.mxu0
    %v2542 = vadd.f32 0.0, %v2541
    %v2543 = vpop.f32.mrf.mxu0
    %v2544 = vadd.f32 0.0, %v2543
    %v2545 = vpop.f32.mrf.mxu0
    %v2546 = vpop.f32.mrf.mxu0
    %2547 = vdwg.mxu0
    %2548 = vmatprep.subr.bf16.mxu0 %v462
    %2549 = vmatpush1.bf16.msra.mxu0 %v461
    %2550 = vmatprep.subr.bf16.mxu0 %v458
    %2551 = vmatpush1.bf16.msra.mxu0 %v457
    %2552 = vmatprep.subr.bf16.mxu0 %v454
    %2553 = vmatpush1.bf16.msra.mxu0 %v453
    %2554 = vmatprep.subr.bf16.mxu0 %v450
    %2555 = vmatpush1.bf16.msra.mxu0 %v449
    %2556 = vmatprep.subr.bf16.mxu0 %v446
    %2557 = vmatpush1.bf16.msra.mxu0 %v445
    %2558 = vmatprep.subr.bf16.mxu0 %v442
    %2559 = vmatpush1.bf16.msra.mxu0 %v441
    %2560 = vmatprep.subr.bf16.mxu0 %v438
    %2561 = vmatpush1.bf16.msra.mxu0 %v437
    %2562 = vmatprep.subr.bf16.mxu0 %v434
    %2563 = vmatpush1.bf16.msra.mxu0 %v433
    %2564 = vmatprep.subr.bf16.mxu0 0
    %2565 = vmatpush2.bf16.msra.mxu0 0
    %2566 = vmatprep.subr.bf16.mxu0 0
    %2567 = vmatpush2.bf16.msra.mxu0 0
    %2568 = vmatprep.subr.bf16.mxu0 0
    %2569 = vmatpush2.bf16.msra.mxu0 0
    %2570 = vmatprep.subr.bf16.mxu0 0
    %2571 = vmatpush2.bf16.msra.mxu0 0
    %2572 = vmatprep.subr.bf16.mxu0 0
    %2573 = vmatpush2.bf16.msra.mxu0 0
    %2574 = vmatprep.subr.bf16.mxu0 0
    %2575 = vmatpush2.bf16.msra.mxu0 0
    %2576 = vmatprep.subr.bf16.mxu0 0
    %2577 = vmatpush2.bf16.msra.mxu0 0
    %2578 = vmatprep.subr.bf16.mxu0 0
    %2579 = vmatpush2.bf16.msra.mxu0 0
    %2580 = vmatprep.mubr.bf16.mxu0 0
    %2581 = vmatmul.mubr.bf16.gmra.mxu0 %v2506
    %v2582 = vpop.f32.mrf.mxu0
    %v2583 = vadd.f32 0.0, %v2582
    %v2584 = vpop.f32.mrf.mxu0
    %v2585 = vpop.f32.mrf.mxu0
    %v2586 = vpop.f32.mrf.mxu0
    %2587 = vdwg.mxu0
    %v2588 = vadd.f32 %v2503, %v2542
    %v2589 = vadd.f32 %v2504, %v2544
    %v2590 = vadd.f32 %v2505, %v2583
    %v2591 = vxor.u32 %v2588, 2147483648
    %v2592 = vmul.f32 %v2591, 1.442695
    %v2593 = vpow.pop %v2592
    %v2594 = vadd.f32 %v2593, 1.0
    %v2595 = vrcp.pop %v2594
    %v2596 = vmul.f32 1.0, %v2595
    %v2597 = vxor.u32 %v2589, 2147483648
    %v2598 = vmul.f32 %v2597, 1.442695
    %v2599 = vpow.pop %v2598
    %v2600 = vadd.f32 %v2599, 1.0
    %v2601 = vrcp.pop %v2600
    %v2602 = vmul.f32 1.0, %v2601
    %v2603 = vtanh.pop %v2590
    %v2604 = vmul.f32 %v2602, %v2417
    %v2605 = vmul.f32 %v2596, %v2603
    %v2606 = vadd.f32 %v2604, %v2605
    %v2607 = vpack.c.bf16 %v2606, %v2606
    %2608 = vmatprep.subr.bf16.mxu0 0
    %2609 = vmatpush1.bf16.msra.mxu0 %v209
    %2610 = vmatprep.subr.bf16.mxu0 0
    %2611 = vmatpush1.bf16.msra.mxu0 %v208
    %2612 = vmatprep.subr.bf16.mxu0 0
    %2613 = vmatpush1.bf16.msra.mxu0 %v207
    %2614 = vmatprep.subr.bf16.mxu0 0
    %2615 = vmatpush1.bf16.msra.mxu0 %v206
    %2616 = vmatprep.subr.bf16.mxu0 0
    %2617 = vmatpush1.bf16.msra.mxu0 %v205
    %2618 = vmatprep.subr.bf16.mxu0 0
    %2619 = vmatpush1.bf16.msra.mxu0 %v204
    %2620 = vmatprep.subr.bf16.mxu0 0
    %2621 = vmatpush1.bf16.msra.mxu0 %v203
    %2622 = vmatprep.subr.bf16.mxu0 0
    %2623 = vmatpush1.bf16.msra.mxu0 %v202
    %2624 = vmatprep.subr.bf16.mxu0 0
    %2625 = vmatpush2.bf16.msra.mxu0 0
    %2626 = vmatprep.subr.bf16.mxu0 0
    %2627 = vmatpush2.bf16.msra.mxu0 0
    %2628 = vmatprep.subr.bf16.mxu0 0
    %2629 = vmatpush2.bf16.msra.mxu0 0
    %2630 = vmatprep.subr.bf16.mxu0 0
    %2631 = vmatpush2.bf16.msra.mxu0 0
    %2632 = vmatprep.subr.bf16.mxu0 0
    %2633 = vmatpush2.bf16.msra.mxu0 0
    %2634 = vmatprep.subr.bf16.mxu0 0
    %2635 = vmatpush2.bf16.msra.mxu0 0
    %2636 = vmatprep.subr.bf16.mxu0 0
    %2637 = vmatpush2.bf16.msra.mxu0 0
    %2638 = vmatprep.subr.bf16.mxu0 0
    %2639 = vmatpush2.bf16.msra.mxu0 0
    %2640 = vmatprep.mubr.bf16.mxu0 0
    %2641 = vmatmul.mubr.bf16.gmra.mxu0 %v2607
    %v2642 = vpop.f32.mrf.mxu0
    %v2643 = vadd.f32 %v111, %v2642
    %v2644 = vpop.f32.mrf.mxu0
    %v2645 = vpop.f32.mrf.mxu0
    %v2646 = vpop.f32.mrf.mxu0
    %2647 = vdwg.mxu0
    %2649 = vset.pattern.permute.xlu0 3
    %2650 = vperm.xlu0 %2649, %v2492
    %v2651 = vpop.permute.xlu0 %2650
    %v2653 = vmul.f32 %v2651, %v104
    %v2654 = vadd.f32 %v2643, %v2653
    %v2655 = vxor.u32 %v2654, 2147483648
    %v2656 = vmul.f32 %v2655, 1.442695
    %v2657 = vpow.pop %v2656
    %v2658 = vadd.f32 %v2657, 1.0
    %v2659 = vrcp.pop %v2658
    %v2660 = vmul.f32 1.0, %v2659
    %v2661 = vmul.f32 %v2660, 2.0
    %v2662 = vsub.f32 %v2661, 1.0
    %v2663 = vmul.f32 %v2660, %v2486
    %2665 = vrot.lane.b32.xlu0 %v2662, 126
    %v2666 = vpop.permute.xlu0 %2665
    %v2668 = vmul.f32 %v2660, %v2666
    %2670 = vrot.lane.b32.xlu0 %v2668, 1
    %v2671 = vpop.permute.xlu0 %2670
    %v2673 = vadd.f32 %v2663, %v2671
    %vm2674 = vcmp.eq.s32.totalorder %v114, 11
    %2676 = vset.pattern.permute.xlu0 1
    %2677 = vperm.xlu0 %2676, %v2673
    %v2678 = vpop.permute.xlu0 %2677
    %v2680 = vsel %vm2674, %v2678, %v2499
    %2681 = vst [vmem:[%s7] sm:$0xff] %v2680
    // Predicated region
    $region38: #{lstm_model_forward.1} parent=1 // pred_check
      _
    $region39: #{lstm_model_forward.1} parent=1 // pred_check_branch
      %2683 = sbr.rel (0) target = $region41
    $region40: #{lstm_model_forward.1} parent=1 // pred_region
      _
    $region41: #{lstm_model_forward.1} parent=1 // pred_fallthru
      _
    // Predicated region
    $region42: #{lstm_model_forward.1} parent=1 // pred_check
      _
    $region43: #{lstm_model_forward.1} parent=1 // pred_check_branch
      %2685 = sbr.rel (0) target = $region45
    $region44: #{lstm_model_forward.1} parent=1 // pred_region
      _
    $region45: #{lstm_model_forward.1} parent=1 // pred_fallthru
      _
    %2686 = vsyncpa [#allocation3], 1
    %2687 = vsyncpa [#allocation5], 1

</llo_original>
